<compile_context>
chip_gen: v5e
topology: v5e:2x2
jax: 0.10.0
libtpu: 0.0.40
codegen_flags: <defaults>
</compile_context>

<pallas_src>
import functools

import jax
import jax.numpy as jnp
from jax import lax
from jax.experimental import pallas as pl
from jax.experimental.pallas import tpu as pltpu

_LANE = 128
_B_ALIGN = 16          # bf16 sublane packing (2 x 8 sublanes per packed tile)


def _round_up(x, m):
    return ((x + m - 1) // m) * m


def _vanilla_rnn_kernel(x_ref, fc1_w_ref, fc1_b_ref, w_ih0_ref, w_ihr_ref,
                        w_hh_ref, b_ref, dec_w_ref, dec_b_ref, o_ref,
                        x2, ihc, out_f, out_b, *, S, Bt, Hp, L):
    """One batch tile per grid invocation.

    x_ref:     (S*Bt, 128)            bf16 embedded tokens, rows = t*Bt + b
    fc1_w_ref: (128, Ep)              bf16 fc1 weight (zero-padded)
    fc1_b_ref: (1, Ep)                f32  fc1 bias
    w_ih0_ref: (Ep, 2Hp)              bf16 layer-0 input->hidden, [fwd | bwd]
    w_ihr_ref: (max(L-1,1), 2Hp, 2Hp) bf16 layer>0 input->hidden
    w_hh_ref:  (L, 2Hp, 2Hp)          f32  block-diagonal recurrent weights
    b_ref:     (L, 1, 2Hp)            f32  b_ih + b_hh, [fwd | bwd]
    dec_w_ref: (4Hp, 2), dec_b_ref: (1, 2)  f32
    o_ref:     (Bt, 2)                f32  logits for this batch tile
    x2:    VMEM (S*Bt, Ep)  bf16  fc1+tanh output
    ihc:   VMEM (S*Bt, 2Hp) bf16  hoisted input projection (bias folded in)
    out_f: VMEM (S*Bt, Hp)  bf16  forward-direction outputs (natural order)
    out_b: VMEM (S*Bt, Hp)  bf16  backward-direction outputs (natural order)
    """
    f32 = jnp.float32
    bf16 = jnp.bfloat16
    Hp2 = 2 * Hp

    # ---- fc1 + tanh, all timesteps of this tile in one bf16 matmul ----
    x2[...] = jnp.tanh(
        jnp.dot(x_ref[...], fc1_w_ref[...], preferred_element_type=f32)
        + fc1_b_ref[...]).astype(bf16)

    # Whole-vreg select mask for the fwd half [0:Hp) of a (Bt, 2Hp) tile.
    fwd_lane = lax.broadcasted_iota(jnp.int32, (Bt, Hp2), 1) < Hp

    for l in range(L):
        # ---- hoisted input projection (both directions, bias folded in) ----
        if l == 0:
            ihc[...] = (jnp.dot(x2[...], w_ih0_ref[...],
                                preferred_element_type=f32)
                        + b_ref[0]).astype(bf16)
        else:
            ihc[...] = (jnp.dot(out_f[...], w_ihr_ref[l - 1, 0:Hp, :],
                                preferred_element_type=f32)
                        + jnp.dot(out_b[...], w_ihr_ref[l - 1, Hp:Hp2, :],
                                  preferred_element_type=f32)
                        + b_ref[l]).astype(bf16)

        w_hh = w_hh_ref[l]          # (2Hp, 2Hp), hoisted out of the time loop
        # TODO(synk): on v5e with 2Hp > 128 the block-diagonal recurrence
        # wastes half its MXU passes; a per-generation split into two
        # (Bt,Hp)x(Hp,Hp) matmuls would recover it.

        # ---- fused bidirectional recurrence: fwd handles time t, bwd handles
        # time S-1-t, one (Bt,2Hp)x(2Hp,2Hp) matmul per serial step. ----
        def step(t, h):
            rf = pl.multiple_of(t * Bt, _B_ALIGN)
            rb = pl.multiple_of((S - 1 - t) * Bt, _B_ALIGN)
            ih_f = ihc[pl.ds(rf, Bt), :]
            ih_b = ihc[pl.ds(rb, Bt), :]
            ih = jnp.where(fwd_lane, ih_f, ih_b).astype(f32)
            h = jnp.tanh(ih + jnp.dot(h, w_hh, preferred_element_type=f32))
            out_f[pl.ds(rf, Bt), :] = h[:, 0:Hp].astype(bf16)
            out_b[pl.ds(rb, Bt), :] = h[:, Hp:Hp2].astype(bf16)
            return h

        lax.fori_loop(0, S, step, jnp.zeros((Bt, Hp2), f32),
                      unroll=min(8, S))

    # ---- decoder on encoding = [fwd[0], bwd[0], fwd[S-1], bwd[S-1]] ----
    # Four Hp x 2 partial matmuls against ref slices; avoids a lane concat.
    last = (S - 1) * Bt
    out = (jnp.dot(out_f[0:Bt, :].astype(f32), dec_w_ref[0:Hp, :],
                   preferred_element_type=f32)
           + jnp.dot(out_b[0:Bt, :].astype(f32), dec_w_ref[Hp:2 * Hp, :],
                     preferred_element_type=f32)
           + jnp.dot(out_f[last:last + Bt, :].astype(f32),
                     dec_w_ref[2 * Hp:3 * Hp, :], preferred_element_type=f32)
           + jnp.dot(out_b[last:last + Bt, :].astype(f32),
                     dec_w_ref[3 * Hp:4 * Hp, :], preferred_element_type=f32)
           + dec_b_ref[...])
    o_ref[...] = out.astype(o_ref.dtype)


def vanilla_rnn_forward(tokens, params, *, embed_size, num_hiddens, num_layers):
    B, S = tokens.shape
    E, H, L = embed_size, num_hiddens, num_layers
    f32, bf16 = jnp.float32, jnp.bfloat16

    Dp = _round_up(100, _LANE)       # padded embedding width
    Ep = _round_up(E, _LANE)
    Hp = _round_up(H, _LANE)
    Hp2 = 2 * Hp

    # ---- weights, zero-padded to lane-aligned shapes ----
    fc1_w = jnp.zeros((Dp, Ep), f32).at[0:100, 0:E].set(
        params["fc1_w"]).astype(bf16)
    fc1_b = jnp.zeros((1, Ep), f32).at[0, 0:E].set(params["fc1_b"])

    w_ih0 = jnp.zeros((Ep, Hp2), f32)
    w_ih0 = w_ih0.at[0:E, 0:H].set(params["rnn_w_ih"][0][0])
    w_ih0 = w_ih0.at[0:E, Hp:Hp + H].set(params["rnn_w_ih"][0][1])
    w_ih0 = w_ih0.astype(bf16)

    if L > 1:
        w_ihr = jnp.zeros((L - 1, Hp2, Hp2), f32)
        for l in range(1, L):
            wf, wb = params["rnn_w_ih"][l]            # (2H, H) each
            w_ihr = w_ihr.at[l - 1, 0:H, 0:H].set(wf[0:H])
            w_ihr = w_ihr.at[l - 1, Hp:Hp + H, 0:H].set(wf[H:2 * H])
            w_ihr = w_ihr.at[l - 1, 0:H, Hp:Hp + H].set(wb[0:H])
            w_ihr = w_ihr.at[l - 1, Hp:Hp + H, Hp:Hp + H].set(wb[H:2 * H])
        w_ihr = w_ihr.astype(bf16)
    else:
        w_ihr = jnp.zeros((1, Hp2, Hp2), bf16)        # unused dummy

    w_hh = jnp.zeros((L, Hp2, Hp2), f32)
    bias = jnp.zeros((L, 1, Hp2), f32)
    for l in range(L):
        w_hh = w_hh.at[l, 0:H, 0:H].set(params["rnn_w_hh"][l][0])
        w_hh = w_hh.at[l, Hp:Hp + H, Hp:Hp + H].set(params["rnn_w_hh"][l][1])
        bias = bias.at[l, 0, 0:H].set(
            params["rnn_b_ih"][l][0] + params["rnn_b_hh"][l][0])
        bias = bias.at[l, 0, Hp:Hp + H].set(
            params["rnn_b_ih"][l][1] + params["rnn_b_hh"][l][1])

    dec_w = jnp.zeros((4 * Hp, 2), f32)
    for k in range(4):
        dec_w = dec_w.at[k * Hp:k * Hp + H].set(
            params["dec_w"][k * H:(k + 1) * H])
    dec_b = params["dec_b"].reshape(1, 2).astype(f32)

    weight_args = (fc1_w, fc1_b, w_ih0, w_ihr, w_hh, bias, dec_w, dec_b)
    weight_bytes = sum(int(a.size) * a.dtype.itemsize for a in weight_args)

    # ---- batch tiling + generation-safe VMEM budget ----
    per_row_bytes = (2 * Dp * 2      # double-buffered x block (bf16)
                     + Ep * 2        # x2
                     + Hp2 * 2       # ihc
                     + 2 * Hp * 2)   # out_f + out_b
    budget = 48 * 2 ** 20            # fits v7x's 64 MiB physical VMEM
    max_bt = max((budget - 2 * weight_bytes) // (S * per_row_bytes), _B_ALIGN)
    Bt = min(_round_up(B, _B_ALIGN), (max_bt // _B_ALIGN) * _B_ALIGN, 256)
    Bt = max(Bt, _B_ALIGN)
    B_pad = _round_up(B, Bt)
    n_tiles = B_pad // Bt

    vmem_need = S * Bt * per_row_bytes + 2 * weight_bytes + 2 * Bt * 2 * 4
    vmem_limit = int(min(max(2 * vmem_need, 32 * 2 ** 20), 64 * 2 ** 20))

    # ---- embedding gather + batch-tile layout (glue; hot path is in-kernel) ----
    # TODO(synk): an in-kernel DMA gather of embedding rows (scalar-prefetched
    # token ids) would remove this HBM round-trip of the (S*B, 128) slab.
    emb_tab = jnp.zeros((params["embedding"].shape[0], Dp), f32)
    emb_tab = emb_tab.at[:, 0:100].set(params["embedding"]).astype(bf16)
    tok = jnp.pad(tokens, ((0, B_pad - B), (0, 0)))
    x = emb_tab[tok.T]                                   # (S, B_pad, Dp) bf16
    x = (x.reshape(S, n_tiles, Bt, Dp)
          .transpose(1, 0, 2, 3)
          .reshape(n_tiles, S * Bt, Dp))

    kernel = functools.partial(_vanilla_rnn_kernel, S=S, Bt=Bt, Hp=Hp, L=L)

    def const_spec(shape):
        n = len(shape)
        return pl.BlockSpec(shape, lambda g, _n=n: (0,) * _n)

    in_specs = [pl.BlockSpec((None, S * Bt, Dp), lambda g: (g, 0, 0))]
    in_specs += [const_spec(a.shape) for a in weight_args]

    flops = int(2 * S * B_pad * Dp * Ep
                + 2 * S * B_pad * Ep * Hp2
                + (L - 1) * 2 * S * B_pad * Hp2 * Hp2
                + L * S * 2 * B_pad * Hp2 * Hp2
                + 8 * B_pad * Hp * 2)
    transcendentals = int(S * B_pad * Ep + L * S * B_pad * Hp2)
    bytes_accessed = int(2 * n_tiles * S * Bt * Dp + weight_bytes
                         + 4 * B_pad * 2)

    out = pl.pallas_call(
        kernel,
        out_shape=jax.ShapeDtypeStruct((n_tiles, Bt, 2), f32),
        grid=(n_tiles,),
        in_specs=in_specs,
        out_specs=pl.BlockSpec((None, Bt, 2), lambda g: (g, 0, 0)),
        scratch_shapes=[
            pltpu.VMEM((S * Bt, Ep), bf16),     # x2: fc1+tanh output
            pltpu.VMEM((S * Bt, Hp2), bf16),    # ihc: hoisted input projection
            pltpu.VMEM((S * Bt, Hp), bf16),     # forward-direction outputs
            pltpu.VMEM((S * Bt, Hp), bf16),     # backward-direction outputs
        ],
        compiler_params=pltpu.CompilerParams(
            dimension_semantics=("parallel",),
            vmem_limit_bytes=vmem_limit),
        cost_estimate=pl.CostEstimate(flops=flops,
                                      transcendentals=transcendentals,
                                      bytes_accessed=bytes_accessed),
    )(x, *weight_args)

    return out.reshape(B_pad, 2)[:B]


def vanilla_rnn_reference(tokens, params, *, embed_size, num_hiddens, num_layers):
    """Pure-JAX f32 reference mirroring the PyTorch forward pass."""
    E, H, L = embed_size, num_hiddens, num_layers
    emb = params["embedding"][tokens.T]                      # (S, B, 100)
    x = jnp.tanh(emb @ params["fc1_w"] + params["fc1_b"])    # (S, B, E)
    S, B = x.shape[0], x.shape[1]
    for l in range(L):
        outs = []
        for d in range(2):
            w_i = params["rnn_w_ih"][l][d]
            w_h = params["rnn_w_hh"][l][d]
            b = params["rnn_b_ih"][l][d] + params["rnn_b_hh"][l][d]
            h = jnp.zeros((B, H), jnp.float32)
            hs = []
            trange = range(S) if d == 0 else range(S - 1, -1, -1)
            for t in trange:
                h = jnp.tanh(x[t] @ w_i + h @ w_h + b)
                hs.append(h)
            if d == 1:
                hs = hs[::-1]
            outs.append(jnp.stack(hs))
        x = jnp.concatenate(outs, axis=-1)                   # (S, B, 2H)
    enc = jnp.concatenate([x[0], x[-1]], axis=-1)            # (B, 4H)
    return enc @ params["dec_w"] + params["dec_b"]


def init_params(key, vocab_size, embed_size, num_hiddens, num_layers):
    E, H, L = embed_size, num_hiddens, num_layers
    keys = iter(jax.random.split(key, 64))

    def rnd(shape, scale=0.1):
        return jax.random.normal(next(keys), shape, jnp.float32) * scale

    params = {
        "embedding": rnd((vocab_size, 100)),
        "fc1_w": rnd((100, E)),
        "fc1_b": rnd((E,)),
        "dec_w": rnd((4 * H, 2)),
        "dec_b": rnd((2,)),
        "rnn_w_ih": [], "rnn_w_hh": [], "rnn_b_ih": [], "rnn_b_hh": [],
    }
    for l in range(L):
        din = E if l == 0 else 2 * H
        params["rnn_w_ih"].append([rnd((din, H)) for _ in range(2)])
        params["rnn_w_hh"].append([rnd((H, H)) for _ in range(2)])
        params["rnn_b_ih"].append([rnd((H,)) for _ in range(2)])
        params["rnn_b_hh"].append([rnd((H,)) for _ in range(2)])
    return params


if __name__ == "__main__":
    VOCAB, EMBED, HIDDEN, LAYERS = 50, 32, 32, 2
    BATCH, SEQ = 2, 8

    key = jax.random.PRNGKey(0)
    pkey, tkey = jax.random.split(key)
    params = init_params(pkey, VOCAB, EMBED, HIDDEN, LAYERS)
    tokens = jax.random.randint(tkey, (BATCH, SEQ), 0, VOCAB, dtype=jnp.int32)

    out = vanilla_rnn_forward(tokens, params, embed_size=EMBED,
                              num_hiddens=HIDDEN, num_layers=LAYERS)
    out = jax.block_until_ready(out)

    ref = vanilla_rnn_reference(tokens, params, embed_size=EMBED,
                                num_hiddens=HIDDEN, num_layers=LAYERS)
    assert out.shape == (BATCH, 2), out.shape
    # bf16 MXU operands / bf16 activation scratch => loosened tolerance
    # against the pure-f32 reference.
    assert jnp.allclose(out, ref, atol=2e-2, rtol=2e-2), (out, ref)
    print("KERNEL_OK")
</pallas_src>

<mosaic_0001>
module attributes {stable_mosaic.version = 11 : i64} {
  func.func @_vanilla_rnn_kernel(%arg0: i32, %arg1: memref<1x128x128xbf16, #tpu.memory_space<vmem>>, %arg2: memref<128x128xbf16, #tpu.memory_space<vmem>>, %arg3: memref<1x128xf32, #tpu.memory_space<vmem>>, %arg4: memref<128x256xbf16, #tpu.memory_space<vmem>>, %arg5: memref<1x256x256xbf16, #tpu.memory_space<vmem>>, %arg6: memref<2x256x256xf32, #tpu.memory_space<vmem>>, %arg7: memref<2x1x256xf32, #tpu.memory_space<vmem>>, %arg8: memref<512x2xf32, #tpu.memory_space<vmem>>, %arg9: memref<1x2xf32, #tpu.memory_space<vmem>>, %arg10: memref<1x16x2xf32, #tpu.memory_space<vmem>>, %arg11: memref<128x128xbf16, #tpu.memory_space<vmem>>, %arg12: memref<128x256xbf16, #tpu.memory_space<vmem>>, %arg13: memref<128x128xbf16, #tpu.memory_space<vmem>>, %arg14: memref<128x128xbf16, #tpu.memory_space<vmem>>) attributes {dimension_semantics = [#tpu.dimension_semantics<parallel>], iteration_bounds = array<i64: 1>, scalar_prefetch = 0 : i64, scratch_operands = 4 : i64, tpu.core_type = #tpu.core_type<tc>, window_params = [{transform_indices = @transform_0, window_bounds = array<i64: 1, 128, 128>}, {pipeline_mode = #tpu.pipeline_mode<synchronous>, transform_indices = @transform_1, window_bounds = array<i64: 128, 128>}, {pipeline_mode = #tpu.pipeline_mode<synchronous>, transform_indices = @transform_2, window_bounds = array<i64: 1, 128>}, {pipeline_mode = #tpu.pipeline_mode<synchronous>, transform_indices = @transform_3, window_bounds = array<i64: 128, 256>}, {pipeline_mode = #tpu.pipeline_mode<synchronous>, transform_indices = @transform_4, window_bounds = array<i64: 1, 256, 256>}, {pipeline_mode = #tpu.pipeline_mode<synchronous>, transform_indices = @transform_5, window_bounds = array<i64: 2, 256, 256>}, {pipeline_mode = #tpu.pipeline_mode<synchronous>, transform_indices = @transform_6, window_bounds = array<i64: 2, 1, 256>}, {pipeline_mode = #tpu.pipeline_mode<synchronous>, transform_indices = @transform_7, window_bounds = array<i64: 512, 2>}, {pipeline_mode = #tpu.pipeline_mode<synchronous>, transform_indices = @transform_8, window_bounds = array<i64: 1, 2>}, {transform_indices = @transform_9, window_bounds = array<i64: 1, 16, 2>}]} {
    %c0 = arith.constant 0 : index
    %c0_0 = arith.constant 0 : index
    %c0_1 = arith.constant 0 : index
    %0 = vector.load %arg1[%c0, %c0_0, %c0_1] : memref<1x128x128xbf16, #tpu.memory_space<vmem>>, vector<1x128x128xbf16>
    %1 = vector.shape_cast %0 : vector<1x128x128xbf16> to vector<128x128xbf16>
    %c0_2 = arith.constant 0 : index
    %c0_3 = arith.constant 0 : index
    %2 = vector.load %arg2[%c0_2, %c0_3] : memref<128x128xbf16, #tpu.memory_space<vmem>>, vector<128x128xbf16>
    %cst = arith.constant dense<0.000000e+00> : vector<128x128xf32>
    %3 = tpu.matmul %1, %2, %cst {dimension_numbers = #tpu.dot_dimension_numbers<[1], [0], [0], [1], [0, 0, 1, 1], [], []>} : vector<128x128xbf16>, vector<128x128xbf16>, vector<128x128xf32> -> vector<128x128xf32>
    %c0_4 = arith.constant 0 : index
    %c0_5 = arith.constant 0 : index
    %4 = vector.load %arg3[%c0_4, %c0_5] : memref<1x128xf32, #tpu.memory_space<vmem>>, vector<1x128xf32>
    %5 = vector.broadcast %4 : vector<1x128xf32> to vector<128x128xf32>
    %6 = arith.addf %3, %5 : vector<128x128xf32>
    %7 = math.tanh %6 : vector<128x128xf32>
    %8 = arith.truncf %7 : vector<128x128xf32> to vector<128x128xbf16>
    %c0_6 = arith.constant 0 : index
    %c0_7 = arith.constant 0 : index
    %9 = vector.load %arg11[%c0_6, %c0_7] : memref<128x128xbf16, #tpu.memory_space<vmem>>, vector<128x128xbf16>
    tpu.vector_store %arg11[%c0_6, %c0_7], %8 {strides = array<i32>} : memref<128x128xbf16, #tpu.memory_space<vmem>>, vector<128x128xbf16>,
    %10 = tpu.iota {dimensions = array<i32: 1>} : vector<16x256xi32>
    %c128_i32 = arith.constant 128 : i32
    %11 = vector.broadcast %c128_i32 : i32 to vector<16x256xi32>
    %12 = arith.cmpi slt, %10, %11 : vector<16x256xi32>
    %c0_8 = arith.constant 0 : index
    %c0_9 = arith.constant 0 : index
    %13 = vector.load %arg11[%c0_8, %c0_9] : memref<128x128xbf16, #tpu.memory_space<vmem>>, vector<128x128xbf16>
    %c0_10 = arith.constant 0 : index
    %c0_11 = arith.constant 0 : index
    %14 = vector.load %arg4[%c0_10, %c0_11] : memref<128x256xbf16, #tpu.memory_space<vmem>>, vector<128x256xbf16>
    %cst_12 = arith.constant dense<0.000000e+00> : vector<128x256xf32>
    %15 = tpu.matmul %13, %14, %cst_12 {dimension_numbers = #tpu.dot_dimension_numbers<[1], [0], [0], [1], [0, 0, 1, 1], [], []>} : vector<128x128xbf16>, vector<128x256xbf16>, vector<128x256xf32> -> vector<128x256xf32>
    %c0_13 = arith.constant 0 : index
    %c0_14 = arith.constant 0 : index
    %c0_15 = arith.constant 0 : index
    %16 = vector.load %arg7[%c0_13, %c0_14, %c0_15] : memref<2x1x256xf32, #tpu.memory_space<vmem>>, vector<1x1x256xf32>
    %17 = vector.shape_cast %16 : vector<1x1x256xf32> to vector<1x256xf32>
    %18 = vector.broadcast %17 : vector<1x256xf32> to vector<128x256xf32>
    %19 = arith.addf %15, %18 : vector<128x256xf32>
    %20 = arith.truncf %19 : vector<128x256xf32> to vector<128x256xbf16>
    %c0_16 = arith.constant 0 : index
    %c0_17 = arith.constant 0 : index
    %21 = vector.load %arg12[%c0_16, %c0_17] : memref<128x256xbf16, #tpu.memory_space<vmem>>, vector<128x256xbf16>
    tpu.vector_store %arg12[%c0_16, %c0_17], %20 {strides = array<i32>} : memref<128x256xbf16, #tpu.memory_space<vmem>>, vector<128x256xbf16>,
    %c0_18 = arith.constant 0 : index
    %c0_19 = arith.constant 0 : index
    %c0_20 = arith.constant 0 : index
    %22 = vector.load %arg6[%c0_18, %c0_19, %c0_20] : memref<2x256x256xf32, #tpu.memory_space<vmem>>, vector<1x256x256xf32>
    %23 = vector.shape_cast %22 : vector<1x256x256xf32> to vector<256x256xf32>
    %cst_21 = arith.constant 0.000000e+00 : f32
    %24 = vector.broadcast %cst_21 : f32 to vector<16x256xf32>
    %c0_i32 = arith.constant 0 : i32
    %c16_i32 = arith.constant 16 : i32
    %25 = arith.muli %c0_i32, %c16_i32 : i32
    %26 = tpu.assume_multiple %25, 16 : i32
    %c7_i32 = arith.constant 7 : i32
    %27 = arith.subi %c7_i32, %c0_i32 : i32
    %c16_i32_22 = arith.constant 16 : i32
    %28 = arith.muli %27, %c16_i32_22 : i32
    %29 = tpu.assume_multiple %28, 16 : i32
    %30 = arith.index_cast %26 : i32 to index
    %c0_23 = arith.constant 0 : index
    %31 = vector.load %arg12[%30, %c0_23] : memref<128x256xbf16, #tpu.memory_space<vmem>>, vector<16x256xbf16>
    %32 = arith.index_cast %29 : i32 to index
    %c0_24 = arith.constant 0 : index
    %33 = vector.load %arg12[%32, %c0_24] : memref<128x256xbf16, #tpu.memory_space<vmem>>, vector<16x256xbf16>
    %34 = arith.select %12, %31, %33 : vector<16x256xi1>, vector<16x256xbf16>
    %35 = arith.extf %34 : vector<16x256xbf16> to vector<16x256xf32>
    %cst_25 = arith.constant dense<0.000000e+00> : vector<16x256xf32>
    %36 = tpu.matmul %24, %23, %cst_25 {dimension_numbers = #tpu.dot_dimension_numbers<[1], [0], [0], [1], [0, 0, 1, 1], [], []>} : vector<16x256xf32>, vector<256x256xf32>, vector<16x256xf32> -> vector<16x256xf32>
    %37 = arith.addf %35, %36 : vector<16x256xf32>
    %38 = math.tanh %37 : vector<16x256xf32>
    %39 = vector.extract_strided_slice %38 {offsets = [0, 0], sizes = [16, 128], strides = [1, 1]} : vector<16x256xf32> to vector<16x128xf32>
    %40 = arith.truncf %39 : vector<16x128xf32> to vector<16x128xbf16>
    %41 = arith.index_cast %26 : i32 to index
    %c0_26 = arith.constant 0 : index
    %42 = vector.load %arg13[%41, %c0_26] : memref<128x128xbf16, #tpu.memory_space<vmem>>, vector<16x128xbf16>
    tpu.vector_store %arg13[%41, %c0_26], %40 {strides = array<i32>} : memref<128x128xbf16, #tpu.memory_space<vmem>>, vector<16x128xbf16>,
    %43 = vector.extract_strided_slice %38 {offsets = [0, 128], sizes = [16, 128], strides = [1, 1]} : vector<16x256xf32> to vector<16x128xf32>
    %44 = arith.truncf %43 : vector<16x128xf32> to vector<16x128xbf16>
    %45 = arith.index_cast %29 : i32 to index
    %c0_27 = arith.constant 0 : index
    %46 = vector.load %arg14[%45, %c0_27] : memref<128x128xbf16, #tpu.memory_space<vmem>>, vector<16x128xbf16>
    tpu.vector_store %arg14[%45, %c0_27], %44 {strides = array<i32>} : memref<128x128xbf16, #tpu.memory_space<vmem>>, vector<16x128xbf16>,
    %c1_i32 = arith.constant 1 : i32
    %c16_i32_28 = arith.constant 16 : i32
    %47 = arith.muli %c1_i32, %c16_i32_28 : i32
    %48 = tpu.assume_multiple %47, 16 : i32
    %c7_i32_29 = arith.constant 7 : i32
    %49 = arith.subi %c7_i32_29, %c1_i32 : i32
    %c16_i32_30 = arith.constant 16 : i32
    %50 = arith.muli %49, %c16_i32_30 : i32
    %51 = tpu.assume_multiple %50, 16 : i32
    %52 = arith.index_cast %48 : i32 to index
    %c0_31 = arith.constant 0 : index
    %53 = vector.load %arg12[%52, %c0_31] : memref<128x256xbf16, #tpu.memory_space<vmem>>, vector<16x256xbf16>
    %54 = arith.index_cast %51 : i32 to index
    %c0_32 = arith.constant 0 : index
    %55 = vector.load %arg12[%54, %c0_32] : memref<128x256xbf16, #tpu.memory_space<vmem>>, vector<16x256xbf16>
    %56 = arith.select %12, %53, %55 : vector<16x256xi1>, vector<16x256xbf16>
    %57 = arith.extf %56 : vector<16x256xbf16> to vector<16x256xf32>
    %cst_33 = arith.constant dense<0.000000e+00> : vector<16x256xf32>
    %58 = tpu.matmul %38, %23, %cst_33 {dimension_numbers = #tpu.dot_dimension_numbers<[1], [0], [0], [1], [0, 0, 1, 1], [], []>} : vector<16x256xf32>, vector<256x256xf32>, vector<16x256xf32> -> vector<16x256xf32>
    %59 = arith.addf %57, %58 : vector<16x256xf32>
    %60 = math.tanh %59 : vector<16x256xf32>
    %61 = vector.extract_strided_slice %60 {offsets = [0, 0], sizes = [16, 128], strides = [1, 1]} : vector<16x256xf32> to vector<16x128xf32>
    %62 = arith.truncf %61 : vector<16x128xf32> to vector<16x128xbf16>
    %63 = arith.index_cast %48 : i32 to index
    %c0_34 = arith.constant 0 : index
    %64 = vector.load %arg13[%63, %c0_34] : memref<128x128xbf16, #tpu.memory_space<vmem>>, vector<16x128xbf16>
    tpu.vector_store %arg13[%63, %c0_34], %62 {strides = array<i32>} : memref<128x128xbf16, #tpu.memory_space<vmem>>, vector<16x128xbf16>,
    %65 = vector.extract_strided_slice %60 {offsets = [0, 128], sizes = [16, 128], strides = [1, 1]} : vector<16x256xf32> to vector<16x128xf32>
    %66 = arith.truncf %65 : vector<16x128xf32> to vector<16x128xbf16>
    %67 = arith.index_cast %51 : i32 to index
    %c0_35 = arith.constant 0 : index
    %68 = vector.load %arg14[%67, %c0_35] : memref<128x128xbf16, #tpu.memory_space<vmem>>, vector<16x128xbf16>
    tpu.vector_store %arg14[%67, %c0_35], %66 {strides = array<i32>} : memref<128x128xbf16, #tpu.memory_space<vmem>>, vector<16x128xbf16>,
    %c2_i32 = arith.constant 2 : i32
    %c16_i32_36 = arith.constant 16 : i32
    %69 = arith.muli %c2_i32, %c16_i32_36 : i32
    %70 = tpu.assume_multiple %69, 16 : i32
    %c7_i32_37 = arith.constant 7 : i32
    %71 = arith.subi %c7_i32_37, %c2_i32 : i32
    %c16_i32_38 = arith.constant 16 : i32
    %72 = arith.muli %71, %c16_i32_38 : i32
    %73 = tpu.assume_multiple %72, 16 : i32
    %74 = arith.index_cast %70 : i32 to index
    %c0_39 = arith.constant 0 : index
    %75 = vector.load %arg12[%74, %c0_39] : memref<128x256xbf16, #tpu.memory_space<vmem>>, vector<16x256xbf16>
    %76 = arith.index_cast %73 : i32 to index
    %c0_40 = arith.constant 0 : index
    %77 = vector.load %arg12[%76, %c0_40] : memref<128x256xbf16, #tpu.memory_space<vmem>>, vector<16x256xbf16>
    %78 = arith.select %12, %75, %77 : vector<16x256xi1>, vector<16x256xbf16>
    %79 = arith.extf %78 : vector<16x256xbf16> to vector<16x256xf32>
    %cst_41 = arith.constant dense<0.000000e+00> : vector<16x256xf32>
    %80 = tpu.matmul %60, %23, %cst_41 {dimension_numbers = #tpu.dot_dimension_numbers<[1], [0], [0], [1], [0, 0, 1, 1], [], []>} : vector<16x256xf32>, vector<256x256xf32>, vector<16x256xf32> -> vector<16x256xf32>
    %81 = arith.addf %79, %80 : vector<16x256xf32>
    %82 = math.tanh %81 : vector<16x256xf32>
    %83 = vector.extract_strided_slice %82 {offsets = [0, 0], sizes = [16, 128], strides = [1, 1]} : vector<16x256xf32> to vector<16x128xf32>
    %84 = arith.truncf %83 : vector<16x128xf32> to vector<16x128xbf16>
    %85 = arith.index_cast %70 : i32 to index
    %c0_42 = arith.constant 0 : index
    %86 = vector.load %arg13[%85, %c0_42] : memref<128x128xbf16, #tpu.memory_space<vmem>>, vector<16x128xbf16>
    tpu.vector_store %arg13[%85, %c0_42], %84 {strides = array<i32>} : memref<128x128xbf16, #tpu.memory_space<vmem>>, vector<16x128xbf16>,
    %87 = vector.extract_strided_slice %82 {offsets = [0, 128], sizes = [16, 128], strides = [1, 1]} : vector<16x256xf32> to vector<16x128xf32>
    %88 = arith.truncf %87 : vector<16x128xf32> to vector<16x128xbf16>
    %89 = arith.index_cast %73 : i32 to index
    %c0_43 = arith.constant 0 : index
    %90 = vector.load %arg14[%89, %c0_43] : memref<128x128xbf16, #tpu.memory_space<vmem>>, vector<16x128xbf16>
    tpu.vector_store %arg14[%89, %c0_43], %88 {strides = array<i32>} : memref<128x128xbf16, #tpu.memory_space<vmem>>, vector<16x128xbf16>,
    %c3_i32 = arith.constant 3 : i32
    %c16_i32_44 = arith.constant 16 : i32
    %91 = arith.muli %c3_i32, %c16_i32_44 : i32
    %92 = tpu.assume_multiple %91, 16 : i32
    %c7_i32_45 = arith.constant 7 : i32
    %93 = arith.subi %c7_i32_45, %c3_i32 : i32
    %c16_i32_46 = arith.constant 16 : i32
    %94 = arith.muli %93, %c16_i32_46 : i32
    %95 = tpu.assume_multiple %94, 16 : i32
    %96 = arith.index_cast %92 : i32 to index
    %c0_47 = arith.constant 0 : index
    %97 = vector.load %arg12[%96, %c0_47] : memref<128x256xbf16, #tpu.memory_space<vmem>>, vector<16x256xbf16>
    %98 = arith.index_cast %95 : i32 to index
    %c0_48 = arith.constant 0 : index
    %99 = vector.load %arg12[%98, %c0_48] : memref<128x256xbf16, #tpu.memory_space<vmem>>, vector<16x256xbf16>
    %100 = arith.select %12, %97, %99 : vector<16x256xi1>, vector<16x256xbf16>
    %101 = arith.extf %100 : vector<16x256xbf16> to vector<16x256xf32>
    %cst_49 = arith.constant dense<0.000000e+00> : vector<16x256xf32>
    %102 = tpu.matmul %82, %23, %cst_49 {dimension_numbers = #tpu.dot_dimension_numbers<[1], [0], [0], [1], [0, 0, 1, 1], [], []>} : vector<16x256xf32>, vector<256x256xf32>, vector<16x256xf32> -> vector<16x256xf32>
    %103 = arith.addf %101, %102 : vector<16x256xf32>
    %104 = math.tanh %103 : vector<16x256xf32>
    %105 = vector.extract_strided_slice %104 {offsets = [0, 0], sizes = [16, 128], strides = [1, 1]} : vector<16x256xf32> to vector<16x128xf32>
    %106 = arith.truncf %105 : vector<16x128xf32> to vector<16x128xbf16>
    %107 = arith.index_cast %92 : i32 to index
    %c0_50 = arith.constant 0 : index
    %108 = vector.load %arg13[%107, %c0_50] : memref<128x128xbf16, #tpu.memory_space<vmem>>, vector<16x128xbf16>
    tpu.vector_store %arg13[%107, %c0_50], %106 {strides = array<i32>} : memref<128x128xbf16, #tpu.memory_space<vmem>>, vector<16x128xbf16>,
    %109 = vector.extract_strided_slice %104 {offsets = [0, 128], sizes = [16, 128], strides = [1, 1]} : vector<16x256xf32> to vector<16x128xf32>
    %110 = arith.truncf %109 : vector<16x128xf32> to vector<16x128xbf16>
    %111 = arith.index_cast %95 : i32 to index
    %c0_51 = arith.constant 0 : index
    %112 = vector.load %arg14[%111, %c0_51] : memref<128x128xbf16, #tpu.memory_space<vmem>>, vector<16x128xbf16>
    tpu.vector_store %arg14[%111, %c0_51], %110 {strides = array<i32>} : memref<128x128xbf16, #tpu.memory_space<vmem>>, vector<16x128xbf16>,
    %c4_i32 = arith.constant 4 : i32
    %c16_i32_52 = arith.constant 16 : i32
    %113 = arith.muli %c4_i32, %c16_i32_52 : i32
    %114 = tpu.assume_multiple %113, 16 : i32
    %c7_i32_53 = arith.constant 7 : i32
    %115 = arith.subi %c7_i32_53, %c4_i32 : i32
    %c16_i32_54 = arith.constant 16 : i32
    %116 = arith.muli %115, %c16_i32_54 : i32
    %117 = tpu.assume_multiple %116, 16 : i32
    %118 = arith.index_cast %114 : i32 to index
    %c0_55 = arith.constant 0 : index
    %119 = vector.load %arg12[%118, %c0_55] : memref<128x256xbf16, #tpu.memory_space<vmem>>, vector<16x256xbf16>
    %120 = arith.index_cast %117 : i32 to index
    %c0_56 = arith.constant 0 : index
    %121 = vector.load %arg12[%120, %c0_56] : memref<128x256xbf16, #tpu.memory_space<vmem>>, vector<16x256xbf16>
    %122 = arith.select %12, %119, %121 : vector<16x256xi1>, vector<16x256xbf16>
    %123 = arith.extf %122 : vector<16x256xbf16> to vector<16x256xf32>
    %cst_57 = arith.constant dense<0.000000e+00> : vector<16x256xf32>
    %124 = tpu.matmul %104, %23, %cst_57 {dimension_numbers = #tpu.dot_dimension_numbers<[1], [0], [0], [1], [0, 0, 1, 1], [], []>} : vector<16x256xf32>, vector<256x256xf32>, vector<16x256xf32> -> vector<16x256xf32>
    %125 = arith.addf %123, %124 : vector<16x256xf32>
    %126 = math.tanh %125 : vector<16x256xf32>
    %127 = vector.extract_strided_slice %126 {offsets = [0, 0], sizes = [16, 128], strides = [1, 1]} : vector<16x256xf32> to vector<16x128xf32>
    %128 = arith.truncf %127 : vector<16x128xf32> to vector<16x128xbf16>
    %129 = arith.index_cast %114 : i32 to index
    %c0_58 = arith.constant 0 : index
    %130 = vector.load %arg13[%129, %c0_58] : memref<128x128xbf16, #tpu.memory_space<vmem>>, vector<16x128xbf16>
    tpu.vector_store %arg13[%129, %c0_58], %128 {strides = array<i32>} : memref<128x128xbf16, #tpu.memory_space<vmem>>, vector<16x128xbf16>,
    %131 = vector.extract_strided_slice %126 {offsets = [0, 128], sizes = [16, 128], strides = [1, 1]} : vector<16x256xf32> to vector<16x128xf32>
    %132 = arith.truncf %131 : vector<16x128xf32> to vector<16x128xbf16>
    %133 = arith.index_cast %117 : i32 to index
    %c0_59 = arith.constant 0 : index
    %134 = vector.load %arg14[%133, %c0_59] : memref<128x128xbf16, #tpu.memory_space<vmem>>, vector<16x128xbf16>
    tpu.vector_store %arg14[%133, %c0_59], %132 {strides = array<i32>} : memref<128x128xbf16, #tpu.memory_space<vmem>>, vector<16x128xbf16>,
    %c5_i32 = arith.constant 5 : i32
    %c16_i32_60 = arith.constant 16 : i32
    %135 = arith.muli %c5_i32, %c16_i32_60 : i32
    %136 = tpu.assume_multiple %135, 16 : i32
    %c7_i32_61 = arith.constant 7 : i32
    %137 = arith.subi %c7_i32_61, %c5_i32 : i32
    %c16_i32_62 = arith.constant 16 : i32
    %138 = arith.muli %137, %c16_i32_62 : i32
    %139 = tpu.assume_multiple %138, 16 : i32
    %140 = arith.index_cast %136 : i32 to index
    %c0_63 = arith.constant 0 : index
    %141 = vector.load %arg12[%140, %c0_63] : memref<128x256xbf16, #tpu.memory_space<vmem>>, vector<16x256xbf16>
    %142 = arith.index_cast %139 : i32 to index
    %c0_64 = arith.constant 0 : index
    %143 = vector.load %arg12[%142, %c0_64] : memref<128x256xbf16, #tpu.memory_space<vmem>>, vector<16x256xbf16>
    %144 = arith.select %12, %141, %143 : vector<16x256xi1>, vector<16x256xbf16>
    %145 = arith.extf %144 : vector<16x256xbf16> to vector<16x256xf32>
    %cst_65 = arith.constant dense<0.000000e+00> : vector<16x256xf32>
    %146 = tpu.matmul %126, %23, %cst_65 {dimension_numbers = #tpu.dot_dimension_numbers<[1], [0], [0], [1], [0, 0, 1, 1], [], []>} : vector<16x256xf32>, vector<256x256xf32>, vector<16x256xf32> -> vector<16x256xf32>
    %147 = arith.addf %145, %146 : vector<16x256xf32>
    %148 = math.tanh %147 : vector<16x256xf32>
    %149 = vector.extract_strided_slice %148 {offsets = [0, 0], sizes = [16, 128], strides = [1, 1]} : vector<16x256xf32> to vector<16x128xf32>
    %150 = arith.truncf %149 : vector<16x128xf32> to vector<16x128xbf16>
    %151 = arith.index_cast %136 : i32 to index
    %c0_66 = arith.constant 0 : index
    %152 = vector.load %arg13[%151, %c0_66] : memref<128x128xbf16, #tpu.memory_space<vmem>>, vector<16x128xbf16>
    tpu.vector_store %arg13[%151, %c0_66], %150 {strides = array<i32>} : memref<128x128xbf16, #tpu.memory_space<vmem>>, vector<16x128xbf16>,
    %153 = vector.extract_strided_slice %148 {offsets = [0, 128], sizes = [16, 128], strides = [1, 1]} : vector<16x256xf32> to vector<16x128xf32>
    %154 = arith.truncf %153 : vector<16x128xf32> to vector<16x128xbf16>
    %155 = arith.index_cast %139 : i32 to index
    %c0_67 = arith.constant 0 : index
    %156 = vector.load %arg14[%155, %c0_67] : memref<128x128xbf16, #tpu.memory_space<vmem>>, vector<16x128xbf16>
    tpu.vector_store %arg14[%155, %c0_67], %154 {strides = array<i32>} : memref<128x128xbf16, #tpu.memory_space<vmem>>, vector<16x128xbf16>,
    %c6_i32 = arith.constant 6 : i32
    %c16_i32_68 = arith.constant 16 : i32
    %157 = arith.muli %c6_i32, %c16_i32_68 : i32
    %158 = tpu.assume_multiple %157, 16 : i32
    %c7_i32_69 = arith.constant 7 : i32
    %159 = arith.subi %c7_i32_69, %c6_i32 : i32
    %c16_i32_70 = arith.constant 16 : i32
    %160 = arith.muli %159, %c16_i32_70 : i32
    %161 = tpu.assume_multiple %160, 16 : i32
    %162 = arith.index_cast %158 : i32 to index
    %c0_71 = arith.constant 0 : index
    %163 = vector.load %arg12[%162, %c0_71] : memref<128x256xbf16, #tpu.memory_space<vmem>>, vector<16x256xbf16>
    %164 = arith.index_cast %161 : i32 to index
    %c0_72 = arith.constant 0 : index
    %165 = vector.load %arg12[%164, %c0_72] : memref<128x256xbf16, #tpu.memory_space<vmem>>, vector<16x256xbf16>
    %166 = arith.select %12, %163, %165 : vector<16x256xi1>, vector<16x256xbf16>
    %167 = arith.extf %166 : vector<16x256xbf16> to vector<16x256xf32>
    %cst_73 = arith.constant dense<0.000000e+00> : vector<16x256xf32>
    %168 = tpu.matmul %148, %23, %cst_73 {dimension_numbers = #tpu.dot_dimension_numbers<[1], [0], [0], [1], [0, 0, 1, 1], [], []>} : vector<16x256xf32>, vector<256x256xf32>, vector<16x256xf32> -> vector<16x256xf32>
    %169 = arith.addf %167, %168 : vector<16x256xf32>
    %170 = math.tanh %169 : vector<16x256xf32>
    %171 = vector.extract_strided_slice %170 {offsets = [0, 0], sizes = [16, 128], strides = [1, 1]} : vector<16x256xf32> to vector<16x128xf32>
    %172 = arith.truncf %171 : vector<16x128xf32> to vector<16x128xbf16>
    %173 = arith.index_cast %158 : i32 to index
    %c0_74 = arith.constant 0 : index
    %174 = vector.load %arg13[%173, %c0_74] : memref<128x128xbf16, #tpu.memory_space<vmem>>, vector<16x128xbf16>
    tpu.vector_store %arg13[%173, %c0_74], %172 {strides = array<i32>} : memref<128x128xbf16, #tpu.memory_space<vmem>>, vector<16x128xbf16>,
    %175 = vector.extract_strided_slice %170 {offsets = [0, 128], sizes = [16, 128], strides = [1, 1]} : vector<16x256xf32> to vector<16x128xf32>
    %176 = arith.truncf %175 : vector<16x128xf32> to vector<16x128xbf16>
    %177 = arith.index_cast %161 : i32 to index
    %c0_75 = arith.constant 0 : index
    %178 = vector.load %arg14[%177, %c0_75] : memref<128x128xbf16, #tpu.memory_space<vmem>>, vector<16x128xbf16>
    tpu.vector_store %arg14[%177, %c0_75], %176 {strides = array<i32>} : memref<128x128xbf16, #tpu.memory_space<vmem>>, vector<16x128xbf16>,
    %c7_i32_76 = arith.constant 7 : i32
    %c16_i32_77 = arith.constant 16 : i32
    %179 = arith.muli %c7_i32_76, %c16_i32_77 : i32
    %180 = tpu.assume_multiple %179, 16 : i32
    %c7_i32_78 = arith.constant 7 : i32
    %181 = arith.subi %c7_i32_78, %c7_i32_76 : i32
    %c16_i32_79 = arith.constant 16 : i32
    %182 = arith.muli %181, %c16_i32_79 : i32
    %183 = tpu.assume_multiple %182, 16 : i32
    %184 = arith.index_cast %180 : i32 to index
    %c0_80 = arith.constant 0 : index
    %185 = vector.load %arg12[%184, %c0_80] : memref<128x256xbf16, #tpu.memory_space<vmem>>, vector<16x256xbf16>
    %186 = arith.index_cast %183 : i32 to index
    %c0_81 = arith.constant 0 : index
    %187 = vector.load %arg12[%186, %c0_81] : memref<128x256xbf16, #tpu.memory_space<vmem>>, vector<16x256xbf16>
    %188 = arith.select %12, %185, %187 : vector<16x256xi1>, vector<16x256xbf16>
    %189 = arith.extf %188 : vector<16x256xbf16> to vector<16x256xf32>
    %cst_82 = arith.constant dense<0.000000e+00> : vector<16x256xf32>
    %190 = tpu.matmul %170, %23, %cst_82 {dimension_numbers = #tpu.dot_dimension_numbers<[1], [0], [0], [1], [0, 0, 1, 1], [], []>} : vector<16x256xf32>, vector<256x256xf32>, vector<16x256xf32> -> vector<16x256xf32>
    %191 = arith.addf %189, %190 : vector<16x256xf32>
    %192 = math.tanh %191 : vector<16x256xf32>
    %193 = vector.extract_strided_slice %192 {offsets = [0, 0], sizes = [16, 128], strides = [1, 1]} : vector<16x256xf32> to vector<16x128xf32>
    %194 = arith.truncf %193 : vector<16x128xf32> to vector<16x128xbf16>
    %195 = arith.index_cast %180 : i32 to index
    %c0_83 = arith.constant 0 : index
    %196 = vector.load %arg13[%195, %c0_83] : memref<128x128xbf16, #tpu.memory_space<vmem>>, vector<16x128xbf16>
    tpu.vector_store %arg13[%195, %c0_83], %194 {strides = array<i32>} : memref<128x128xbf16, #tpu.memory_space<vmem>>, vector<16x128xbf16>,
    %197 = vector.extract_strided_slice %192 {offsets = [0, 128], sizes = [16, 128], strides = [1, 1]} : vector<16x256xf32> to vector<16x128xf32>
    %198 = arith.truncf %197 : vector<16x128xf32> to vector<16x128xbf16>
    %199 = arith.index_cast %183 : i32 to index
    %c0_84 = arith.constant 0 : index
    %200 = vector.load %arg14[%199, %c0_84] : memref<128x128xbf16, #tpu.memory_space<vmem>>, vector<16x128xbf16>
    tpu.vector_store %arg14[%199, %c0_84], %198 {strides = array<i32>} : memref<128x128xbf16, #tpu.memory_space<vmem>>, vector<16x128xbf16>,
    %c8_i32 = arith.constant 8 : i32
    %c0_85 = arith.constant 0 : index
    %c0_86 = arith.constant 0 : index
    %201 = vector.load %arg13[%c0_85, %c0_86] : memref<128x128xbf16, #tpu.memory_space<vmem>>, vector<128x128xbf16>
    %c0_87 = arith.constant 0 : index
    %c0_88 = arith.constant 0 : index
    %c0_89 = arith.constant 0 : index
    %202 = vector.load %arg5[%c0_87, %c0_88, %c0_89] : memref<1x256x256xbf16, #tpu.memory_space<vmem>>, vector<1x128x256xbf16>
    %203 = vector.shape_cast %202 : vector<1x128x256xbf16> to vector<128x256xbf16>
    %cst_90 = arith.constant dense<0.000000e+00> : vector<128x256xf32>
    %204 = tpu.matmul %201, %203, %cst_90 {dimension_numbers = #tpu.dot_dimension_numbers<[1], [0], [0], [1], [0, 0, 1, 1], [], []>} : vector<128x128xbf16>, vector<128x256xbf16>, vector<128x256xf32> -> vector<128x256xf32>
    %c0_91 = arith.constant 0 : index
    %c0_92 = arith.constant 0 : index
    %205 = vector.load %arg14[%c0_91, %c0_92] : memref<128x128xbf16, #tpu.memory_space<vmem>>, vector<128x128xbf16>
    %c0_93 = arith.constant 0 : index
    %c128 = arith.constant 128 : index
    %c0_94 = arith.constant 0 : index
    %206 = vector.load %arg5[%c0_93, %c128, %c0_94] : memref<1x256x256xbf16, #tpu.memory_space<vmem>>, vector<1x128x256xbf16>
    %207 = vector.shape_cast %206 : vector<1x128x256xbf16> to vector<128x256xbf16>
    %cst_95 = arith.constant dense<0.000000e+00> : vector<128x256xf32>
    %208 = tpu.matmul %205, %207, %cst_95 {dimension_numbers = #tpu.dot_dimension_numbers<[1], [0], [0], [1], [0, 0, 1, 1], [], []>} : vector<128x128xbf16>, vector<128x256xbf16>, vector<128x256xf32> -> vector<128x256xf32>
    %209 = arith.addf %204, %208 : vector<128x256xf32>
    %c1 = arith.constant 1 : index
    %c0_96 = arith.constant 0 : index
    %c0_97 = arith.constant 0 : index
    %210 = vector.load %arg7[%c1, %c0_96, %c0_97] : memref<2x1x256xf32, #tpu.memory_space<vmem>>, vector<1x1x256xf32>
    %211 = vector.shape_cast %210 : vector<1x1x256xf32> to vector<1x256xf32>
    %212 = vector.broadcast %211 : vector<1x256xf32> to vector<128x256xf32>
    %213 = arith.addf %209, %212 : vector<128x256xf32>
    %214 = arith.truncf %213 : vector<128x256xf32> to vector<128x256xbf16>
    %c0_98 = arith.constant 0 : index
    %c0_99 = arith.constant 0 : index
    %215 = vector.load %arg12[%c0_98, %c0_99] : memref<128x256xbf16, #tpu.memory_space<vmem>>, vector<128x256xbf16>
    tpu.vector_store %arg12[%c0_98, %c0_99], %214 {strides = array<i32>} : memref<128x256xbf16, #tpu.memory_space<vmem>>, vector<128x256xbf16>,
    %c1_100 = arith.constant 1 : index
    %c0_101 = arith.constant 0 : index
    %c0_102 = arith.constant 0 : index
    %216 = vector.load %arg6[%c1_100, %c0_101, %c0_102] : memref<2x256x256xf32, #tpu.memory_space<vmem>>, vector<1x256x256xf32>
    %217 = vector.shape_cast %216 : vector<1x256x256xf32> to vector<256x256xf32>
    %cst_103 = arith.constant 0.000000e+00 : f32
    %218 = vector.broadcast %cst_103 : f32 to vector<16x256xf32>
    %c0_i32_104 = arith.constant 0 : i32
    %c16_i32_105 = arith.constant 16 : i32
    %219 = arith.muli %c0_i32_104, %c16_i32_105 : i32
    %220 = tpu.assume_multiple %219, 16 : i32
    %c7_i32_106 = arith.constant 7 : i32
    %221 = arith.subi %c7_i32_106, %c0_i32_104 : i32
    %c16_i32_107 = arith.constant 16 : i32
    %222 = arith.muli %221, %c16_i32_107 : i32
    %223 = tpu.assume_multiple %222, 16 : i32
    %224 = arith.index_cast %220 : i32 to index
    %c0_108 = arith.constant 0 : index
    %225 = vector.load %arg12[%224, %c0_108] : memref<128x256xbf16, #tpu.memory_space<vmem>>, vector<16x256xbf16>
    %226 = arith.index_cast %223 : i32 to index
    %c0_109 = arith.constant 0 : index
    %227 = vector.load %arg12[%226, %c0_109] : memref<128x256xbf16, #tpu.memory_space<vmem>>, vector<16x256xbf16>
    %228 = arith.select %12, %225, %227 : vector<16x256xi1>, vector<16x256xbf16>
    %229 = arith.extf %228 : vector<16x256xbf16> to vector<16x256xf32>
    %cst_110 = arith.constant dense<0.000000e+00> : vector<16x256xf32>
    %230 = tpu.matmul %218, %217, %cst_110 {dimension_numbers = #tpu.dot_dimension_numbers<[1], [0], [0], [1], [0, 0, 1, 1], [], []>} : vector<16x256xf32>, vector<256x256xf32>, vector<16x256xf32> -> vector<16x256xf32>
    %231 = arith.addf %229, %230 : vector<16x256xf32>
    %232 = math.tanh %231 : vector<16x256xf32>
    %233 = vector.extract_strided_slice %232 {offsets = [0, 0], sizes = [16, 128], strides = [1, 1]} : vector<16x256xf32> to vector<16x128xf32>
    %234 = arith.truncf %233 : vector<16x128xf32> to vector<16x128xbf16>
    %235 = arith.index_cast %220 : i32 to index
    %c0_111 = arith.constant 0 : index
    %236 = vector.load %arg13[%235, %c0_111] : memref<128x128xbf16, #tpu.memory_space<vmem>>, vector<16x128xbf16>
    tpu.vector_store %arg13[%235, %c0_111], %234 {strides = array<i32>} : memref<128x128xbf16, #tpu.memory_space<vmem>>, vector<16x128xbf16>,
    %237 = vector.extract_strided_slice %232 {offsets = [0, 128], sizes = [16, 128], strides = [1, 1]} : vector<16x256xf32> to vector<16x128xf32>
    %238 = arith.truncf %237 : vector<16x128xf32> to vector<16x128xbf16>
    %239 = arith.index_cast %223 : i32 to index
    %c0_112 = arith.constant 0 : index
    %240 = vector.load %arg14[%239, %c0_112] : memref<128x128xbf16, #tpu.memory_space<vmem>>, vector<16x128xbf16>
    tpu.vector_store %arg14[%239, %c0_112], %238 {strides = array<i32>} : memref<128x128xbf16, #tpu.memory_space<vmem>>, vector<16x128xbf16>,
    %c1_i32_113 = arith.constant 1 : i32
    %c16_i32_114 = arith.constant 16 : i32
    %241 = arith.muli %c1_i32_113, %c16_i32_114 : i32
    %242 = tpu.assume_multiple %241, 16 : i32
    %c7_i32_115 = arith.constant 7 : i32
    %243 = arith.subi %c7_i32_115, %c1_i32_113 : i32
    %c16_i32_116 = arith.constant 16 : i32
    %244 = arith.muli %243, %c16_i32_116 : i32
    %245 = tpu.assume_multiple %244, 16 : i32
    %246 = arith.index_cast %242 : i32 to index
    %c0_117 = arith.constant 0 : index
    %247 = vector.load %arg12[%246, %c0_117] : memref<128x256xbf16, #tpu.memory_space<vmem>>, vector<16x256xbf16>
    %248 = arith.index_cast %245 : i32 to index
    %c0_118 = arith.constant 0 : index
    %249 = vector.load %arg12[%248, %c0_118] : memref<128x256xbf16, #tpu.memory_space<vmem>>, vector<16x256xbf16>
    %250 = arith.select %12, %247, %249 : vector<16x256xi1>, vector<16x256xbf16>
    %251 = arith.extf %250 : vector<16x256xbf16> to vector<16x256xf32>
    %cst_119 = arith.constant dense<0.000000e+00> : vector<16x256xf32>
    %252 = tpu.matmul %232, %217, %cst_119 {dimension_numbers = #tpu.dot_dimension_numbers<[1], [0], [0], [1], [0, 0, 1, 1], [], []>} : vector<16x256xf32>, vector<256x256xf32>, vector<16x256xf32> -> vector<16x256xf32>
    %253 = arith.addf %251, %252 : vector<16x256xf32>
    %254 = math.tanh %253 : vector<16x256xf32>
    %255 = vector.extract_strided_slice %254 {offsets = [0, 0], sizes = [16, 128], strides = [1, 1]} : vector<16x256xf32> to vector<16x128xf32>
    %256 = arith.truncf %255 : vector<16x128xf32> to vector<16x128xbf16>
    %257 = arith.index_cast %242 : i32 to index
    %c0_120 = arith.constant 0 : index
    %258 = vector.load %arg13[%257, %c0_120] : memref<128x128xbf16, #tpu.memory_space<vmem>>, vector<16x128xbf16>
    tpu.vector_store %arg13[%257, %c0_120], %256 {strides = array<i32>} : memref<128x128xbf16, #tpu.memory_space<vmem>>, vector<16x128xbf16>,
    %259 = vector.extract_strided_slice %254 {offsets = [0, 128], sizes = [16, 128], strides = [1, 1]} : vector<16x256xf32> to vector<16x128xf32>
    %260 = arith.truncf %259 : vector<16x128xf32> to vector<16x128xbf16>
    %261 = arith.index_cast %245 : i32 to index
    %c0_121 = arith.constant 0 : index
    %262 = vector.load %arg14[%261, %c0_121] : memref<128x128xbf16, #tpu.memory_space<vmem>>, vector<16x128xbf16>
    tpu.vector_store %arg14[%261, %c0_121], %260 {strides = array<i32>} : memref<128x128xbf16, #tpu.memory_space<vmem>>, vector<16x128xbf16>,
    %c2_i32_122 = arith.constant 2 : i32
    %c16_i32_123 = arith.constant 16 : i32
    %263 = arith.muli %c2_i32_122, %c16_i32_123 : i32
    %264 = tpu.assume_multiple %263, 16 : i32
    %c7_i32_124 = arith.constant 7 : i32
    %265 = arith.subi %c7_i32_124, %c2_i32_122 : i32
    %c16_i32_125 = arith.constant 16 : i32
    %266 = arith.muli %265, %c16_i32_125 : i32
    %267 = tpu.assume_multiple %266, 16 : i32
    %268 = arith.index_cast %264 : i32 to index
    %c0_126 = arith.constant 0 : index
    %269 = vector.load %arg12[%268, %c0_126] : memref<128x256xbf16, #tpu.memory_space<vmem>>, vector<16x256xbf16>
    %270 = arith.index_cast %267 : i32 to index
    %c0_127 = arith.constant 0 : index
    %271 = vector.load %arg12[%270, %c0_127] : memref<128x256xbf16, #tpu.memory_space<vmem>>, vector<16x256xbf16>
    %272 = arith.select %12, %269, %271 : vector<16x256xi1>, vector<16x256xbf16>
    %273 = arith.extf %272 : vector<16x256xbf16> to vector<16x256xf32>
    %cst_128 = arith.constant dense<0.000000e+00> : vector<16x256xf32>
    %274 = tpu.matmul %254, %217, %cst_128 {dimension_numbers = #tpu.dot_dimension_numbers<[1], [0], [0], [1], [0, 0, 1, 1], [], []>} : vector<16x256xf32>, vector<256x256xf32>, vector<16x256xf32> -> vector<16x256xf32>
    %275 = arith.addf %273, %274 : vector<16x256xf32>
    %276 = math.tanh %275 : vector<16x256xf32>
    %277 = vector.extract_strided_slice %276 {offsets = [0, 0], sizes = [16, 128], strides = [1, 1]} : vector<16x256xf32> to vector<16x128xf32>
    %278 = arith.truncf %277 : vector<16x128xf32> to vector<16x128xbf16>
    %279 = arith.index_cast %264 : i32 to index
    %c0_129 = arith.constant 0 : index
    %280 = vector.load %arg13[%279, %c0_129] : memref<128x128xbf16, #tpu.memory_space<vmem>>, vector<16x128xbf16>
    tpu.vector_store %arg13[%279, %c0_129], %278 {strides = array<i32>} : memref<128x128xbf16, #tpu.memory_space<vmem>>, vector<16x128xbf16>,
    %281 = vector.extract_strided_slice %276 {offsets = [0, 128], sizes = [16, 128], strides = [1, 1]} : vector<16x256xf32> to vector<16x128xf32>
    %282 = arith.truncf %281 : vector<16x128xf32> to vector<16x128xbf16>
    %283 = arith.index_cast %267 : i32 to index
    %c0_130 = arith.constant 0 : index
    %284 = vector.load %arg14[%283, %c0_130] : memref<128x128xbf16, #tpu.memory_space<vmem>>, vector<16x128xbf16>
    tpu.vector_store %arg14[%283, %c0_130], %282 {strides = array<i32>} : memref<128x128xbf16, #tpu.memory_space<vmem>>, vector<16x128xbf16>,
    %c3_i32_131 = arith.constant 3 : i32
    %c16_i32_132 = arith.constant 16 : i32
    %285 = arith.muli %c3_i32_131, %c16_i32_132 : i32
    %286 = tpu.assume_multiple %285, 16 : i32
    %c7_i32_133 = arith.constant 7 : i32
    %287 = arith.subi %c7_i32_133, %c3_i32_131 : i32
    %c16_i32_134 = arith.constant 16 : i32
    %288 = arith.muli %287, %c16_i32_134 : i32
    %289 = tpu.assume_multiple %288, 16 : i32
    %290 = arith.index_cast %286 : i32 to index
    %c0_135 = arith.constant 0 : index
    %291 = vector.load %arg12[%290, %c0_135] : memref<128x256xbf16, #tpu.memory_space<vmem>>, vector<16x256xbf16>
    %292 = arith.index_cast %289 : i32 to index
    %c0_136 = arith.constant 0 : index
    %293 = vector.load %arg12[%292, %c0_136] : memref<128x256xbf16, #tpu.memory_space<vmem>>, vector<16x256xbf16>
    %294 = arith.select %12, %291, %293 : vector<16x256xi1>, vector<16x256xbf16>
    %295 = arith.extf %294 : vector<16x256xbf16> to vector<16x256xf32>
    %cst_137 = arith.constant dense<0.000000e+00> : vector<16x256xf32>
    %296 = tpu.matmul %276, %217, %cst_137 {dimension_numbers = #tpu.dot_dimension_numbers<[1], [0], [0], [1], [0, 0, 1, 1], [], []>} : vector<16x256xf32>, vector<256x256xf32>, vector<16x256xf32> -> vector<16x256xf32>
    %297 = arith.addf %295, %296 : vector<16x256xf32>
    %298 = math.tanh %297 : vector<16x256xf32>
    %299 = vector.extract_strided_slice %298 {offsets = [0, 0], sizes = [16, 128], strides = [1, 1]} : vector<16x256xf32> to vector<16x128xf32>
    %300 = arith.truncf %299 : vector<16x128xf32> to vector<16x128xbf16>
    %301 = arith.index_cast %286 : i32 to index
    %c0_138 = arith.constant 0 : index
    %302 = vector.load %arg13[%301, %c0_138] : memref<128x128xbf16, #tpu.memory_space<vmem>>, vector<16x128xbf16>
    tpu.vector_store %arg13[%301, %c0_138], %300 {strides = array<i32>} : memref<128x128xbf16, #tpu.memory_space<vmem>>, vector<16x128xbf16>,
    %303 = vector.extract_strided_slice %298 {offsets = [0, 128], sizes = [16, 128], strides = [1, 1]} : vector<16x256xf32> to vector<16x128xf32>
    %304 = arith.truncf %303 : vector<16x128xf32> to vector<16x128xbf16>
    %305 = arith.index_cast %289 : i32 to index
    %c0_139 = arith.constant 0 : index
    %306 = vector.load %arg14[%305, %c0_139] : memref<128x128xbf16, #tpu.memory_space<vmem>>, vector<16x128xbf16>
    tpu.vector_store %arg14[%305, %c0_139], %304 {strides = array<i32>} : memref<128x128xbf16, #tpu.memory_space<vmem>>, vector<16x128xbf16>,
    %c4_i32_140 = arith.constant 4 : i32
    %c16_i32_141 = arith.constant 16 : i32
    %307 = arith.muli %c4_i32_140, %c16_i32_141 : i32
    %308 = tpu.assume_multiple %307, 16 : i32
    %c7_i32_142 = arith.constant 7 : i32
    %309 = arith.subi %c7_i32_142, %c4_i32_140 : i32
    %c16_i32_143 = arith.constant 16 : i32
    %310 = arith.muli %309, %c16_i32_143 : i32
    %311 = tpu.assume_multiple %310, 16 : i32
    %312 = arith.index_cast %308 : i32 to index
    %c0_144 = arith.constant 0 : index
    %313 = vector.load %arg12[%312, %c0_144] : memref<128x256xbf16, #tpu.memory_space<vmem>>, vector<16x256xbf16>
    %314 = arith.index_cast %311 : i32 to index
    %c0_145 = arith.constant 0 : index
    %315 = vector.load %arg12[%314, %c0_145] : memref<128x256xbf16, #tpu.memory_space<vmem>>, vector<16x256xbf16>
    %316 = arith.select %12, %313, %315 : vector<16x256xi1>, vector<16x256xbf16>
    %317 = arith.extf %316 : vector<16x256xbf16> to vector<16x256xf32>
    %cst_146 = arith.constant dense<0.000000e+00> : vector<16x256xf32>
    %318 = tpu.matmul %298, %217, %cst_146 {dimension_numbers = #tpu.dot_dimension_numbers<[1], [0], [0], [1], [0, 0, 1, 1], [], []>} : vector<16x256xf32>, vector<256x256xf32>, vector<16x256xf32> -> vector<16x256xf32>
    %319 = arith.addf %317, %318 : vector<16x256xf32>
    %320 = math.tanh %319 : vector<16x256xf32>
    %321 = vector.extract_strided_slice %320 {offsets = [0, 0], sizes = [16, 128], strides = [1, 1]} : vector<16x256xf32> to vector<16x128xf32>
    %322 = arith.truncf %321 : vector<16x128xf32> to vector<16x128xbf16>
    %323 = arith.index_cast %308 : i32 to index
    %c0_147 = arith.constant 0 : index
    %324 = vector.load %arg13[%323, %c0_147] : memref<128x128xbf16, #tpu.memory_space<vmem>>, vector<16x128xbf16>
    tpu.vector_store %arg13[%323, %c0_147], %322 {strides = array<i32>} : memref<128x128xbf16, #tpu.memory_space<vmem>>, vector<16x128xbf16>,
    %325 = vector.extract_strided_slice %320 {offsets = [0, 128], sizes = [16, 128], strides = [1, 1]} : vector<16x256xf32> to vector<16x128xf32>
    %326 = arith.truncf %325 : vector<16x128xf32> to vector<16x128xbf16>
    %327 = arith.index_cast %311 : i32 to index
    %c0_148 = arith.constant 0 : index
    %328 = vector.load %arg14[%327, %c0_148] : memref<128x128xbf16, #tpu.memory_space<vmem>>, vector<16x128xbf16>
    tpu.vector_store %arg14[%327, %c0_148], %326 {strides = array<i32>} : memref<128x128xbf16, #tpu.memory_space<vmem>>, vector<16x128xbf16>,
    %c5_i32_149 = arith.constant 5 : i32
    %c16_i32_150 = arith.constant 16 : i32
    %329 = arith.muli %c5_i32_149, %c16_i32_150 : i32
    %330 = tpu.assume_multiple %329, 16 : i32
    %c7_i32_151 = arith.constant 7 : i32
    %331 = arith.subi %c7_i32_151, %c5_i32_149 : i32
    %c16_i32_152 = arith.constant 16 : i32
    %332 = arith.muli %331, %c16_i32_152 : i32
    %333 = tpu.assume_multiple %332, 16 : i32
    %334 = arith.index_cast %330 : i32 to index
    %c0_153 = arith.constant 0 : index
    %335 = vector.load %arg12[%334, %c0_153] : memref<128x256xbf16, #tpu.memory_space<vmem>>, vector<16x256xbf16>
    %336 = arith.index_cast %333 : i32 to index
    %c0_154 = arith.constant 0 : index
    %337 = vector.load %arg12[%336, %c0_154] : memref<128x256xbf16, #tpu.memory_space<vmem>>, vector<16x256xbf16>
    %338 = arith.select %12, %335, %337 : vector<16x256xi1>, vector<16x256xbf16>
    %339 = arith.extf %338 : vector<16x256xbf16> to vector<16x256xf32>
    %cst_155 = arith.constant dense<0.000000e+00> : vector<16x256xf32>
    %340 = tpu.matmul %320, %217, %cst_155 {dimension_numbers = #tpu.dot_dimension_numbers<[1], [0], [0], [1], [0, 0, 1, 1], [], []>} : vector<16x256xf32>, vector<256x256xf32>, vector<16x256xf32> -> vector<16x256xf32>
    %341 = arith.addf %339, %340 : vector<16x256xf32>
    %342 = math.tanh %341 : vector<16x256xf32>
    %343 = vector.extract_strided_slice %342 {offsets = [0, 0], sizes = [16, 128], strides = [1, 1]} : vector<16x256xf32> to vector<16x128xf32>
    %344 = arith.truncf %343 : vector<16x128xf32> to vector<16x128xbf16>
    %345 = arith.index_cast %330 : i32 to index
    %c0_156 = arith.constant 0 : index
    %346 = vector.load %arg13[%345, %c0_156] : memref<128x128xbf16, #tpu.memory_space<vmem>>, vector<16x128xbf16>
    tpu.vector_store %arg13[%345, %c0_156], %344 {strides = array<i32>} : memref<128x128xbf16, #tpu.memory_space<vmem>>, vector<16x128xbf16>,
    %347 = vector.extract_strided_slice %342 {offsets = [0, 128], sizes = [16, 128], strides = [1, 1]} : vector<16x256xf32> to vector<16x128xf32>
    %348 = arith.truncf %347 : vector<16x128xf32> to vector<16x128xbf16>
    %349 = arith.index_cast %333 : i32 to index
    %c0_157 = arith.constant 0 : index
    %350 = vector.load %arg14[%349, %c0_157] : memref<128x128xbf16, #tpu.memory_space<vmem>>, vector<16x128xbf16>
    tpu.vector_store %arg14[%349, %c0_157], %348 {strides = array<i32>} : memref<128x128xbf16, #tpu.memory_space<vmem>>, vector<16x128xbf16>,
    %c6_i32_158 = arith.constant 6 : i32
    %c16_i32_159 = arith.constant 16 : i32
    %351 = arith.muli %c6_i32_158, %c16_i32_159 : i32
    %352 = tpu.assume_multiple %351, 16 : i32
    %c7_i32_160 = arith.constant 7 : i32
    %353 = arith.subi %c7_i32_160, %c6_i32_158 : i32
    %c16_i32_161 = arith.constant 16 : i32
    %354 = arith.muli %353, %c16_i32_161 : i32
    %355 = tpu.assume_multiple %354, 16 : i32
    %356 = arith.index_cast %352 : i32 to index
    %c0_162 = arith.constant 0 : index
    %357 = vector.load %arg12[%356, %c0_162] : memref<128x256xbf16, #tpu.memory_space<vmem>>, vector<16x256xbf16>
    %358 = arith.index_cast %355 : i32 to index
    %c0_163 = arith.constant 0 : index
    %359 = vector.load %arg12[%358, %c0_163] : memref<128x256xbf16, #tpu.memory_space<vmem>>, vector<16x256xbf16>
    %360 = arith.select %12, %357, %359 : vector<16x256xi1>, vector<16x256xbf16>
    %361 = arith.extf %360 : vector<16x256xbf16> to vector<16x256xf32>
    %cst_164 = arith.constant dense<0.000000e+00> : vector<16x256xf32>
    %362 = tpu.matmul %342, %217, %cst_164 {dimension_numbers = #tpu.dot_dimension_numbers<[1], [0], [0], [1], [0, 0, 1, 1], [], []>} : vector<16x256xf32>, vector<256x256xf32>, vector<16x256xf32> -> vector<16x256xf32>
    %363 = arith.addf %361, %362 : vector<16x256xf32>
    %364 = math.tanh %363 : vector<16x256xf32>
    %365 = vector.extract_strided_slice %364 {offsets = [0, 0], sizes = [16, 128], strides = [1, 1]} : vector<16x256xf32> to vector<16x128xf32>
    %366 = arith.truncf %365 : vector<16x128xf32> to vector<16x128xbf16>
    %367 = arith.index_cast %352 : i32 to index
    %c0_165 = arith.constant 0 : index
    %368 = vector.load %arg13[%367, %c0_165] : memref<128x128xbf16, #tpu.memory_space<vmem>>, vector<16x128xbf16>
    tpu.vector_store %arg13[%367, %c0_165], %366 {strides = array<i32>} : memref<128x128xbf16, #tpu.memory_space<vmem>>, vector<16x128xbf16>,
    %369 = vector.extract_strided_slice %364 {offsets = [0, 128], sizes = [16, 128], strides = [1, 1]} : vector<16x256xf32> to vector<16x128xf32>
    %370 = arith.truncf %369 : vector<16x128xf32> to vector<16x128xbf16>
    %371 = arith.index_cast %355 : i32 to index
    %c0_166 = arith.constant 0 : index
    %372 = vector.load %arg14[%371, %c0_166] : memref<128x128xbf16, #tpu.memory_space<vmem>>, vector<16x128xbf16>
    tpu.vector_store %arg14[%371, %c0_166], %370 {strides = array<i32>} : memref<128x128xbf16, #tpu.memory_space<vmem>>, vector<16x128xbf16>,
    %c7_i32_167 = arith.constant 7 : i32
    %c16_i32_168 = arith.constant 16 : i32
    %373 = arith.muli %c7_i32_167, %c16_i32_168 : i32
    %374 = tpu.assume_multiple %373, 16 : i32
    %c7_i32_169 = arith.constant 7 : i32
    %375 = arith.subi %c7_i32_169, %c7_i32_167 : i32
    %c16_i32_170 = arith.constant 16 : i32
    %376 = arith.muli %375, %c16_i32_170 : i32
    %377 = tpu.assume_multiple %376, 16 : i32
    %378 = arith.index_cast %374 : i32 to index
    %c0_171 = arith.constant 0 : index
    %379 = vector.load %arg12[%378, %c0_171] : memref<128x256xbf16, #tpu.memory_space<vmem>>, vector<16x256xbf16>
    %380 = arith.index_cast %377 : i32 to index
    %c0_172 = arith.constant 0 : index
    %381 = vector.load %arg12[%380, %c0_172] : memref<128x256xbf16, #tpu.memory_space<vmem>>, vector<16x256xbf16>
    %382 = arith.select %12, %379, %381 : vector<16x256xi1>, vector<16x256xbf16>
    %383 = arith.extf %382 : vector<16x256xbf16> to vector<16x256xf32>
    %cst_173 = arith.constant dense<0.000000e+00> : vector<16x256xf32>
    %384 = tpu.matmul %364, %217, %cst_173 {dimension_numbers = #tpu.dot_dimension_numbers<[1], [0], [0], [1], [0, 0, 1, 1], [], []>} : vector<16x256xf32>, vector<256x256xf32>, vector<16x256xf32> -> vector<16x256xf32>
    %385 = arith.addf %383, %384 : vector<16x256xf32>
    %386 = math.tanh %385 : vector<16x256xf32>
    %387 = vector.extract_strided_slice %386 {offsets = [0, 0], sizes = [16, 128], strides = [1, 1]} : vector<16x256xf32> to vector<16x128xf32>
    %388 = arith.truncf %387 : vector<16x128xf32> to vector<16x128xbf16>
    %389 = arith.index_cast %374 : i32 to index
    %c0_174 = arith.constant 0 : index
    %390 = vector.load %arg13[%389, %c0_174] : memref<128x128xbf16, #tpu.memory_space<vmem>>, vector<16x128xbf16>
    tpu.vector_store %arg13[%389, %c0_174], %388 {strides = array<i32>} : memref<128x128xbf16, #tpu.memory_space<vmem>>, vector<16x128xbf16>,
    %391 = vector.extract_strided_slice %386 {offsets = [0, 128], sizes = [16, 128], strides = [1, 1]} : vector<16x256xf32> to vector<16x128xf32>
    %392 = arith.truncf %391 : vector<16x128xf32> to vector<16x128xbf16>
    %393 = arith.index_cast %377 : i32 to index
    %c0_175 = arith.constant 0 : index
    %394 = vector.load %arg14[%393, %c0_175] : memref<128x128xbf16, #tpu.memory_space<vmem>>, vector<16x128xbf16>
    tpu.vector_store %arg14[%393, %c0_175], %392 {strides = array<i32>} : memref<128x128xbf16, #tpu.memory_space<vmem>>, vector<16x128xbf16>,
    %c8_i32_176 = arith.constant 8 : i32
    %c0_177 = arith.constant 0 : index
    %c0_178 = arith.constant 0 : index
    %395 = vector.load %arg13[%c0_177, %c0_178] : memref<128x128xbf16, #tpu.memory_space<vmem>>, vector<16x128xbf16>
    %396 = arith.extf %395 : vector<16x128xbf16> to vector<16x128xf32>
    %c0_179 = arith.constant 0 : index
    %c0_180 = arith.constant 0 : index
    %397 = vector.load %arg8[%c0_179, %c0_180] : memref<512x2xf32, #tpu.memory_space<vmem>>, vector<128x2xf32>
    %cst_181 = arith.constant dense<0.000000e+00> : vector<16x2xf32>
    %398 = tpu.matmul %396, %397, %cst_181 {dimension_numbers = #tpu.dot_dimension_numbers<[1], [0], [0], [1], [0, 0, 1, 1], [], []>} : vector<16x128xf32>, vector<128x2xf32>, vector<16x2xf32> -> vector<16x2xf32>
    %c0_182 = arith.constant 0 : index
    %c0_183 = arith.constant 0 : index
    %399 = vector.load %arg14[%c0_182, %c0_183] : memref<128x128xbf16, #tpu.memory_space<vmem>>, vector<16x128xbf16>
    %400 = arith.extf %399 : vector<16x128xbf16> to vector<16x128xf32>
    %c128_184 = arith.constant 128 : index
    %c0_185 = arith.constant 0 : index
    %401 = vector.load %arg8[%c128_184, %c0_185] : memref<512x2xf32, #tpu.memory_space<vmem>>, vector<128x2xf32>
    %cst_186 = arith.constant dense<0.000000e+00> : vector<16x2xf32>
    %402 = tpu.matmul %400, %401, %cst_186 {dimension_numbers = #tpu.dot_dimension_numbers<[1], [0], [0], [1], [0, 0, 1, 1], [], []>} : vector<16x128xf32>, vector<128x2xf32>, vector<16x2xf32> -> vector<16x2xf32>
    %403 = arith.addf %398, %402 : vector<16x2xf32>
    %c112 = arith.constant 112 : index
    %c0_187 = arith.constant 0 : index
    %404 = vector.load %arg13[%c112, %c0_187] : memref<128x128xbf16, #tpu.memory_space<vmem>>, vector<16x128xbf16>
    %405 = arith.extf %404 : vector<16x128xbf16> to vector<16x128xf32>
    %c256 = arith.constant 256 : index
    %c0_188 = arith.constant 0 : index
    %406 = vector.load %arg8[%c256, %c0_188] : memref<512x2xf32, #tpu.memory_space<vmem>>, vector<128x2xf32>
    %cst_189 = arith.constant dense<0.000000e+00> : vector<16x2xf32>
    %407 = tpu.matmul %405, %406, %cst_189 {dimension_numbers = #tpu.dot_dimension_numbers<[1], [0], [0], [1], [0, 0, 1, 1], [], []>} : vector<16x128xf32>, vector<128x2xf32>, vector<16x2xf32> -> vector<16x2xf32>
    %408 = arith.addf %403, %407 : vector<16x2xf32>
    %c112_190 = arith.constant 112 : index
    %c0_191 = arith.constant 0 : index
    %409 = vector.load %arg14[%c112_190, %c0_191] : memref<128x128xbf16, #tpu.memory_space<vmem>>, vector<16x128xbf16>
    %410 = arith.extf %409 : vector<16x128xbf16> to vector<16x128xf32>
    %c384 = arith.constant 384 : index
    %c0_192 = arith.constant 0 : index
    %411 = vector.load %arg8[%c384, %c0_192] : memref<512x2xf32, #tpu.memory_space<vmem>>, vector<128x2xf32>
    %cst_193 = arith.constant dense<0.000000e+00> : vector<16x2xf32>
    %412 = tpu.matmul %410, %411, %cst_193 {dimension_numbers = #tpu.dot_dimension_numbers<[1], [0], [0], [1], [0, 0, 1, 1], [], []>} : vector<16x128xf32>, vector<128x2xf32>, vector<16x2xf32> -> vector<16x2xf32>
    %413 = arith.addf %408, %412 : vector<16x2xf32>
    %c0_194 = arith.constant 0 : index
    %c0_195 = arith.constant 0 : index
    %414 = vector.load %arg9[%c0_194, %c0_195] : memref<1x2xf32, #tpu.memory_space<vmem>>, vector<1x2xf32>
    %415 = vector.broadcast %414 : vector<1x2xf32> to vector<16x2xf32>
    %416 = arith.addf %413, %415 : vector<16x2xf32>
    %c0_196 = arith.constant 0 : index
    %c0_197 = arith.constant 0 : index
    %c0_198 = arith.constant 0 : index
    %417 = vector.load %arg10[%c0_196, %c0_197, %c0_198] : memref<1x16x2xf32, #tpu.memory_space<vmem>>, vector<1x16x2xf32>
    %418 = vector.shape_cast %417 : vector<1x16x2xf32> to vector<16x2xf32>
    %419 = vector.shape_cast %416 : vector<16x2xf32> to vector<1x16x2xf32>
    tpu.vector_store %arg10[%c0_196, %c0_197, %c0_198], %419 {strides = array<i32>} : memref<1x16x2xf32, #tpu.memory_space<vmem>>, vector<1x16x2xf32>,
    return
  }
  func.func @transform_0(%arg0: i32) -> (i32, i32, i32) {
    %c0_i32 = arith.constant 0 : i32
    %c0_i32_0 = arith.constant 0 : i32
    %c0_i32_1 = arith.constant 0 : i32
    return %arg0, %c0_i32, %c0_i32_0 : i32, i32, i32
  }
  func.func @transform_1(%arg0: i32) -> (i32, i32) {
    %c0_i32 = arith.constant 0 : i32
    %c0_i32_0 = arith.constant 0 : i32
    %c0_i32_1 = arith.constant 0 : i32
    return %c0_i32, %c0_i32_0 : i32, i32
  }
  func.func @transform_2(%arg0: i32) -> (i32, i32) {
    %c0_i32 = arith.constant 0 : i32
    %c0_i32_0 = arith.constant 0 : i32
    %c0_i32_1 = arith.constant 0 : i32
    return %c0_i32, %c0_i32_0 : i32, i32
  }
  func.func @transform_3(%arg0: i32) -> (i32, i32) {
    %c0_i32 = arith.constant 0 : i32
    %c0_i32_0 = arith.constant 0 : i32
    %c0_i32_1 = arith.constant 0 : i32
    return %c0_i32, %c0_i32_0 : i32, i32
  }
  func.func @transform_4(%arg0: i32) -> (i32, i32, i32) {
    %c0_i32 = arith.constant 0 : i32
    %c0_i32_0 = arith.constant 0 : i32
    %c0_i32_1 = arith.constant 0 : i32
    %c0_i32_2 = arith.constant 0 : i32
    return %c0_i32, %c0_i32_0, %c0_i32_1 : i32, i32, i32
  }
  func.func @transform_5(%arg0: i32) -> (i32, i32, i32) {
    %c0_i32 = arith.constant 0 : i32
    %c0_i32_0 = arith.constant 0 : i32
    %c0_i32_1 = arith.constant 0 : i32
    %c0_i32_2 = arith.constant 0 : i32
    return %c0_i32, %c0_i32_0, %c0_i32_1 : i32, i32, i32
  }
  func.func @transform_6(%arg0: i32) -> (i32, i32, i32) {
    %c0_i32 = arith.constant 0 : i32
    %c0_i32_0 = arith.constant 0 : i32
    %c0_i32_1 = arith.constant 0 : i32
    %c0_i32_2 = arith.constant 0 : i32
    return %c0_i32, %c0_i32_0, %c0_i32_1 : i32, i32, i32
  }
  func.func @transform_7(%arg0: i32) -> (i32, i32) {
    %c0_i32 = arith.constant 0 : i32
    %c0_i32_0 = arith.constant 0 : i32
    %c0_i32_1 = arith.constant 0 : i32
    return %c0_i32, %c0_i32_0 : i32, i32
  }
  func.func @transform_8(%arg0: i32) -> (i32, i32) {
    %c0_i32 = arith.constant 0 : i32
    %c0_i32_0 = arith.constant 0 : i32
    %c0_i32_1 = arith.constant 0 : i32
    return %c0_i32, %c0_i32_0 : i32, i32
  }
  func.func @transform_9(%arg0: i32) -> (i32, i32, i32) {
    %c0_i32 = arith.constant 0 : i32
    %c0_i32_0 = arith.constant 0 : i32
    %c0_i32_1 = arith.constant 0 : i32
    return %arg0, %c0_i32, %c0_i32_0 : i32, i32, i32
  }
}

</mosaic_0001>

<llo_original>
// kernel: tpu_custom_call.1
$region0: #{tpu_custom_call.1}
  #allocation0 [shape = 'u32[]', space=smem, size = 0x4, offset = 0x4, fixed_abs, tag = 'smem constant byte address 0x4 - core index']
  #allocation1 [shape = 'u32[72,128]{1,0:T(1,128)}', space=vmem, size = 0x9000, scoped, tag = 'internal scratch']
  #allocation2 [shape = 'bf16[128,128]{1,0:T(8,128)(2,1)}', space=vmem, size = 0x8000, scoped, tag = 'scratch operand']
  #allocation3 [shape = 'bf16[128,256]{1,0:T(8,128)(2,1)}', space=vmem, size = 0x10000, scoped, tag = 'scratch operand']
  #allocation4 [shape = 'bf16[128,128]{1,0:T(8,128)(2,1)}', space=vmem, size = 0x8000, scoped, tag = 'scratch operand']
  #allocation5 [shape = 'bf16[128,128]{1,0:T(8,128)(2,1)}', space=vmem, size = 0x8000, scoped, tag = 'scratch operand']
  %s0 = inlined_call_operand.vmem [shape: bf16[1,128,128], index: 0, kind: input, shape index: {}]
  %s1 = inlined_call_operand.vmem [shape: bf16[128,128], index: 1, kind: input, shape index: {}]
  %s2 = inlined_call_operand.vmem [shape: f32[1,128], index: 2, kind: input, shape index: {}]
  %s3 = inlined_call_operand.vmem [shape: bf16[128,256], index: 3, kind: input, shape index: {}]
  %s4 = inlined_call_operand.vmem [shape: bf16[1,256,256], index: 4, kind: input, shape index: {}]
  %s5 = inlined_call_operand.hbm [shape: f32[2,256,256], index: 5, kind: input, shape index: {}]
  %s6 = inlined_call_operand.vmem [shape: f32[2,1,256], index: 6, kind: input, shape index: {}]
  %s7 = inlined_call_operand.vmem [shape: f32[512,2], index: 7, kind: input, shape index: {}]
  %s8 = inlined_call_operand.vmem [shape: f32[1,2], index: 8, kind: input, shape index: {}]
  %s9 = inlined_call_operand.vmem [shape: f32[1,16,2], index: 9, kind: output, shape index: {}]
  %s10 = sld [smem:[#allocation0]]
  $region50: #{tpu_custom_call.1} parent=0
    _
  %s12 = ssub.s32 1, %s10
  %s13 = scalar_select 0, %s12, %s10
  $region1: #{tpu_custom_call.1} parent=0
    #allocation6 [shape = 'u8[524288]{0}', space=vmem, size = 0x80000, scoped, tag = 'input window, operand 5, single buffered']
    #allocation7 [shape = 's32[1]{0}', space=sflag, size = 0x4, scoped, tag = 'scoped memory for tpu_custom_call.1']
    %14 = vsyncpa [#allocation7], 0
    // Predicated region
    $region2: #{tpu_custom_call.1} parent=1 // pred_check
      _
    $region3: #{tpu_custom_call.1} parent=1 // pred_check_branch
      %16 = sbr.rel (0) target = $region5
    $region4: #{tpu_custom_call.1} parent=1 // pred_region
      _
    $region5: #{tpu_custom_call.1} parent=1 // pred_fallthru
      _
    // Predicated region
    $region6: #{tpu_custom_call.1} parent=1 // pred_check
      _
    $region7: #{tpu_custom_call.1} parent=1 // pred_check_branch
      %18 = sbr.rel (0) target = $region9
    $region8: #{tpu_custom_call.1} parent=1 // pred_region
      _
    $region9: #{tpu_custom_call.1} parent=1 // pred_fallthru
      _
    // Predicated region
    $region10: #{tpu_custom_call.1} parent=1 // pred_check
      _
    $region11: #{tpu_custom_call.1} parent=1 // pred_check_branch
      %20 = sbr.rel (0) target = $region13
    $region12: #{tpu_custom_call.1} parent=1 // pred_region
      _
    $region13: #{tpu_custom_call.1} parent=1 // pred_fallthru
      _
    // Predicated region
    $region14: #{tpu_custom_call.1} parent=1 // pred_check
      _
    $region15: #{tpu_custom_call.1} parent=1 // pred_check_branch
      %22 = sbr.rel (0) target = $region17
    $region16: #{tpu_custom_call.1} parent=1 // pred_region
      _
    $region17: #{tpu_custom_call.1} parent=1 // pred_fallthru
      _
    // Predicated region
    $region18: #{tpu_custom_call.1} parent=1 // pred_check
      _
    $region19: #{tpu_custom_call.1} parent=1 // pred_check_branch
      %24 = sbr.rel (0) target = $region21
    $region20: #{tpu_custom_call.1} parent=1 // pred_region
      _
    $region21: #{tpu_custom_call.1} parent=1 // pred_fallthru
      _
    // Predicated region
    $region22: #{tpu_custom_call.1} parent=1 // pred_check
      _
    $region23: #{tpu_custom_call.1} parent=1 // pred_check_branch
      %26 = sbr.rel (0) target = $region25
    $region24: #{tpu_custom_call.1} parent=1 // pred_region
      %28 = vsyncadd [#allocation7], 0
      %s29 = sshll.u32 %s5, 4
      %s30 = int_to_ptr.hbm [resolvable:$true] %s29
      %s31 = sshll.u32 [#allocation6], 4
      %s32 = int_to_ptr.vmem [resolvable:$true] %s31
      %37 = dma.hbm_to_vmem [thread:$0]  %s30, 16384, %s32, [#allocation7], 256, 256, 16
    $region25: #{tpu_custom_call.1} parent=1 // pred_fallthru
      _
    // Predicated region
    $region26: #{tpu_custom_call.1} parent=1 // pred_check
      _
    $region27: #{tpu_custom_call.1} parent=1 // pred_check_branch
      %39 = sbr.rel (0) target = $region29
    $region28: #{tpu_custom_call.1} parent=1 // pred_region
      _
    $region29: #{tpu_custom_call.1} parent=1 // pred_fallthru
      _
    // Predicated region
    $region30: #{tpu_custom_call.1} parent=1 // pred_check
      _
    $region31: #{tpu_custom_call.1} parent=1 // pred_check_branch
      %41 = sbr.rel (0) target = $region33
    $region32: #{tpu_custom_call.1} parent=1 // pred_region
      _
    $region33: #{tpu_custom_call.1} parent=1 // pred_fallthru
      _
    // Predicated region
    $region34: #{tpu_custom_call.1} parent=1 // pred_check
      _
    $region35: #{tpu_custom_call.1} parent=1 // pred_check_branch
      %43 = sbr.rel (0) target = $region37
    $region36: #{tpu_custom_call.1} parent=1 // pred_region
      _
    $region37: #{tpu_custom_call.1} parent=1 // pred_fallthru
      _
    // Predicated region
    $region38: #{tpu_custom_call.1} parent=1 // pred_check
      _
    $region39: #{tpu_custom_call.1} parent=1 // pred_check_branch
      %45 = sbr.rel (0) target = $region41
    $region40: #{tpu_custom_call.1} parent=1 // pred_region
      %47 = dma.done [#allocation7], 16384
    $region41: #{tpu_custom_call.1} parent=1 // pred_fallthru
      _
    %v48 = vld [vmem:[%s0] sm:$0xf]
    %v49 = vld [vmem:[%s0 + $0x4] sm:$0xf]
    %v50 = vld [vmem:[%s0 + $0x8] sm:$0xf]
    %v51 = vld [vmem:[%s0 + $0xc] sm:$0xf]
    %v52 = vld [vmem:[%s0 + $0x10] sm:$0xf]
    %v53 = vld [vmem:[%s0 + $0x14] sm:$0xf]
    %v54 = vld [vmem:[%s0 + $0x18] sm:$0xf]
    %v55 = vld [vmem:[%s0 + $0x1c] sm:$0xf]
    %v56 = vld [vmem:[%s0 + $0x20] sm:$0xf]
    %v57 = vld [vmem:[%s0 + $0x24] sm:$0xf]
    %v58 = vld [vmem:[%s0 + $0x28] sm:$0xf]
    %v59 = vld [vmem:[%s0 + $0x2c] sm:$0xf]
    %v60 = vld [vmem:[%s0 + $0x30] sm:$0xf]
    %v61 = vld [vmem:[%s0 + $0x34] sm:$0xf]
    %v62 = vld [vmem:[%s0 + $0x38] sm:$0xf]
    %v63 = vld [vmem:[%s0 + $0x3c] sm:$0xf]
    %v64 = vld [vmem:[%s1] sm:$0xf]
    %v65 = vld [vmem:[%s1 + $0x4] sm:$0xf]
    %v66 = vld [vmem:[%s1 + $0x8] sm:$0xf]
    %v67 = vld [vmem:[%s1 + $0xc] sm:$0xf]
    %v68 = vld [vmem:[%s1 + $0x10] sm:$0xf]
    %v69 = vld [vmem:[%s1 + $0x14] sm:$0xf]
    %v70 = vld [vmem:[%s1 + $0x18] sm:$0xf]
    %v71 = vld [vmem:[%s1 + $0x1c] sm:$0xf]
    %v72 = vld [vmem:[%s1 + $0x20] sm:$0xf]
    %v73 = vld [vmem:[%s1 + $0x24] sm:$0xf]
    %v74 = vld [vmem:[%s1 + $0x28] sm:$0xf]
    %v75 = vld [vmem:[%s1 + $0x2c] sm:$0xf]
    %v76 = vld [vmem:[%s1 + $0x30] sm:$0xf]
    %v77 = vld [vmem:[%s1 + $0x34] sm:$0xf]
    %v78 = vld [vmem:[%s1 + $0x38] sm:$0xf]
    %v79 = vld [vmem:[%s1 + $0x3c] sm:$0xf]
    %v80 = vld [vmem:[%s2] sm:$0x1]
    %v82 = vperm.slane %v80, 0
    %v100 = vunpack.c.l.b16 %v48
    %v101 = vunpack.c.l.b16 %v49
    %v102 = vunpack.c.l.b16 %v50
    %v103 = vunpack.c.l.b16 %v51
    %v104 = vunpack.c.l.b16 %v52
    %v105 = vunpack.c.l.b16 %v53
    %v106 = vunpack.c.l.b16 %v54
    %v107 = vunpack.c.l.b16 %v55
    %v108 = vunpack.c.l.b16 %v56
    %v109 = vunpack.c.l.b16 %v57
    %v110 = vunpack.c.l.b16 %v58
    %v111 = vunpack.c.l.b16 %v59
    %v112 = vunpack.c.l.b16 %v60
    %v113 = vunpack.c.l.b16 %v61
    %v114 = vunpack.c.l.b16 %v62
    %v115 = vunpack.c.l.b16 %v63
    %v116 = vpack.c.b16 %v101, %v100
    %v117 = vpack.c.b16 %v103, %v102
    %v118 = vpack.c.b16 %v105, %v104
    %v119 = vpack.c.b16 %v107, %v106
    %v120 = vpack.c.b16 %v109, %v108
    %v121 = vpack.c.b16 %v111, %v110
    %v122 = vpack.c.b16 %v113, %v112
    %v123 = vpack.c.b16 %v115, %v114
    %v148 = vunpack.c.l.b16 %v64
    %v149 = vunpack.c.l.b16 %v65
    %v150 = vunpack.c.l.b16 %v66
    %v151 = vunpack.c.l.b16 %v67
    %v152 = vunpack.c.l.b16 %v68
    %v153 = vunpack.c.l.b16 %v69
    %v154 = vunpack.c.l.b16 %v70
    %v155 = vunpack.c.l.b16 %v71
    %v156 = vunpack.c.l.b16 %v72
    %v157 = vunpack.c.l.b16 %v73
    %v158 = vunpack.c.l.b16 %v74
    %v159 = vunpack.c.l.b16 %v75
    %v160 = vunpack.c.l.b16 %v76
    %v161 = vunpack.c.l.b16 %v77
    %v162 = vunpack.c.l.b16 %v78
    %v163 = vunpack.c.l.b16 %v79
    %v164 = vpack.c.b16 %v149, %v148
    %v165 = vpack.c.b16 %v151, %v150
    %v166 = vpack.c.b16 %v153, %v152
    %v167 = vpack.c.b16 %v155, %v154
    %v168 = vpack.c.b16 %v157, %v156
    %v169 = vpack.c.b16 %v159, %v158
    %v170 = vpack.c.b16 %v161, %v160
    %v171 = vpack.c.b16 %v163, %v162
    %180 = vmatpush.bf16.msra.mxu0 %v171
    %181 = vmatpush.bf16.msra.mxu0 %v170
    %182 = vmatpush.bf16.msra.mxu0 %v169
    %183 = vmatpush.bf16.msra.mxu0 %v168
    %184 = vmatpush.bf16.msra.mxu0 %v167
    %185 = vmatpush.bf16.msra.mxu0 %v166
    %186 = vmatpush.bf16.msra.mxu0 %v165
    %187 = vmatpush.bf16.msra.mxu0 %v164
    %188 = vmatmul.bf16.gmra.mxu0 %v116
    %v189 = vpop.f32.mrf.mxu0
    %v190 = vadd.f32 %v82, %v189
    %v191 = vpop.f32.mrf.mxu0
    %v192 = vadd.f32 %v82, %v191
    %193 = vmatmul.bf16.gmra.mxu0 %v117
    %v194 = vpop.f32.mrf.mxu0
    %v195 = vadd.f32 %v82, %v194
    %v196 = vpop.f32.mrf.mxu0
    %v197 = vadd.f32 %v82, %v196
    %198 = vmatmul.bf16.gmra.mxu0 %v118
    %v199 = vpop.f32.mrf.mxu0
    %v200 = vadd.f32 %v82, %v199
    %v201 = vpop.f32.mrf.mxu0
    %v202 = vadd.f32 %v82, %v201
    %203 = vmatmul.bf16.gmra.mxu0 %v119
    %v204 = vpop.f32.mrf.mxu0
    %v205 = vadd.f32 %v82, %v204
    %v206 = vpop.f32.mrf.mxu0
    %v207 = vadd.f32 %v82, %v206
    %208 = vmatmul.bf16.gmra.mxu0 %v120
    %v209 = vpop.f32.mrf.mxu0
    %v210 = vadd.f32 %v82, %v209
    %v211 = vpop.f32.mrf.mxu0
    %v212 = vadd.f32 %v82, %v211
    %213 = vmatmul.bf16.gmra.mxu0 %v121
    %v214 = vpop.f32.mrf.mxu0
    %v215 = vadd.f32 %v82, %v214
    %v216 = vpop.f32.mrf.mxu0
    %v217 = vadd.f32 %v82, %v216
    %218 = vmatmul.bf16.gmra.mxu0 %v122
    %v219 = vpop.f32.mrf.mxu0
    %v220 = vadd.f32 %v82, %v219
    %v221 = vpop.f32.mrf.mxu0
    %v222 = vadd.f32 %v82, %v221
    %223 = vmatmul.bf16.gmra.mxu0 %v123
    %v224 = vpop.f32.mrf.mxu0
    %v225 = vadd.f32 %v82, %v224
    %v226 = vpop.f32.mrf.mxu0
    %v227 = vadd.f32 %v82, %v226
    %228 = vdwg.mxu0
    %v229 = vtanh.pop %v190
    %v230 = vtanh.pop %v192
    %v231 = vtanh.pop %v195
    %v232 = vtanh.pop %v197
    %v233 = vtanh.pop %v200
    %v234 = vtanh.pop %v202
    %v235 = vtanh.pop %v205
    %v236 = vtanh.pop %v207
    %v237 = vtanh.pop %v210
    %v238 = vtanh.pop %v212
    %v239 = vtanh.pop %v215
    %v240 = vtanh.pop %v217
    %v241 = vtanh.pop %v220
    %v242 = vtanh.pop %v222
    %v243 = vtanh.pop %v225
    %v244 = vtanh.pop %v227
    %v245 = vpack.c.bf16 %v229, %v229
    %v246 = vpack.c.bf16 %v230, %v230
    %v247 = vpack.c.bf16 %v231, %v231
    %v248 = vpack.c.bf16 %v232, %v232
    %v249 = vpack.c.bf16 %v233, %v233
    %v250 = vpack.c.bf16 %v234, %v234
    %v251 = vpack.c.bf16 %v235, %v235
    %v252 = vpack.c.bf16 %v236, %v236
    %v253 = vpack.c.bf16 %v237, %v237
    %v254 = vpack.c.bf16 %v238, %v238
    %v255 = vpack.c.bf16 %v239, %v239
    %v256 = vpack.c.bf16 %v240, %v240
    %v257 = vpack.c.bf16 %v241, %v241
    %v258 = vpack.c.bf16 %v242, %v242
    %v259 = vpack.c.bf16 %v243, %v243
    %v260 = vpack.c.bf16 %v244, %v244
    %261 = vst [vmem:[#allocation2] sm:$0xf] %v245
    %262 = vst [vmem:[#allocation2 + $0x4] sm:$0xf] %v246
    %263 = vst [vmem:[#allocation2 + $0x8] sm:$0xf] %v247
    %264 = vst [vmem:[#allocation2 + $0xc] sm:$0xf] %v248
    %265 = vst [vmem:[#allocation2 + $0x10] sm:$0xf] %v249
    %266 = vst [vmem:[#allocation2 + $0x14] sm:$0xf] %v250
    %267 = vst [vmem:[#allocation2 + $0x18] sm:$0xf] %v251
    %268 = vst [vmem:[#allocation2 + $0x1c] sm:$0xf] %v252
    %269 = vst [vmem:[#allocation2 + $0x20] sm:$0xf] %v253
    %270 = vst [vmem:[#allocation2 + $0x24] sm:$0xf] %v254
    %271 = vst [vmem:[#allocation2 + $0x28] sm:$0xf] %v255
    %272 = vst [vmem:[#allocation2 + $0x2c] sm:$0xf] %v256
    %273 = vst [vmem:[#allocation2 + $0x30] sm:$0xf] %v257
    %274 = vst [vmem:[#allocation2 + $0x34] sm:$0xf] %v258
    %275 = vst [vmem:[#allocation2 + $0x38] sm:$0xf] %v259
    %276 = vst [vmem:[#allocation2 + $0x3c] sm:$0xf] %v260
    %v277 = vlaneseq
    %v278 = vand.u32 %v277, 127
    %v279 = vadd.s32 %v278, 128
    %vm280 = vcmp.lt.s32.totalorder %v278, 128
    %vm281 = vcmp.lt.s32.totalorder %v279, 128
    %v282 = vld [vmem:[#allocation2] sm:$0xf]
    %v283 = vld [vmem:[#allocation2 + $0x4] sm:$0xf]
    %v284 = vld [vmem:[#allocation2 + $0x8] sm:$0xf]
    %v285 = vld [vmem:[#allocation2 + $0xc] sm:$0xf]
    %v286 = vld [vmem:[#allocation2 + $0x10] sm:$0xf]
    %v287 = vld [vmem:[#allocation2 + $0x14] sm:$0xf]
    %v288 = vld [vmem:[#allocation2 + $0x18] sm:$0xf]
    %v289 = vld [vmem:[#allocation2 + $0x1c] sm:$0xf]
    %v290 = vld [vmem:[#allocation2 + $0x20] sm:$0xf]
    %v291 = vld [vmem:[#allocation2 + $0x24] sm:$0xf]
    %v292 = vld [vmem:[#allocation2 + $0x28] sm:$0xf]
    %v293 = vld [vmem:[#allocation2 + $0x2c] sm:$0xf]
    %v294 = vld [vmem:[#allocation2 + $0x30] sm:$0xf]
    %v295 = vld [vmem:[#allocation2 + $0x34] sm:$0xf]
    %v296 = vld [vmem:[#allocation2 + $0x38] sm:$0xf]
    %v297 = vld [vmem:[#allocation2 + $0x3c] sm:$0xf]
    %v298 = vld [vmem:[%s3] sm:$0xff]
    %v299 = vld [vmem:[%s3 + $0x8] sm:$0xff]
    %v300 = vld [vmem:[%s3 + $0x10] sm:$0xff]
    %v301 = vld [vmem:[%s3 + $0x18] sm:$0xff]
    %v302 = vld [vmem:[%s3 + $0x20] sm:$0xff]
    %v303 = vld [vmem:[%s3 + $0x28] sm:$0xff]
    %v304 = vld [vmem:[%s3 + $0x30] sm:$0xff]
    %v305 = vld [vmem:[%s3 + $0x38] sm:$0xff]
    %v306 = vld [vmem:[%s3 + $0x40] sm:$0xff]
    %v307 = vld [vmem:[%s3 + $0x48] sm:$0xff]
    %v308 = vld [vmem:[%s3 + $0x50] sm:$0xff]
    %v309 = vld [vmem:[%s3 + $0x58] sm:$0xff]
    %v310 = vld [vmem:[%s3 + $0x60] sm:$0xff]
    %v311 = vld [vmem:[%s3 + $0x68] sm:$0xff]
    %v312 = vld [vmem:[%s3 + $0x70] sm:$0xff]
    %v313 = vld [vmem:[%s3 + $0x78] sm:$0xff]
    %v314 = vld [vmem:[%s6] sm:$0x3]
    %v316 = vperm.slane %v314, 0
    %v317 = vperm.slane %v314, 1
    %v336 = vunpack.c.l.b16 %v282
    %v337 = vunpack.c.l.b16 %v283
    %v338 = vunpack.c.l.b16 %v284
    %v339 = vunpack.c.l.b16 %v285
    %v340 = vunpack.c.l.b16 %v286
    %v341 = vunpack.c.l.b16 %v287
    %v342 = vunpack.c.l.b16 %v288
    %v343 = vunpack.c.l.b16 %v289
    %v344 = vunpack.c.l.b16 %v290
    %v345 = vunpack.c.l.b16 %v291
    %v346 = vunpack.c.l.b16 %v292
    %v347 = vunpack.c.l.b16 %v293
    %v348 = vunpack.c.l.b16 %v294
    %v349 = vunpack.c.l.b16 %v295
    %v350 = vunpack.c.l.b16 %v296
    %v351 = vunpack.c.l.b16 %v297
    %v352 = vpack.c.b16 %v337, %v336
    %v353 = vpack.c.b16 %v339, %v338
    %v354 = vpack.c.b16 %v341, %v340
    %v355 = vpack.c.b16 %v343, %v342
    %v356 = vpack.c.b16 %v345, %v344
    %v357 = vpack.c.b16 %v347, %v346
    %v358 = vpack.c.b16 %v349, %v348
    %v359 = vpack.c.b16 %v351, %v350
    %v384 = vunpack.c.l.b16 %v298
    %v385 = vunpack.c.h.b16 %v298
    %v386 = vunpack.c.l.b16 %v299
    %v387 = vunpack.c.h.b16 %v299
    %v388 = vunpack.c.l.b16 %v300
    %v389 = vunpack.c.h.b16 %v300
    %v390 = vunpack.c.l.b16 %v301
    %v391 = vunpack.c.h.b16 %v301
    %v392 = vunpack.c.l.b16 %v302
    %v393 = vunpack.c.h.b16 %v302
    %v394 = vunpack.c.l.b16 %v303
    %v395 = vunpack.c.h.b16 %v303
    %v396 = vunpack.c.l.b16 %v304
    %v397 = vunpack.c.h.b16 %v304
    %v398 = vunpack.c.l.b16 %v305
    %v399 = vunpack.c.h.b16 %v305
    %v400 = vunpack.c.l.b16 %v306
    %v401 = vunpack.c.h.b16 %v306
    %v402 = vunpack.c.l.b16 %v307
    %v403 = vunpack.c.h.b16 %v307
    %v404 = vunpack.c.l.b16 %v308
    %v405 = vunpack.c.h.b16 %v308
    %v406 = vunpack.c.l.b16 %v309
    %v407 = vunpack.c.h.b16 %v309
    %v408 = vunpack.c.l.b16 %v310
    %v409 = vunpack.c.h.b16 %v310
    %v410 = vunpack.c.l.b16 %v311
    %v411 = vunpack.c.h.b16 %v311
    %v412 = vunpack.c.l.b16 %v312
    %v413 = vunpack.c.h.b16 %v312
    %v414 = vunpack.c.l.b16 %v313
    %v415 = vunpack.c.h.b16 %v313
    %v416 = vpack.c.b16 %v386, %v384
    %v417 = vpack.c.b16 %v387, %v385
    %v418 = vpack.c.b16 %v390, %v388
    %v419 = vpack.c.b16 %v391, %v389
    %v420 = vpack.c.b16 %v394, %v392
    %v421 = vpack.c.b16 %v395, %v393
    %v422 = vpack.c.b16 %v398, %v396
    %v423 = vpack.c.b16 %v399, %v397
    %v424 = vpack.c.b16 %v402, %v400
    %v425 = vpack.c.b16 %v403, %v401
    %v426 = vpack.c.b16 %v406, %v404
    %v427 = vpack.c.b16 %v407, %v405
    %v428 = vpack.c.b16 %v410, %v408
    %v429 = vpack.c.b16 %v411, %v409
    %v430 = vpack.c.b16 %v414, %v412
    %v431 = vpack.c.b16 %v415, %v413
    %448 = vmatpush.bf16.msra.mxu0 %v430
    %449 = vmatpush.bf16.msra.mxu0 %v428
    %450 = vmatpush.bf16.msra.mxu0 %v426
    %451 = vmatpush.bf16.msra.mxu0 %v424
    %452 = vmatpush.bf16.msra.mxu0 %v422
    %453 = vmatpush.bf16.msra.mxu0 %v420
    %454 = vmatpush.bf16.msra.mxu0 %v418
    %455 = vmatpush.bf16.msra.mxu0 %v416
    %456 = vmatmul.bf16.gmra.mxu0 %v352
    %v457 = vpop.f32.mrf.mxu0
    %v458 = vadd.f32 %v316, %v457
    %v459 = vpop.f32.mrf.mxu0
    %v460 = vadd.f32 %v316, %v459
    %461 = vmatmul.bf16.gmra.mxu0 %v353
    %v462 = vpop.f32.mrf.mxu0
    %v463 = vadd.f32 %v316, %v462
    %v464 = vpop.f32.mrf.mxu0
    %v465 = vadd.f32 %v316, %v464
    %466 = vmatmul.bf16.gmra.mxu0 %v354
    %v467 = vpop.f32.mrf.mxu0
    %v468 = vadd.f32 %v316, %v467
    %v469 = vpop.f32.mrf.mxu0
    %v470 = vadd.f32 %v316, %v469
    %471 = vmatmul.bf16.gmra.mxu0 %v355
    %v472 = vpop.f32.mrf.mxu0
    %v473 = vadd.f32 %v316, %v472
    %v474 = vpop.f32.mrf.mxu0
    %v475 = vadd.f32 %v316, %v474
    %476 = vmatmul.bf16.gmra.mxu0 %v356
    %v477 = vpop.f32.mrf.mxu0
    %v478 = vadd.f32 %v316, %v477
    %v479 = vpop.f32.mrf.mxu0
    %v480 = vadd.f32 %v316, %v479
    %481 = vmatmul.bf16.gmra.mxu0 %v357
    %v482 = vpop.f32.mrf.mxu0
    %v483 = vadd.f32 %v316, %v482
    %v484 = vpop.f32.mrf.mxu0
    %v485 = vadd.f32 %v316, %v484
    %486 = vmatmul.bf16.gmra.mxu0 %v358
    %v487 = vpop.f32.mrf.mxu0
    %v488 = vadd.f32 %v316, %v487
    %v489 = vpop.f32.mrf.mxu0
    %v490 = vadd.f32 %v316, %v489
    %491 = vmatmul.bf16.gmra.mxu0 %v359
    %v492 = vpop.f32.mrf.mxu0
    %v493 = vadd.f32 %v316, %v492
    %v494 = vpop.f32.mrf.mxu0
    %v495 = vadd.f32 %v316, %v494
    %496 = vdwg.mxu0
    %497 = vmatpush.bf16.msra.mxu0 %v431
    %498 = vmatpush.bf16.msra.mxu0 %v429
    %499 = vmatpush.bf16.msra.mxu0 %v427
    %500 = vmatpush.bf16.msra.mxu0 %v425
    %501 = vmatpush.bf16.msra.mxu0 %v423
    %502 = vmatpush.bf16.msra.mxu0 %v421
    %503 = vmatpush.bf16.msra.mxu0 %v419
    %504 = vmatpush.bf16.msra.mxu0 %v417
    %505 = vmatmul.bf16.gmra.mxu0 %v352
    %v506 = vpop.f32.mrf.mxu0
    %v507 = vadd.f32 %v317, %v506
    %v508 = vpop.f32.mrf.mxu0
    %v509 = vadd.f32 %v317, %v508
    %510 = vmatmul.bf16.gmra.mxu0 %v353
    %v511 = vpop.f32.mrf.mxu0
    %v512 = vadd.f32 %v317, %v511
    %v513 = vpop.f32.mrf.mxu0
    %v514 = vadd.f32 %v317, %v513
    %515 = vmatmul.bf16.gmra.mxu0 %v354
    %v516 = vpop.f32.mrf.mxu0
    %v517 = vadd.f32 %v317, %v516
    %v518 = vpop.f32.mrf.mxu0
    %v519 = vadd.f32 %v317, %v518
    %520 = vmatmul.bf16.gmra.mxu0 %v355
    %v521 = vpop.f32.mrf.mxu0
    %v522 = vadd.f32 %v317, %v521
    %v523 = vpop.f32.mrf.mxu0
    %v524 = vadd.f32 %v317, %v523
    %525 = vmatmul.bf16.gmra.mxu0 %v356
    %v526 = vpop.f32.mrf.mxu0
    %v527 = vadd.f32 %v317, %v526
    %v528 = vpop.f32.mrf.mxu0
    %v529 = vadd.f32 %v317, %v528
    %530 = vmatmul.bf16.gmra.mxu0 %v357
    %v531 = vpop.f32.mrf.mxu0
    %v532 = vadd.f32 %v317, %v531
    %v533 = vpop.f32.mrf.mxu0
    %v534 = vadd.f32 %v317, %v533
    %535 = vmatmul.bf16.gmra.mxu0 %v358
    %v536 = vpop.f32.mrf.mxu0
    %v537 = vadd.f32 %v317, %v536
    %v538 = vpop.f32.mrf.mxu0
    %v539 = vadd.f32 %v317, %v538
    %540 = vmatmul.bf16.gmra.mxu0 %v359
    %v541 = vpop.f32.mrf.mxu0
    %v542 = vadd.f32 %v317, %v541
    %v543 = vpop.f32.mrf.mxu0
    %v544 = vadd.f32 %v317, %v543
    %545 = vdwg.mxu0
    %v546 = vpack.c.bf16 %v507, %v458
    %v547 = vpack.c.bf16 %v509, %v460
    %v548 = vpack.c.bf16 %v512, %v463
    %v549 = vpack.c.bf16 %v514, %v465
    %v550 = vpack.c.bf16 %v517, %v468
    %v551 = vpack.c.bf16 %v519, %v470
    %v552 = vpack.c.bf16 %v522, %v473
    %v553 = vpack.c.bf16 %v524, %v475
    %v554 = vpack.c.bf16 %v527, %v478
    %v555 = vpack.c.bf16 %v529, %v480
    %v556 = vpack.c.bf16 %v532, %v483
    %v557 = vpack.c.bf16 %v534, %v485
    %v558 = vpack.c.bf16 %v537, %v488
    %v559 = vpack.c.bf16 %v539, %v490
    %v560 = vpack.c.bf16 %v542, %v493
    %v561 = vpack.c.bf16 %v544, %v495
    %562 = vst [vmem:[#allocation3] sm:$0xff] %v546
    %563 = vst [vmem:[#allocation3 + $0x8] sm:$0xff] %v547
    %564 = vst [vmem:[#allocation3 + $0x10] sm:$0xff] %v548
    %565 = vst [vmem:[#allocation3 + $0x18] sm:$0xff] %v549
    %566 = vst [vmem:[#allocation3 + $0x20] sm:$0xff] %v550
    %567 = vst [vmem:[#allocation3 + $0x28] sm:$0xff] %v551
    %568 = vst [vmem:[#allocation3 + $0x30] sm:$0xff] %v552
    %569 = vst [vmem:[#allocation3 + $0x38] sm:$0xff] %v553
    %570 = vst [vmem:[#allocation3 + $0x40] sm:$0xff] %v554
    %571 = vst [vmem:[#allocation3 + $0x48] sm:$0xff] %v555
    %572 = vst [vmem:[#allocation3 + $0x50] sm:$0xff] %v556
    %573 = vst [vmem:[#allocation3 + $0x58] sm:$0xff] %v557
    %574 = vst [vmem:[#allocation3 + $0x60] sm:$0xff] %v558
    %575 = vst [vmem:[#allocation3 + $0x68] sm:$0xff] %v559
    %576 = vst [vmem:[#allocation3 + $0x70] sm:$0xff] %v560
    %577 = vst [vmem:[#allocation3 + $0x78] sm:$0xff] %v561
    %v578 = vld [vmem:[#allocation6] sm:$0xff]
    %v579 = vld [vmem:[#allocation6 + $0x8] sm:$0xff]
    %v580 = vld [vmem:[#allocation6 + $0x10] sm:$0xff]
    %v581 = vld [vmem:[#allocation6 + $0x18] sm:$0xff]
    %v582 = vld [vmem:[#allocation6 + $0x20] sm:$0xff]
    %v583 = vld [vmem:[#allocation6 + $0x28] sm:$0xff]
    %v584 = vld [vmem:[#allocation6 + $0x30] sm:$0xff]
    %v585 = vld [vmem:[#allocation6 + $0x38] sm:$0xff]
    %v586 = vld [vmem:[#allocation6 + $0x40] sm:$0xff]
    %v587 = vld [vmem:[#allocation6 + $0x48] sm:$0xff]
    %v588 = vld [vmem:[#allocation6 + $0x50] sm:$0xff]
    %v589 = vld [vmem:[#allocation6 + $0x58] sm:$0xff]
    %v590 = vld [vmem:[#allocation6 + $0x60] sm:$0xff]
    %v591 = vld [vmem:[#allocation6 + $0x68] sm:$0xff]
    %v592 = vld [vmem:[#allocation6 + $0x70] sm:$0xff]
    %v593 = vld [vmem:[#allocation6 + $0x78] sm:$0xff]
    %v594 = vld [vmem:[#allocation6 + $0x80] sm:$0xff]
    %v595 = vld [vmem:[#allocation6 + $0x88] sm:$0xff]
    %v596 = vld [vmem:[#allocation6 + $0x90] sm:$0xff]
    %v597 = vld [vmem:[#allocation6 + $0x98] sm:$0xff]
    %v598 = vld [vmem:[#allocation6 + $0xa0] sm:$0xff]
    %v599 = vld [vmem:[#allocation6 + $0xa8] sm:$0xff]
    %v600 = vld [vmem:[#allocation6 + $0xb0] sm:$0xff]
    %v601 = vld [vmem:[#allocation6 + $0xb8] sm:$0xff]
    %v602 = vld [vmem:[#allocation6 + $0xc0] sm:$0xff]
    %v603 = vld [vmem:[#allocation6 + $0xc8] sm:$0xff]
    %v604 = vld [vmem:[#allocation6 + $0xd0] sm:$0xff]
    %v605 = vld [vmem:[#allocation6 + $0xd8] sm:$0xff]
    %v606 = vld [vmem:[#allocation6 + $0xe0] sm:$0xff]
    %v607 = vld [vmem:[#allocation6 + $0xe8] sm:$0xff]
    %v608 = vld [vmem:[#allocation6 + $0xf0] sm:$0xff]
    %v609 = vld [vmem:[#allocation6 + $0xf8] sm:$0xff]
    %v610 = vld [vmem:[#allocation6 + $0x100] sm:$0xff]
    %v611 = vld [vmem:[#allocation6 + $0x108] sm:$0xff]
    %v612 = vld [vmem:[#allocation6 + $0x110] sm:$0xff]
    %v613 = vld [vmem:[#allocation6 + $0x118] sm:$0xff]
    %v614 = vld [vmem:[#allocation6 + $0x120] sm:$0xff]
    %v615 = vld [vmem:[#allocation6 + $0x128] sm:$0xff]
    %v616 = vld [vmem:[#allocation6 + $0x130] sm:$0xff]
    %v617 = vld [vmem:[#allocation6 + $0x138] sm:$0xff]
    %v618 = vld [vmem:[#allocation6 + $0x140] sm:$0xff]
    %v619 = vld [vmem:[#allocation6 + $0x148] sm:$0xff]
    %v620 = vld [vmem:[#allocation6 + $0x150] sm:$0xff]
    %v621 = vld [vmem:[#allocation6 + $0x158] sm:$0xff]
    %v622 = vld [vmem:[#allocation6 + $0x160] sm:$0xff]
    %v623 = vld [vmem:[#allocation6 + $0x168] sm:$0xff]
    %v624 = vld [vmem:[#allocation6 + $0x170] sm:$0xff]
    %v625 = vld [vmem:[#allocation6 + $0x178] sm:$0xff]
    %v626 = vld [vmem:[#allocation6 + $0x180] sm:$0xff]
    %v627 = vld [vmem:[#allocation6 + $0x188] sm:$0xff]
    %v628 = vld [vmem:[#allocation6 + $0x190] sm:$0xff]
    %v629 = vld [vmem:[#allocation6 + $0x198] sm:$0xff]
    %v630 = vld [vmem:[#allocation6 + $0x1a0] sm:$0xff]
    %v631 = vld [vmem:[#allocation6 + $0x1a8] sm:$0xff]
    %v632 = vld [vmem:[#allocation6 + $0x1b0] sm:$0xff]
    %v633 = vld [vmem:[#allocation6 + $0x1b8] sm:$0xff]
    %v634 = vld [vmem:[#allocation6 + $0x1c0] sm:$0xff]
    %v635 = vld [vmem:[#allocation6 + $0x1c8] sm:$0xff]
    %v636 = vld [vmem:[#allocation6 + $0x1d0] sm:$0xff]
    %v637 = vld [vmem:[#allocation6 + $0x1d8] sm:$0xff]
    %v638 = vld [vmem:[#allocation6 + $0x1e0] sm:$0xff]
    %v639 = vld [vmem:[#allocation6 + $0x1e8] sm:$0xff]
    %v640 = vld [vmem:[#allocation6 + $0x1f0] sm:$0xff]
    %v641 = vld [vmem:[#allocation6 + $0x1f8] sm:$0xff]
    %s642 = smul.u32 0, 2
    %s643 = smul.addr %s642, 4
    %s644 = scalar_lea.vmem [#allocation3], %s643
    %v645 = vld [vmem:[%s644] sm:$0xff]
    %v646 = vld [vmem:[%s644 + $0x8] sm:$0xff]
    %s647 = smul.u32 14, 2
    %s648 = smul.addr %s647, 4
    %s649 = scalar_lea.vmem [#allocation3], %s648
    %v650 = vld [vmem:[%s649] sm:$0xff]
    %v651 = vld [vmem:[%s649 + $0x8] sm:$0xff]
    %vm652 = vmpackc.low %vm281, %vm280
    %v653 = vsel %vm652, %v645, %v650
    %v654 = vsel %vm652, %v646, %v651
    %v655 = vunpack.c.l.bf16 %v653
    %v656 = vunpack.c.h.bf16 %v653
    %v657 = vunpack.c.l.bf16 %v654
    %v658 = vunpack.c.h.bf16 %v654
    %659 = vmatpush.msra.mxu0 %v608
    %660 = vmatpush.msra.mxu0 %v606
    %661 = vmatpush.msra.mxu0 %v604
    %662 = vmatpush.msra.mxu0 %v602
    %663 = vmatpush.msra.mxu0 %v600
    %664 = vmatpush.msra.mxu0 %v598
    %665 = vmatpush.msra.mxu0 %v596
    %666 = vmatpush.msra.mxu0 %v594
    %667 = vmatpush.msra.mxu0 %v592
    %668 = vmatpush.msra.mxu0 %v590
    %669 = vmatpush.msra.mxu0 %v588
    %670 = vmatpush.msra.mxu0 %v586
    %671 = vmatpush.msra.mxu0 %v584
    %672 = vmatpush.msra.mxu0 %v582
    %673 = vmatpush.msra.mxu0 %v580
    %674 = vmatpush.msra.mxu0 %v578
    %675 = vmatmul.f32.gmra.mxu0 0.0
    %v676 = vpop.f32.mrf.mxu0
    %v677 = vadd.f32 0.0, %v676
    %678 = vmatmul.f32.gmra.mxu0 0.0
    %v679 = vpop.f32.mrf.mxu0
    %v680 = vadd.f32 0.0, %v679
    %681 = vdwg.mxu0
    %682 = vmatpush.msra.mxu0 %v640
    %683 = vmatpush.msra.mxu0 %v638
    %684 = vmatpush.msra.mxu0 %v636
    %685 = vmatpush.msra.mxu0 %v634
    %686 = vmatpush.msra.mxu0 %v632
    %687 = vmatpush.msra.mxu0 %v630
    %688 = vmatpush.msra.mxu0 %v628
    %689 = vmatpush.msra.mxu0 %v626
    %690 = vmatpush.msra.mxu0 %v624
    %691 = vmatpush.msra.mxu0 %v622
    %692 = vmatpush.msra.mxu0 %v620
    %693 = vmatpush.msra.mxu0 %v618
    %694 = vmatpush.msra.mxu0 %v616
    %695 = vmatpush.msra.mxu0 %v614
    %696 = vmatpush.msra.mxu0 %v612
    %697 = vmatpush.msra.mxu0 %v610
    %698 = vmatmul.f32.gmra.mxu0 0.0
    %v699 = vpop.f32.mrf.mxu0
    %v700 = vadd.f32 %v677, %v699
    %701 = vmatmul.f32.gmra.mxu0 0.0
    %v702 = vpop.f32.mrf.mxu0
    %v703 = vadd.f32 %v680, %v702
    %704 = vdwg.mxu0
    %705 = vmatpush.msra.mxu0 %v609
    %706 = vmatpush.msra.mxu0 %v607
    %707 = vmatpush.msra.mxu0 %v605
    %708 = vmatpush.msra.mxu0 %v603
    %709 = vmatpush.msra.mxu0 %v601
    %710 = vmatpush.msra.mxu0 %v599
    %711 = vmatpush.msra.mxu0 %v597
    %712 = vmatpush.msra.mxu0 %v595
    %713 = vmatpush.msra.mxu0 %v593
    %714 = vmatpush.msra.mxu0 %v591
    %715 = vmatpush.msra.mxu0 %v589
    %716 = vmatpush.msra.mxu0 %v587
    %717 = vmatpush.msra.mxu0 %v585
    %718 = vmatpush.msra.mxu0 %v583
    %719 = vmatpush.msra.mxu0 %v581
    %720 = vmatpush.msra.mxu0 %v579
    %721 = vmatmul.f32.gmra.mxu0 0.0
    %v722 = vpop.f32.mrf.mxu0
    %v723 = vadd.f32 0.0, %v722
    %724 = vmatmul.f32.gmra.mxu0 0.0
    %v725 = vpop.f32.mrf.mxu0
    %v726 = vadd.f32 0.0, %v725
    %727 = vdwg.mxu0
    %728 = vmatpush.msra.mxu0 %v641
    %729 = vmatpush.msra.mxu0 %v639
    %730 = vmatpush.msra.mxu0 %v637
    %731 = vmatpush.msra.mxu0 %v635
    %732 = vmatpush.msra.mxu0 %v633
    %733 = vmatpush.msra.mxu0 %v631
    %734 = vmatpush.msra.mxu0 %v629
    %735 = vmatpush.msra.mxu0 %v627
    %736 = vmatpush.msra.mxu0 %v625
    %737 = vmatpush.msra.mxu0 %v623
    %738 = vmatpush.msra.mxu0 %v621
    %739 = vmatpush.msra.mxu0 %v619
    %740 = vmatpush.msra.mxu0 %v617
    %741 = vmatpush.msra.mxu0 %v615
    %742 = vmatpush.msra.mxu0 %v613
    %743 = vmatpush.msra.mxu0 %v611
    %744 = vmatmul.f32.gmra.mxu0 0.0
    %v745 = vpop.f32.mrf.mxu0
    %v746 = vadd.f32 %v723, %v745
    %747 = vmatmul.f32.gmra.mxu0 0.0
    %v748 = vpop.f32.mrf.mxu0
    %v749 = vadd.f32 %v726, %v748
    %750 = vdwg.mxu0
    %v751 = vadd.f32 %v655, %v700
    %v752 = vadd.f32 %v656, %v746
    %v753 = vadd.f32 %v657, %v703
    %v754 = vadd.f32 %v658, %v749
    %v755 = vtanh.pop %v751
    %v756 = vtanh.pop %v752
    %v757 = vtanh.pop %v753
    %v758 = vtanh.pop %v754
    %v759 = vpack.c.bf16 %v755, %v755
    %v760 = vpack.c.bf16 %v757, %v757
    %761 = vst [vmem:[#allocation4] sm:$0xf] %v759
    %762 = vst [vmem:[#allocation4 + $0x4] sm:$0xf] %v760
    %v763 = vpack.c.bf16 %v756, %v756
    %v764 = vpack.c.bf16 %v758, %v758
    %s765 = scalar_lea.vmem [#allocation5], 56
    %766 = vst [vmem:[%s765] sm:$0xf] %v763
    %767 = vst [vmem:[%s765 + $0x4] sm:$0xf] %v764
    %s768 = smul.u32 2, 2
    %s769 = smul.addr %s768, 4
    %s770 = scalar_lea.vmem [#allocation3], %s769
    %v771 = vld [vmem:[%s770] sm:$0xff]
    %v772 = vld [vmem:[%s770 + $0x8] sm:$0xff]
    %s773 = smul.u32 12, 2
    %s774 = smul.addr %s773, 4
    %s775 = scalar_lea.vmem [#allocation3], %s774
    %v776 = vld [vmem:[%s775] sm:$0xff]
    %v777 = vld [vmem:[%s775 + $0x8] sm:$0xff]
    %v778 = vsel %vm652, %v771, %v776
    %v779 = vsel %vm652, %v772, %v777
    %v780 = vunpack.c.l.bf16 %v778
    %v781 = vunpack.c.h.bf16 %v778
    %v782 = vunpack.c.l.bf16 %v779
    %v783 = vunpack.c.h.bf16 %v779
    %784 = vmatpush.msra.mxu0 %v608
    %785 = vmatpush.msra.mxu0 %v606
    %786 = vmatpush.msra.mxu0 %v604
    %787 = vmatpush.msra.mxu0 %v602
    %788 = vmatpush.msra.mxu0 %v600
    %789 = vmatpush.msra.mxu0 %v598
    %790 = vmatpush.msra.mxu0 %v596
    %791 = vmatpush.msra.mxu0 %v594
    %792 = vmatpush.msra.mxu0 %v592
    %793 = vmatpush.msra.mxu0 %v590
    %794 = vmatpush.msra.mxu0 %v588
    %795 = vmatpush.msra.mxu0 %v586
    %796 = vmatpush.msra.mxu0 %v584
    %797 = vmatpush.msra.mxu0 %v582
    %798 = vmatpush.msra.mxu0 %v580
    %799 = vmatpush.msra.mxu0 %v578
    %800 = vmatmul.f32.gmra.mxu0 %v755
    %v801 = vpop.f32.mrf.mxu0
    %v802 = vadd.f32 0.0, %v801
    %803 = vmatmul.f32.gmra.mxu0 %v757
    %v804 = vpop.f32.mrf.mxu0
    %v805 = vadd.f32 0.0, %v804
    %806 = vdwg.mxu0
    %807 = vmatpush.msra.mxu0 %v640
    %808 = vmatpush.msra.mxu0 %v638
    %809 = vmatpush.msra.mxu0 %v636
    %810 = vmatpush.msra.mxu0 %v634
    %811 = vmatpush.msra.mxu0 %v632
    %812 = vmatpush.msra.mxu0 %v630
    %813 = vmatpush.msra.mxu0 %v628
    %814 = vmatpush.msra.mxu0 %v626
    %815 = vmatpush.msra.mxu0 %v624
    %816 = vmatpush.msra.mxu0 %v622
    %817 = vmatpush.msra.mxu0 %v620
    %818 = vmatpush.msra.mxu0 %v618
    %819 = vmatpush.msra.mxu0 %v616
    %820 = vmatpush.msra.mxu0 %v614
    %821 = vmatpush.msra.mxu0 %v612
    %822 = vmatpush.msra.mxu0 %v610
    %823 = vmatmul.f32.gmra.mxu0 %v756
    %v824 = vpop.f32.mrf.mxu0
    %v825 = vadd.f32 %v802, %v824
    %826 = vmatmul.f32.gmra.mxu0 %v758
    %v827 = vpop.f32.mrf.mxu0
    %v828 = vadd.f32 %v805, %v827
    %829 = vdwg.mxu0
    %830 = vmatpush.msra.mxu0 %v609
    %831 = vmatpush.msra.mxu0 %v607
    %832 = vmatpush.msra.mxu0 %v605
    %833 = vmatpush.msra.mxu0 %v603
    %834 = vmatpush.msra.mxu0 %v601
    %835 = vmatpush.msra.mxu0 %v599
    %836 = vmatpush.msra.mxu0 %v597
    %837 = vmatpush.msra.mxu0 %v595
    %838 = vmatpush.msra.mxu0 %v593
    %839 = vmatpush.msra.mxu0 %v591
    %840 = vmatpush.msra.mxu0 %v589
    %841 = vmatpush.msra.mxu0 %v587
    %842 = vmatpush.msra.mxu0 %v585
    %843 = vmatpush.msra.mxu0 %v583
    %844 = vmatpush.msra.mxu0 %v581
    %845 = vmatpush.msra.mxu0 %v579
    %846 = vmatmul.f32.gmra.mxu0 %v755
    %v847 = vpop.f32.mrf.mxu0
    %v848 = vadd.f32 0.0, %v847
    %849 = vmatmul.f32.gmra.mxu0 %v757
    %v850 = vpop.f32.mrf.mxu0
    %v851 = vadd.f32 0.0, %v850
    %852 = vdwg.mxu0
    %853 = vmatpush.msra.mxu0 %v641
    %854 = vmatpush.msra.mxu0 %v639
    %855 = vmatpush.msra.mxu0 %v637
    %856 = vmatpush.msra.mxu0 %v635
    %857 = vmatpush.msra.mxu0 %v633
    %858 = vmatpush.msra.mxu0 %v631
    %859 = vmatpush.msra.mxu0 %v629
    %860 = vmatpush.msra.mxu0 %v627
    %861 = vmatpush.msra.mxu0 %v625
    %862 = vmatpush.msra.mxu0 %v623
    %863 = vmatpush.msra.mxu0 %v621
    %864 = vmatpush.msra.mxu0 %v619
    %865 = vmatpush.msra.mxu0 %v617
    %866 = vmatpush.msra.mxu0 %v615
    %867 = vmatpush.msra.mxu0 %v613
    %868 = vmatpush.msra.mxu0 %v611
    %869 = vmatmul.f32.gmra.mxu0 %v756
    %v870 = vpop.f32.mrf.mxu0
    %v871 = vadd.f32 %v848, %v870
    %872 = vmatmul.f32.gmra.mxu0 %v758
    %v873 = vpop.f32.mrf.mxu0
    %v874 = vadd.f32 %v851, %v873
    %875 = vdwg.mxu0
    %v876 = vadd.f32 %v780, %v825
    %v877 = vadd.f32 %v781, %v871
    %v878 = vadd.f32 %v782, %v828
    %v879 = vadd.f32 %v783, %v874
    %v880 = vtanh.pop %v876
    %v881 = vtanh.pop %v877
    %v882 = vtanh.pop %v878
    %v883 = vtanh.pop %v879
    %v884 = vpack.c.bf16 %v880, %v880
    %v885 = vpack.c.bf16 %v882, %v882
    %s886 = scalar_lea.vmem [#allocation4], 8
    %887 = vst [vmem:[%s886] sm:$0xf] %v884
    %888 = vst [vmem:[%s886 + $0x4] sm:$0xf] %v885
    %v889 = vpack.c.bf16 %v881, %v881
    %v890 = vpack.c.bf16 %v883, %v883
    %s891 = scalar_lea.vmem [#allocation5], 48
    %892 = vst [vmem:[%s891] sm:$0xf] %v889
    %893 = vst [vmem:[%s891 + $0x4] sm:$0xf] %v890
    %s894 = smul.u32 4, 2
    %s895 = smul.addr %s894, 4
    %s896 = scalar_lea.vmem [#allocation3], %s895
    %v897 = vld [vmem:[%s896] sm:$0xff]
    %v898 = vld [vmem:[%s896 + $0x8] sm:$0xff]
    %s899 = smul.u32 10, 2
    %s900 = smul.addr %s899, 4
    %s901 = scalar_lea.vmem [#allocation3], %s900
    %v902 = vld [vmem:[%s901] sm:$0xff]
    %v903 = vld [vmem:[%s901 + $0x8] sm:$0xff]
    %v904 = vsel %vm652, %v897, %v902
    %v905 = vsel %vm652, %v898, %v903
    %v906 = vunpack.c.l.bf16 %v904
    %v907 = vunpack.c.h.bf16 %v904
    %v908 = vunpack.c.l.bf16 %v905
    %v909 = vunpack.c.h.bf16 %v905
    %910 = vmatpush.msra.mxu0 %v608
    %911 = vmatpush.msra.mxu0 %v606
    %912 = vmatpush.msra.mxu0 %v604
    %913 = vmatpush.msra.mxu0 %v602
    %914 = vmatpush.msra.mxu0 %v600
    %915 = vmatpush.msra.mxu0 %v598
    %916 = vmatpush.msra.mxu0 %v596
    %917 = vmatpush.msra.mxu0 %v594
    %918 = vmatpush.msra.mxu0 %v592
    %919 = vmatpush.msra.mxu0 %v590
    %920 = vmatpush.msra.mxu0 %v588
    %921 = vmatpush.msra.mxu0 %v586
    %922 = vmatpush.msra.mxu0 %v584
    %923 = vmatpush.msra.mxu0 %v582
    %924 = vmatpush.msra.mxu0 %v580
    %925 = vmatpush.msra.mxu0 %v578
    %926 = vmatmul.f32.gmra.mxu0 %v880
    %v927 = vpop.f32.mrf.mxu0
    %v928 = vadd.f32 0.0, %v927
    %929 = vmatmul.f32.gmra.mxu0 %v882
    %v930 = vpop.f32.mrf.mxu0
    %v931 = vadd.f32 0.0, %v930
    %932 = vdwg.mxu0
    %933 = vmatpush.msra.mxu0 %v640
    %934 = vmatpush.msra.mxu0 %v638
    %935 = vmatpush.msra.mxu0 %v636
    %936 = vmatpush.msra.mxu0 %v634
    %937 = vmatpush.msra.mxu0 %v632
    %938 = vmatpush.msra.mxu0 %v630
    %939 = vmatpush.msra.mxu0 %v628
    %940 = vmatpush.msra.mxu0 %v626
    %941 = vmatpush.msra.mxu0 %v624
    %942 = vmatpush.msra.mxu0 %v622
    %943 = vmatpush.msra.mxu0 %v620
    %944 = vmatpush.msra.mxu0 %v618
    %945 = vmatpush.msra.mxu0 %v616
    %946 = vmatpush.msra.mxu0 %v614
    %947 = vmatpush.msra.mxu0 %v612
    %948 = vmatpush.msra.mxu0 %v610
    %949 = vmatmul.f32.gmra.mxu0 %v881
    %v950 = vpop.f32.mrf.mxu0
    %v951 = vadd.f32 %v928, %v950
    %952 = vmatmul.f32.gmra.mxu0 %v883
    %v953 = vpop.f32.mrf.mxu0
    %v954 = vadd.f32 %v931, %v953
    %955 = vdwg.mxu0
    %956 = vmatpush.msra.mxu0 %v609
    %957 = vmatpush.msra.mxu0 %v607
    %958 = vmatpush.msra.mxu0 %v605
    %959 = vmatpush.msra.mxu0 %v603
    %960 = vmatpush.msra.mxu0 %v601
    %961 = vmatpush.msra.mxu0 %v599
    %962 = vmatpush.msra.mxu0 %v597
    %963 = vmatpush.msra.mxu0 %v595
    %964 = vmatpush.msra.mxu0 %v593
    %965 = vmatpush.msra.mxu0 %v591
    %966 = vmatpush.msra.mxu0 %v589
    %967 = vmatpush.msra.mxu0 %v587
    %968 = vmatpush.msra.mxu0 %v585
    %969 = vmatpush.msra.mxu0 %v583
    %970 = vmatpush.msra.mxu0 %v581
    %971 = vmatpush.msra.mxu0 %v579
    %972 = vmatmul.f32.gmra.mxu0 %v880
    %v973 = vpop.f32.mrf.mxu0
    %v974 = vadd.f32 0.0, %v973
    %975 = vmatmul.f32.gmra.mxu0 %v882
    %v976 = vpop.f32.mrf.mxu0
    %v977 = vadd.f32 0.0, %v976
    %978 = vdwg.mxu0
    %979 = vmatpush.msra.mxu0 %v641
    %980 = vmatpush.msra.mxu0 %v639
    %981 = vmatpush.msra.mxu0 %v637
    %982 = vmatpush.msra.mxu0 %v635
    %983 = vmatpush.msra.mxu0 %v633
    %984 = vmatpush.msra.mxu0 %v631
    %985 = vmatpush.msra.mxu0 %v629
    %986 = vmatpush.msra.mxu0 %v627
    %987 = vmatpush.msra.mxu0 %v625
    %988 = vmatpush.msra.mxu0 %v623
    %989 = vmatpush.msra.mxu0 %v621
    %990 = vmatpush.msra.mxu0 %v619
    %991 = vmatpush.msra.mxu0 %v617
    %992 = vmatpush.msra.mxu0 %v615
    %993 = vmatpush.msra.mxu0 %v613
    %994 = vmatpush.msra.mxu0 %v611
    %995 = vmatmul.f32.gmra.mxu0 %v881
    %v996 = vpop.f32.mrf.mxu0
    %v997 = vadd.f32 %v974, %v996
    %998 = vmatmul.f32.gmra.mxu0 %v883
    %v999 = vpop.f32.mrf.mxu0
    %v1000 = vadd.f32 %v977, %v999
    %1001 = vdwg.mxu0
    %v1002 = vadd.f32 %v906, %v951
    %v1003 = vadd.f32 %v907, %v997
    %v1004 = vadd.f32 %v908, %v954
    %v1005 = vadd.f32 %v909, %v1000
    %v1006 = vtanh.pop %v1002
    %v1007 = vtanh.pop %v1003
    %v1008 = vtanh.pop %v1004
    %v1009 = vtanh.pop %v1005
    %v1010 = vpack.c.bf16 %v1006, %v1006
    %v1011 = vpack.c.bf16 %v1008, %v1008
    %s1012 = scalar_lea.vmem [#allocation4], 16
    %1013 = vst [vmem:[%s1012] sm:$0xf] %v1010
    %1014 = vst [vmem:[%s1012 + $0x4] sm:$0xf] %v1011
    %v1015 = vpack.c.bf16 %v1007, %v1007
    %v1016 = vpack.c.bf16 %v1009, %v1009
    %s1017 = scalar_lea.vmem [#allocation5], 40
    %1018 = vst [vmem:[%s1017] sm:$0xf] %v1015
    %1019 = vst [vmem:[%s1017 + $0x4] sm:$0xf] %v1016
    %s1020 = smul.u32 6, 2
    %s1021 = smul.addr %s1020, 4
    %s1022 = scalar_lea.vmem [#allocation3], %s1021
    %v1023 = vld [vmem:[%s1022] sm:$0xff]
    %v1024 = vld [vmem:[%s1022 + $0x8] sm:$0xff]
    %s1025 = smul.u32 8, 2
    %s1026 = smul.addr %s1025, 4
    %s1027 = scalar_lea.vmem [#allocation3], %s1026
    %v1028 = vld [vmem:[%s1027] sm:$0xff]
    %v1029 = vld [vmem:[%s1027 + $0x8] sm:$0xff]
    %v1030 = vsel %vm652, %v1023, %v1028
    %v1031 = vsel %vm652, %v1024, %v1029
    %v1032 = vunpack.c.l.bf16 %v1030
    %v1033 = vunpack.c.h.bf16 %v1030
    %v1034 = vunpack.c.l.bf16 %v1031
    %v1035 = vunpack.c.h.bf16 %v1031
    %1036 = vmatpush.msra.mxu0 %v608
    %1037 = vmatpush.msra.mxu0 %v606
    %1038 = vmatpush.msra.mxu0 %v604
    %1039 = vmatpush.msra.mxu0 %v602
    %1040 = vmatpush.msra.mxu0 %v600
    %1041 = vmatpush.msra.mxu0 %v598
    %1042 = vmatpush.msra.mxu0 %v596
    %1043 = vmatpush.msra.mxu0 %v594
    %1044 = vmatpush.msra.mxu0 %v592
    %1045 = vmatpush.msra.mxu0 %v590
    %1046 = vmatpush.msra.mxu0 %v588
    %1047 = vmatpush.msra.mxu0 %v586
    %1048 = vmatpush.msra.mxu0 %v584
    %1049 = vmatpush.msra.mxu0 %v582
    %1050 = vmatpush.msra.mxu0 %v580
    %1051 = vmatpush.msra.mxu0 %v578
    %1052 = vmatmul.f32.gmra.mxu0 %v1006
    %v1053 = vpop.f32.mrf.mxu0
    %v1054 = vadd.f32 0.0, %v1053
    %1055 = vmatmul.f32.gmra.mxu0 %v1008
    %v1056 = vpop.f32.mrf.mxu0
    %v1057 = vadd.f32 0.0, %v1056
    %1058 = vdwg.mxu0
    %1059 = vmatpush.msra.mxu0 %v640
    %1060 = vmatpush.msra.mxu0 %v638
    %1061 = vmatpush.msra.mxu0 %v636
    %1062 = vmatpush.msra.mxu0 %v634
    %1063 = vmatpush.msra.mxu0 %v632
    %1064 = vmatpush.msra.mxu0 %v630
    %1065 = vmatpush.msra.mxu0 %v628
    %1066 = vmatpush.msra.mxu0 %v626
    %1067 = vmatpush.msra.mxu0 %v624
    %1068 = vmatpush.msra.mxu0 %v622
    %1069 = vmatpush.msra.mxu0 %v620
    %1070 = vmatpush.msra.mxu0 %v618
    %1071 = vmatpush.msra.mxu0 %v616
    %1072 = vmatpush.msra.mxu0 %v614
    %1073 = vmatpush.msra.mxu0 %v612
    %1074 = vmatpush.msra.mxu0 %v610
    %1075 = vmatmul.f32.gmra.mxu0 %v1007
    %v1076 = vpop.f32.mrf.mxu0
    %v1077 = vadd.f32 %v1054, %v1076
    %1078 = vmatmul.f32.gmra.mxu0 %v1009
    %v1079 = vpop.f32.mrf.mxu0
    %v1080 = vadd.f32 %v1057, %v1079
    %1081 = vdwg.mxu0
    %1082 = vmatpush.msra.mxu0 %v609
    %1083 = vmatpush.msra.mxu0 %v607
    %1084 = vmatpush.msra.mxu0 %v605
    %1085 = vmatpush.msra.mxu0 %v603
    %1086 = vmatpush.msra.mxu0 %v601
    %1087 = vmatpush.msra.mxu0 %v599
    %1088 = vmatpush.msra.mxu0 %v597
    %1089 = vmatpush.msra.mxu0 %v595
    %1090 = vmatpush.msra.mxu0 %v593
    %1091 = vmatpush.msra.mxu0 %v591
    %1092 = vmatpush.msra.mxu0 %v589
    %1093 = vmatpush.msra.mxu0 %v587
    %1094 = vmatpush.msra.mxu0 %v585
    %1095 = vmatpush.msra.mxu0 %v583
    %1096 = vmatpush.msra.mxu0 %v581
    %1097 = vmatpush.msra.mxu0 %v579
    %1098 = vmatmul.f32.gmra.mxu0 %v1006
    %v1099 = vpop.f32.mrf.mxu0
    %v1100 = vadd.f32 0.0, %v1099
    %1101 = vmatmul.f32.gmra.mxu0 %v1008
    %v1102 = vpop.f32.mrf.mxu0
    %v1103 = vadd.f32 0.0, %v1102
    %1104 = vdwg.mxu0
    %1105 = vmatpush.msra.mxu0 %v641
    %1106 = vmatpush.msra.mxu0 %v639
    %1107 = vmatpush.msra.mxu0 %v637
    %1108 = vmatpush.msra.mxu0 %v635
    %1109 = vmatpush.msra.mxu0 %v633
    %1110 = vmatpush.msra.mxu0 %v631
    %1111 = vmatpush.msra.mxu0 %v629
    %1112 = vmatpush.msra.mxu0 %v627
    %1113 = vmatpush.msra.mxu0 %v625
    %1114 = vmatpush.msra.mxu0 %v623
    %1115 = vmatpush.msra.mxu0 %v621
    %1116 = vmatpush.msra.mxu0 %v619
    %1117 = vmatpush.msra.mxu0 %v617
    %1118 = vmatpush.msra.mxu0 %v615
    %1119 = vmatpush.msra.mxu0 %v613
    %1120 = vmatpush.msra.mxu0 %v611
    %1121 = vmatmul.f32.gmra.mxu0 %v1007
    %v1122 = vpop.f32.mrf.mxu0
    %v1123 = vadd.f32 %v1100, %v1122
    %1124 = vmatmul.f32.gmra.mxu0 %v1009
    %v1125 = vpop.f32.mrf.mxu0
    %v1126 = vadd.f32 %v1103, %v1125
    %1127 = vdwg.mxu0
    %v1128 = vadd.f32 %v1032, %v1077
    %v1129 = vadd.f32 %v1033, %v1123
    %v1130 = vadd.f32 %v1034, %v1080
    %v1131 = vadd.f32 %v1035, %v1126
    %v1132 = vtanh.pop %v1128
    %v1133 = vtanh.pop %v1129
    %v1134 = vtanh.pop %v1130
    %v1135 = vtanh.pop %v1131
    %v1136 = vpack.c.bf16 %v1132, %v1132
    %v1137 = vpack.c.bf16 %v1134, %v1134
    %s1138 = scalar_lea.vmem [#allocation4], 24
    %1139 = vst [vmem:[%s1138] sm:$0xf] %v1136
    %1140 = vst [vmem:[%s1138 + $0x4] sm:$0xf] %v1137
    %v1141 = vpack.c.bf16 %v1133, %v1133
    %v1142 = vpack.c.bf16 %v1135, %v1135
    %s1143 = scalar_lea.vmem [#allocation5], 32
    %1144 = vst [vmem:[%s1143] sm:$0xf] %v1141
    %1145 = vst [vmem:[%s1143 + $0x4] sm:$0xf] %v1142
    %v1146 = vld [vmem:[%s1027] sm:$0xff]
    %v1147 = vld [vmem:[%s1027 + $0x8] sm:$0xff]
    %v1148 = vld [vmem:[%s1022] sm:$0xff]
    %v1149 = vld [vmem:[%s1022 + $0x8] sm:$0xff]
    %v1150 = vsel %vm652, %v1146, %v1148
    %v1151 = vsel %vm652, %v1147, %v1149
    %v1152 = vunpack.c.l.bf16 %v1150
    %v1153 = vunpack.c.h.bf16 %v1150
    %v1154 = vunpack.c.l.bf16 %v1151
    %v1155 = vunpack.c.h.bf16 %v1151
    %1156 = vmatpush.msra.mxu0 %v608
    %1157 = vmatpush.msra.mxu0 %v606
    %1158 = vmatpush.msra.mxu0 %v604
    %1159 = vmatpush.msra.mxu0 %v602
    %1160 = vmatpush.msra.mxu0 %v600
    %1161 = vmatpush.msra.mxu0 %v598
    %1162 = vmatpush.msra.mxu0 %v596
    %1163 = vmatpush.msra.mxu0 %v594
    %1164 = vmatpush.msra.mxu0 %v592
    %1165 = vmatpush.msra.mxu0 %v590
    %1166 = vmatpush.msra.mxu0 %v588
    %1167 = vmatpush.msra.mxu0 %v586
    %1168 = vmatpush.msra.mxu0 %v584
    %1169 = vmatpush.msra.mxu0 %v582
    %1170 = vmatpush.msra.mxu0 %v580
    %1171 = vmatpush.msra.mxu0 %v578
    %1172 = vmatmul.f32.gmra.mxu0 %v1132
    %v1173 = vpop.f32.mrf.mxu0
    %v1174 = vadd.f32 0.0, %v1173
    %1175 = vmatmul.f32.gmra.mxu0 %v1134
    %v1176 = vpop.f32.mrf.mxu0
    %v1177 = vadd.f32 0.0, %v1176
    %1178 = vdwg.mxu0
    %1179 = vmatpush.msra.mxu0 %v640
    %1180 = vmatpush.msra.mxu0 %v638
    %1181 = vmatpush.msra.mxu0 %v636
    %1182 = vmatpush.msra.mxu0 %v634
    %1183 = vmatpush.msra.mxu0 %v632
    %1184 = vmatpush.msra.mxu0 %v630
    %1185 = vmatpush.msra.mxu0 %v628
    %1186 = vmatpush.msra.mxu0 %v626
    %1187 = vmatpush.msra.mxu0 %v624
    %1188 = vmatpush.msra.mxu0 %v622
    %1189 = vmatpush.msra.mxu0 %v620
    %1190 = vmatpush.msra.mxu0 %v618
    %1191 = vmatpush.msra.mxu0 %v616
    %1192 = vmatpush.msra.mxu0 %v614
    %1193 = vmatpush.msra.mxu0 %v612
    %1194 = vmatpush.msra.mxu0 %v610
    %1195 = vmatmul.f32.gmra.mxu0 %v1133
    %v1196 = vpop.f32.mrf.mxu0
    %v1197 = vadd.f32 %v1174, %v1196
    %1198 = vmatmul.f32.gmra.mxu0 %v1135
    %v1199 = vpop.f32.mrf.mxu0
    %v1200 = vadd.f32 %v1177, %v1199
    %1201 = vdwg.mxu0
    %1202 = vmatpush.msra.mxu0 %v609
    %1203 = vmatpush.msra.mxu0 %v607
    %1204 = vmatpush.msra.mxu0 %v605
    %1205 = vmatpush.msra.mxu0 %v603
    %1206 = vmatpush.msra.mxu0 %v601
    %1207 = vmatpush.msra.mxu0 %v599
    %1208 = vmatpush.msra.mxu0 %v597
    %1209 = vmatpush.msra.mxu0 %v595
    %1210 = vmatpush.msra.mxu0 %v593
    %1211 = vmatpush.msra.mxu0 %v591
    %1212 = vmatpush.msra.mxu0 %v589
    %1213 = vmatpush.msra.mxu0 %v587
    %1214 = vmatpush.msra.mxu0 %v585
    %1215 = vmatpush.msra.mxu0 %v583
    %1216 = vmatpush.msra.mxu0 %v581
    %1217 = vmatpush.msra.mxu0 %v579
    %1218 = vmatmul.f32.gmra.mxu0 %v1132
    %v1219 = vpop.f32.mrf.mxu0
    %v1220 = vadd.f32 0.0, %v1219
    %1221 = vmatmul.f32.gmra.mxu0 %v1134
    %v1222 = vpop.f32.mrf.mxu0
    %v1223 = vadd.f32 0.0, %v1222
    %1224 = vdwg.mxu0
    %1225 = vmatpush.msra.mxu0 %v641
    %1226 = vmatpush.msra.mxu0 %v639
    %1227 = vmatpush.msra.mxu0 %v637
    %1228 = vmatpush.msra.mxu0 %v635
    %1229 = vmatpush.msra.mxu0 %v633
    %1230 = vmatpush.msra.mxu0 %v631
    %1231 = vmatpush.msra.mxu0 %v629
    %1232 = vmatpush.msra.mxu0 %v627
    %1233 = vmatpush.msra.mxu0 %v625
    %1234 = vmatpush.msra.mxu0 %v623
    %1235 = vmatpush.msra.mxu0 %v621
    %1236 = vmatpush.msra.mxu0 %v619
    %1237 = vmatpush.msra.mxu0 %v617
    %1238 = vmatpush.msra.mxu0 %v615
    %1239 = vmatpush.msra.mxu0 %v613
    %1240 = vmatpush.msra.mxu0 %v611
    %1241 = vmatmul.f32.gmra.mxu0 %v1133
    %v1242 = vpop.f32.mrf.mxu0
    %v1243 = vadd.f32 %v1220, %v1242
    %1244 = vmatmul.f32.gmra.mxu0 %v1135
    %v1245 = vpop.f32.mrf.mxu0
    %v1246 = vadd.f32 %v1223, %v1245
    %1247 = vdwg.mxu0
    %v1248 = vadd.f32 %v1152, %v1197
    %v1249 = vadd.f32 %v1153, %v1243
    %v1250 = vadd.f32 %v1154, %v1200
    %v1251 = vadd.f32 %v1155, %v1246
    %v1252 = vtanh.pop %v1248
    %v1253 = vtanh.pop %v1249
    %v1254 = vtanh.pop %v1250
    %v1255 = vtanh.pop %v1251
    %v1256 = vpack.c.bf16 %v1252, %v1252
    %v1257 = vpack.c.bf16 %v1254, %v1254
    %s1258 = scalar_lea.vmem [#allocation4], 32
    %1259 = vst [vmem:[%s1258] sm:$0xf] %v1256
    %1260 = vst [vmem:[%s1258 + $0x4] sm:$0xf] %v1257
    %v1261 = vpack.c.bf16 %v1253, %v1253
    %v1262 = vpack.c.bf16 %v1255, %v1255
    %s1263 = scalar_lea.vmem [#allocation5], 24
    %1264 = vst [vmem:[%s1263] sm:$0xf] %v1261
    %1265 = vst [vmem:[%s1263 + $0x4] sm:$0xf] %v1262
    %v1266 = vld [vmem:[%s901] sm:$0xff]
    %v1267 = vld [vmem:[%s901 + $0x8] sm:$0xff]
    %v1268 = vld [vmem:[%s896] sm:$0xff]
    %v1269 = vld [vmem:[%s896 + $0x8] sm:$0xff]
    %v1270 = vsel %vm652, %v1266, %v1268
    %v1271 = vsel %vm652, %v1267, %v1269
    %v1272 = vunpack.c.l.bf16 %v1270
    %v1273 = vunpack.c.h.bf16 %v1270
    %v1274 = vunpack.c.l.bf16 %v1271
    %v1275 = vunpack.c.h.bf16 %v1271
    %1276 = vmatpush.msra.mxu0 %v608
    %1277 = vmatpush.msra.mxu0 %v606
    %1278 = vmatpush.msra.mxu0 %v604
    %1279 = vmatpush.msra.mxu0 %v602
    %1280 = vmatpush.msra.mxu0 %v600
    %1281 = vmatpush.msra.mxu0 %v598
    %1282 = vmatpush.msra.mxu0 %v596
    %1283 = vmatpush.msra.mxu0 %v594
    %1284 = vmatpush.msra.mxu0 %v592
    %1285 = vmatpush.msra.mxu0 %v590
    %1286 = vmatpush.msra.mxu0 %v588
    %1287 = vmatpush.msra.mxu0 %v586
    %1288 = vmatpush.msra.mxu0 %v584
    %1289 = vmatpush.msra.mxu0 %v582
    %1290 = vmatpush.msra.mxu0 %v580
    %1291 = vmatpush.msra.mxu0 %v578
    %1292 = vmatmul.f32.gmra.mxu0 %v1252
    %v1293 = vpop.f32.mrf.mxu0
    %v1294 = vadd.f32 0.0, %v1293
    %1295 = vmatmul.f32.gmra.mxu0 %v1254
    %v1296 = vpop.f32.mrf.mxu0
    %v1297 = vadd.f32 0.0, %v1296
    %1298 = vdwg.mxu0
    %1299 = vmatpush.msra.mxu0 %v640
    %1300 = vmatpush.msra.mxu0 %v638
    %1301 = vmatpush.msra.mxu0 %v636
    %1302 = vmatpush.msra.mxu0 %v634
    %1303 = vmatpush.msra.mxu0 %v632
    %1304 = vmatpush.msra.mxu0 %v630
    %1305 = vmatpush.msra.mxu0 %v628
    %1306 = vmatpush.msra.mxu0 %v626
    %1307 = vmatpush.msra.mxu0 %v624
    %1308 = vmatpush.msra.mxu0 %v622
    %1309 = vmatpush.msra.mxu0 %v620
    %1310 = vmatpush.msra.mxu0 %v618
    %1311 = vmatpush.msra.mxu0 %v616
    %1312 = vmatpush.msra.mxu0 %v614
    %1313 = vmatpush.msra.mxu0 %v612
    %1314 = vmatpush.msra.mxu0 %v610
    %1315 = vmatmul.f32.gmra.mxu0 %v1253
    %v1316 = vpop.f32.mrf.mxu0
    %v1317 = vadd.f32 %v1294, %v1316
    %1318 = vmatmul.f32.gmra.mxu0 %v1255
    %v1319 = vpop.f32.mrf.mxu0
    %v1320 = vadd.f32 %v1297, %v1319
    %1321 = vdwg.mxu0
    %1322 = vmatpush.msra.mxu0 %v609
    %1323 = vmatpush.msra.mxu0 %v607
    %1324 = vmatpush.msra.mxu0 %v605
    %1325 = vmatpush.msra.mxu0 %v603
    %1326 = vmatpush.msra.mxu0 %v601
    %1327 = vmatpush.msra.mxu0 %v599
    %1328 = vmatpush.msra.mxu0 %v597
    %1329 = vmatpush.msra.mxu0 %v595
    %1330 = vmatpush.msra.mxu0 %v593
    %1331 = vmatpush.msra.mxu0 %v591
    %1332 = vmatpush.msra.mxu0 %v589
    %1333 = vmatpush.msra.mxu0 %v587
    %1334 = vmatpush.msra.mxu0 %v585
    %1335 = vmatpush.msra.mxu0 %v583
    %1336 = vmatpush.msra.mxu0 %v581
    %1337 = vmatpush.msra.mxu0 %v579
    %1338 = vmatmul.f32.gmra.mxu0 %v1252
    %v1339 = vpop.f32.mrf.mxu0
    %v1340 = vadd.f32 0.0, %v1339
    %1341 = vmatmul.f32.gmra.mxu0 %v1254
    %v1342 = vpop.f32.mrf.mxu0
    %v1343 = vadd.f32 0.0, %v1342
    %1344 = vdwg.mxu0
    %1345 = vmatpush.msra.mxu0 %v641
    %1346 = vmatpush.msra.mxu0 %v639
    %1347 = vmatpush.msra.mxu0 %v637
    %1348 = vmatpush.msra.mxu0 %v635
    %1349 = vmatpush.msra.mxu0 %v633
    %1350 = vmatpush.msra.mxu0 %v631
    %1351 = vmatpush.msra.mxu0 %v629
    %1352 = vmatpush.msra.mxu0 %v627
    %1353 = vmatpush.msra.mxu0 %v625
    %1354 = vmatpush.msra.mxu0 %v623
    %1355 = vmatpush.msra.mxu0 %v621
    %1356 = vmatpush.msra.mxu0 %v619
    %1357 = vmatpush.msra.mxu0 %v617
    %1358 = vmatpush.msra.mxu0 %v615
    %1359 = vmatpush.msra.mxu0 %v613
    %1360 = vmatpush.msra.mxu0 %v611
    %1361 = vmatmul.f32.gmra.mxu0 %v1253
    %v1362 = vpop.f32.mrf.mxu0
    %v1363 = vadd.f32 %v1340, %v1362
    %1364 = vmatmul.f32.gmra.mxu0 %v1255
    %v1365 = vpop.f32.mrf.mxu0
    %v1366 = vadd.f32 %v1343, %v1365
    %1367 = vdwg.mxu0
    %v1368 = vadd.f32 %v1272, %v1317
    %v1369 = vadd.f32 %v1273, %v1363
    %v1370 = vadd.f32 %v1274, %v1320
    %v1371 = vadd.f32 %v1275, %v1366
    %v1372 = vtanh.pop %v1368
    %v1373 = vtanh.pop %v1369
    %v1374 = vtanh.pop %v1370
    %v1375 = vtanh.pop %v1371
    %v1376 = vpack.c.bf16 %v1372, %v1372
    %v1377 = vpack.c.bf16 %v1374, %v1374
    %s1378 = scalar_lea.vmem [#allocation4], 40
    %1379 = vst [vmem:[%s1378] sm:$0xf] %v1376
    %1380 = vst [vmem:[%s1378 + $0x4] sm:$0xf] %v1377
    %v1381 = vpack.c.bf16 %v1373, %v1373
    %v1382 = vpack.c.bf16 %v1375, %v1375
    %s1383 = scalar_lea.vmem [#allocation5], 16
    %1384 = vst [vmem:[%s1383] sm:$0xf] %v1381
    %1385 = vst [vmem:[%s1383 + $0x4] sm:$0xf] %v1382
    %v1386 = vld [vmem:[%s775] sm:$0xff]
    %v1387 = vld [vmem:[%s775 + $0x8] sm:$0xff]
    %v1388 = vld [vmem:[%s770] sm:$0xff]
    %v1389 = vld [vmem:[%s770 + $0x8] sm:$0xff]
    %v1390 = vsel %vm652, %v1386, %v1388
    %v1391 = vsel %vm652, %v1387, %v1389
    %v1392 = vunpack.c.l.bf16 %v1390
    %v1393 = vunpack.c.h.bf16 %v1390
    %v1394 = vunpack.c.l.bf16 %v1391
    %v1395 = vunpack.c.h.bf16 %v1391
    %1396 = vmatpush.msra.mxu0 %v608
    %1397 = vmatpush.msra.mxu0 %v606
    %1398 = vmatpush.msra.mxu0 %v604
    %1399 = vmatpush.msra.mxu0 %v602
    %1400 = vmatpush.msra.mxu0 %v600
    %1401 = vmatpush.msra.mxu0 %v598
    %1402 = vmatpush.msra.mxu0 %v596
    %1403 = vmatpush.msra.mxu0 %v594
    %1404 = vmatpush.msra.mxu0 %v592
    %1405 = vmatpush.msra.mxu0 %v590
    %1406 = vmatpush.msra.mxu0 %v588
    %1407 = vmatpush.msra.mxu0 %v586
    %1408 = vmatpush.msra.mxu0 %v584
    %1409 = vmatpush.msra.mxu0 %v582
    %1410 = vmatpush.msra.mxu0 %v580
    %1411 = vmatpush.msra.mxu0 %v578
    %1412 = vmatmul.f32.gmra.mxu0 %v1372
    %v1413 = vpop.f32.mrf.mxu0
    %v1414 = vadd.f32 0.0, %v1413
    %1415 = vmatmul.f32.gmra.mxu0 %v1374
    %v1416 = vpop.f32.mrf.mxu0
    %v1417 = vadd.f32 0.0, %v1416
    %1418 = vdwg.mxu0
    %1419 = vmatpush.msra.mxu0 %v640
    %1420 = vmatpush.msra.mxu0 %v638
    %1421 = vmatpush.msra.mxu0 %v636
    %1422 = vmatpush.msra.mxu0 %v634
    %1423 = vmatpush.msra.mxu0 %v632
    %1424 = vmatpush.msra.mxu0 %v630
    %1425 = vmatpush.msra.mxu0 %v628
    %1426 = vmatpush.msra.mxu0 %v626
    %1427 = vmatpush.msra.mxu0 %v624
    %1428 = vmatpush.msra.mxu0 %v622
    %1429 = vmatpush.msra.mxu0 %v620
    %1430 = vmatpush.msra.mxu0 %v618
    %1431 = vmatpush.msra.mxu0 %v616
    %1432 = vmatpush.msra.mxu0 %v614
    %1433 = vmatpush.msra.mxu0 %v612
    %1434 = vmatpush.msra.mxu0 %v610
    %1435 = vmatmul.f32.gmra.mxu0 %v1373
    %v1436 = vpop.f32.mrf.mxu0
    %v1437 = vadd.f32 %v1414, %v1436
    %1438 = vmatmul.f32.gmra.mxu0 %v1375
    %v1439 = vpop.f32.mrf.mxu0
    %v1440 = vadd.f32 %v1417, %v1439
    %1441 = vdwg.mxu0
    %1442 = vmatpush.msra.mxu0 %v609
    %1443 = vmatpush.msra.mxu0 %v607
    %1444 = vmatpush.msra.mxu0 %v605
    %1445 = vmatpush.msra.mxu0 %v603
    %1446 = vmatpush.msra.mxu0 %v601
    %1447 = vmatpush.msra.mxu0 %v599
    %1448 = vmatpush.msra.mxu0 %v597
    %1449 = vmatpush.msra.mxu0 %v595
    %1450 = vmatpush.msra.mxu0 %v593
    %1451 = vmatpush.msra.mxu0 %v591
    %1452 = vmatpush.msra.mxu0 %v589
    %1453 = vmatpush.msra.mxu0 %v587
    %1454 = vmatpush.msra.mxu0 %v585
    %1455 = vmatpush.msra.mxu0 %v583
    %1456 = vmatpush.msra.mxu0 %v581
    %1457 = vmatpush.msra.mxu0 %v579
    %1458 = vmatmul.f32.gmra.mxu0 %v1372
    %v1459 = vpop.f32.mrf.mxu0
    %v1460 = vadd.f32 0.0, %v1459
    %1461 = vmatmul.f32.gmra.mxu0 %v1374
    %v1462 = vpop.f32.mrf.mxu0
    %v1463 = vadd.f32 0.0, %v1462
    %1464 = vdwg.mxu0
    %1465 = vmatpush.msra.mxu0 %v641
    %1466 = vmatpush.msra.mxu0 %v639
    %1467 = vmatpush.msra.mxu0 %v637
    %1468 = vmatpush.msra.mxu0 %v635
    %1469 = vmatpush.msra.mxu0 %v633
    %1470 = vmatpush.msra.mxu0 %v631
    %1471 = vmatpush.msra.mxu0 %v629
    %1472 = vmatpush.msra.mxu0 %v627
    %1473 = vmatpush.msra.mxu0 %v625
    %1474 = vmatpush.msra.mxu0 %v623
    %1475 = vmatpush.msra.mxu0 %v621
    %1476 = vmatpush.msra.mxu0 %v619
    %1477 = vmatpush.msra.mxu0 %v617
    %1478 = vmatpush.msra.mxu0 %v615
    %1479 = vmatpush.msra.mxu0 %v613
    %1480 = vmatpush.msra.mxu0 %v611
    %1481 = vmatmul.f32.gmra.mxu0 %v1373
    %v1482 = vpop.f32.mrf.mxu0
    %v1483 = vadd.f32 %v1460, %v1482
    %1484 = vmatmul.f32.gmra.mxu0 %v1375
    %v1485 = vpop.f32.mrf.mxu0
    %v1486 = vadd.f32 %v1463, %v1485
    %1487 = vdwg.mxu0
    %v1488 = vadd.f32 %v1392, %v1437
    %v1489 = vadd.f32 %v1393, %v1483
    %v1490 = vadd.f32 %v1394, %v1440
    %v1491 = vadd.f32 %v1395, %v1486
    %v1492 = vtanh.pop %v1488
    %v1493 = vtanh.pop %v1489
    %v1494 = vtanh.pop %v1490
    %v1495 = vtanh.pop %v1491
    %v1496 = vpack.c.bf16 %v1492, %v1492
    %v1497 = vpack.c.bf16 %v1494, %v1494
    %s1498 = scalar_lea.vmem [#allocation4], 48
    %1499 = vst [vmem:[%s1498] sm:$0xf] %v1496
    %1500 = vst [vmem:[%s1498 + $0x4] sm:$0xf] %v1497
    %v1501 = vpack.c.bf16 %v1493, %v1493
    %v1502 = vpack.c.bf16 %v1495, %v1495
    %s1503 = scalar_lea.vmem [#allocation5], 8
    %1504 = vst [vmem:[%s1503] sm:$0xf] %v1501
    %1505 = vst [vmem:[%s1503 + $0x4] sm:$0xf] %v1502
    %v1506 = vld [vmem:[%s649] sm:$0xff]
    %v1507 = vld [vmem:[%s649 + $0x8] sm:$0xff]
    %v1508 = vld [vmem:[%s644] sm:$0xff]
    %v1509 = vld [vmem:[%s644 + $0x8] sm:$0xff]
    %v1510 = vsel %vm652, %v1506, %v1508
    %v1511 = vsel %vm652, %v1507, %v1509
    %v1512 = vunpack.c.l.bf16 %v1510
    %v1513 = vunpack.c.h.bf16 %v1510
    %v1514 = vunpack.c.l.bf16 %v1511
    %v1515 = vunpack.c.h.bf16 %v1511
    %1516 = vmatpush.msra.mxu0 %v608
    %1517 = vmatpush.msra.mxu0 %v606
    %1518 = vmatpush.msra.mxu0 %v604
    %1519 = vmatpush.msra.mxu0 %v602
    %1520 = vmatpush.msra.mxu0 %v600
    %1521 = vmatpush.msra.mxu0 %v598
    %1522 = vmatpush.msra.mxu0 %v596
    %1523 = vmatpush.msra.mxu0 %v594
    %1524 = vmatpush.msra.mxu0 %v592
    %1525 = vmatpush.msra.mxu0 %v590
    %1526 = vmatpush.msra.mxu0 %v588
    %1527 = vmatpush.msra.mxu0 %v586
    %1528 = vmatpush.msra.mxu0 %v584
    %1529 = vmatpush.msra.mxu0 %v582
    %1530 = vmatpush.msra.mxu0 %v580
    %1531 = vmatpush.msra.mxu0 %v578
    %1532 = vmatmul.f32.gmra.mxu0 %v1492
    %v1533 = vpop.f32.mrf.mxu0
    %v1534 = vadd.f32 0.0, %v1533
    %1535 = vmatmul.f32.gmra.mxu0 %v1494
    %v1536 = vpop.f32.mrf.mxu0
    %v1537 = vadd.f32 0.0, %v1536
    %1538 = vdwg.mxu0
    %1539 = vmatpush.msra.mxu0 %v640
    %1540 = vmatpush.msra.mxu0 %v638
    %1541 = vmatpush.msra.mxu0 %v636
    %1542 = vmatpush.msra.mxu0 %v634
    %1543 = vmatpush.msra.mxu0 %v632
    %1544 = vmatpush.msra.mxu0 %v630
    %1545 = vmatpush.msra.mxu0 %v628
    %1546 = vmatpush.msra.mxu0 %v626
    %1547 = vmatpush.msra.mxu0 %v624
    %1548 = vmatpush.msra.mxu0 %v622
    %1549 = vmatpush.msra.mxu0 %v620
    %1550 = vmatpush.msra.mxu0 %v618
    %1551 = vmatpush.msra.mxu0 %v616
    %1552 = vmatpush.msra.mxu0 %v614
    %1553 = vmatpush.msra.mxu0 %v612
    %1554 = vmatpush.msra.mxu0 %v610
    %1555 = vmatmul.f32.gmra.mxu0 %v1493
    %v1556 = vpop.f32.mrf.mxu0
    %v1557 = vadd.f32 %v1534, %v1556
    %1558 = vmatmul.f32.gmra.mxu0 %v1495
    %v1559 = vpop.f32.mrf.mxu0
    %v1560 = vadd.f32 %v1537, %v1559
    %1561 = vdwg.mxu0
    %1562 = vmatpush.msra.mxu0 %v609
    %1563 = vmatpush.msra.mxu0 %v607
    %1564 = vmatpush.msra.mxu0 %v605
    %1565 = vmatpush.msra.mxu0 %v603
    %1566 = vmatpush.msra.mxu0 %v601
    %1567 = vmatpush.msra.mxu0 %v599
    %1568 = vmatpush.msra.mxu0 %v597
    %1569 = vmatpush.msra.mxu0 %v595
    %1570 = vmatpush.msra.mxu0 %v593
    %1571 = vmatpush.msra.mxu0 %v591
    %1572 = vmatpush.msra.mxu0 %v589
    %1573 = vmatpush.msra.mxu0 %v587
    %1574 = vmatpush.msra.mxu0 %v585
    %1575 = vmatpush.msra.mxu0 %v583
    %1576 = vmatpush.msra.mxu0 %v581
    %1577 = vmatpush.msra.mxu0 %v579
    %1578 = vmatmul.f32.gmra.mxu0 %v1492
    %v1579 = vpop.f32.mrf.mxu0
    %v1580 = vadd.f32 0.0, %v1579
    %1581 = vmatmul.f32.gmra.mxu0 %v1494
    %v1582 = vpop.f32.mrf.mxu0
    %v1583 = vadd.f32 0.0, %v1582
    %1584 = vdwg.mxu0
    %1585 = vmatpush.msra.mxu0 %v641
    %1586 = vmatpush.msra.mxu0 %v639
    %1587 = vmatpush.msra.mxu0 %v637
    %1588 = vmatpush.msra.mxu0 %v635
    %1589 = vmatpush.msra.mxu0 %v633
    %1590 = vmatpush.msra.mxu0 %v631
    %1591 = vmatpush.msra.mxu0 %v629
    %1592 = vmatpush.msra.mxu0 %v627
    %1593 = vmatpush.msra.mxu0 %v625
    %1594 = vmatpush.msra.mxu0 %v623
    %1595 = vmatpush.msra.mxu0 %v621
    %1596 = vmatpush.msra.mxu0 %v619
    %1597 = vmatpush.msra.mxu0 %v617
    %1598 = vmatpush.msra.mxu0 %v615
    %1599 = vmatpush.msra.mxu0 %v613
    %1600 = vmatpush.msra.mxu0 %v611
    %1601 = vmatmul.f32.gmra.mxu0 %v1493
    %v1602 = vpop.f32.mrf.mxu0
    %v1603 = vadd.f32 %v1580, %v1602
    %1604 = vmatmul.f32.gmra.mxu0 %v1495
    %v1605 = vpop.f32.mrf.mxu0
    %v1606 = vadd.f32 %v1583, %v1605
    %1607 = vdwg.mxu0
    %v1608 = vadd.f32 %v1512, %v1557
    %v1609 = vadd.f32 %v1513, %v1603
    %v1610 = vadd.f32 %v1514, %v1560
    %v1611 = vadd.f32 %v1515, %v1606
    %v1612 = vtanh.pop %v1608
    %v1613 = vtanh.pop %v1609
    %v1614 = vtanh.pop %v1610
    %v1615 = vtanh.pop %v1611
    %v1616 = vpack.c.bf16 %v1612, %v1612
    %v1617 = vpack.c.bf16 %v1614, %v1614
    %s1618 = scalar_lea.vmem [#allocation4], 56
    %1619 = vst [vmem:[%s1618] sm:$0xf] %v1616
    %1620 = vst [vmem:[%s1618 + $0x4] sm:$0xf] %v1617
    %v1621 = vpack.c.bf16 %v1613, %v1613
    %v1622 = vpack.c.bf16 %v1615, %v1615
    %1623 = vst [vmem:[#allocation5] sm:$0xf] %v1621
    %1624 = vst [vmem:[#allocation5 + $0x4] sm:$0xf] %v1622
    %v1625 = vld [vmem:[#allocation4] sm:$0xf]
    %v1626 = vld [vmem:[#allocation4 + $0x4] sm:$0xf]
    %v1627 = vld [vmem:[#allocation4 + $0x8] sm:$0xf]
    %v1628 = vld [vmem:[#allocation4 + $0xc] sm:$0xf]
    %v1629 = vld [vmem:[#allocation4 + $0x10] sm:$0xf]
    %v1630 = vld [vmem:[#allocation4 + $0x14] sm:$0xf]
    %v1631 = vld [vmem:[#allocation4 + $0x18] sm:$0xf]
    %v1632 = vld [vmem:[#allocation4 + $0x1c] sm:$0xf]
    %v1633 = vld [vmem:[#allocation4 + $0x20] sm:$0xf]
    %v1634 = vld [vmem:[#allocation4 + $0x24] sm:$0xf]
    %v1635 = vld [vmem:[#allocation4 + $0x28] sm:$0xf]
    %v1636 = vld [vmem:[#allocation4 + $0x2c] sm:$0xf]
    %v1637 = vld [vmem:[#allocation4 + $0x30] sm:$0xf]
    %v1638 = vld [vmem:[#allocation4 + $0x34] sm:$0xf]
    %v1639 = vld [vmem:[#allocation4 + $0x38] sm:$0xf]
    %v1640 = vld [vmem:[#allocation4 + $0x3c] sm:$0xf]
    %v1641 = vld [vmem:[%s4] sm:$0xff]
    %v1642 = vld [vmem:[%s4 + $0x8] sm:$0xff]
    %v1643 = vld [vmem:[%s4 + $0x10] sm:$0xff]
    %v1644 = vld [vmem:[%s4 + $0x18] sm:$0xff]
    %v1645 = vld [vmem:[%s4 + $0x20] sm:$0xff]
    %v1646 = vld [vmem:[%s4 + $0x28] sm:$0xff]
    %v1647 = vld [vmem:[%s4 + $0x30] sm:$0xff]
    %v1648 = vld [vmem:[%s4 + $0x38] sm:$0xff]
    %v1649 = vld [vmem:[%s4 + $0x40] sm:$0xff]
    %v1650 = vld [vmem:[%s4 + $0x48] sm:$0xff]
    %v1651 = vld [vmem:[%s4 + $0x50] sm:$0xff]
    %v1652 = vld [vmem:[%s4 + $0x58] sm:$0xff]
    %v1653 = vld [vmem:[%s4 + $0x60] sm:$0xff]
    %v1654 = vld [vmem:[%s4 + $0x68] sm:$0xff]
    %v1655 = vld [vmem:[%s4 + $0x70] sm:$0xff]
    %v1656 = vld [vmem:[%s4 + $0x78] sm:$0xff]
    %v1657 = vld [vmem:[#allocation5] sm:$0xf]
    %v1658 = vld [vmem:[#allocation5 + $0x4] sm:$0xf]
    %v1659 = vld [vmem:[#allocation5 + $0x8] sm:$0xf]
    %v1660 = vld [vmem:[#allocation5 + $0xc] sm:$0xf]
    %v1661 = vld [vmem:[#allocation5 + $0x10] sm:$0xf]
    %v1662 = vld [vmem:[#allocation5 + $0x14] sm:$0xf]
    %v1663 = vld [vmem:[#allocation5 + $0x18] sm:$0xf]
    %v1664 = vld [vmem:[#allocation5 + $0x1c] sm:$0xf]
    %v1665 = vld [vmem:[#allocation5 + $0x20] sm:$0xf]
    %v1666 = vld [vmem:[#allocation5 + $0x24] sm:$0xf]
    %v1667 = vld [vmem:[#allocation5 + $0x28] sm:$0xf]
    %v1668 = vld [vmem:[#allocation5 + $0x2c] sm:$0xf]
    %v1669 = vld [vmem:[#allocation5 + $0x30] sm:$0xf]
    %v1670 = vld [vmem:[#allocation5 + $0x34] sm:$0xf]
    %v1671 = vld [vmem:[#allocation5 + $0x38] sm:$0xf]
    %v1672 = vld [vmem:[#allocation5 + $0x3c] sm:$0xf]
    %v1673 = vld [vmem:[%s4 + $0x80] sm:$0xff]
    %v1674 = vld [vmem:[%s4 + $0x88] sm:$0xff]
    %v1675 = vld [vmem:[%s4 + $0x90] sm:$0xff]
    %v1676 = vld [vmem:[%s4 + $0x98] sm:$0xff]
    %v1677 = vld [vmem:[%s4 + $0xa0] sm:$0xff]
    %v1678 = vld [vmem:[%s4 + $0xa8] sm:$0xff]
    %v1679 = vld [vmem:[%s4 + $0xb0] sm:$0xff]
    %v1680 = vld [vmem:[%s4 + $0xb8] sm:$0xff]
    %v1681 = vld [vmem:[%s4 + $0xc0] sm:$0xff]
    %v1682 = vld [vmem:[%s4 + $0xc8] sm:$0xff]
    %v1683 = vld [vmem:[%s4 + $0xd0] sm:$0xff]
    %v1684 = vld [vmem:[%s4 + $0xd8] sm:$0xff]
    %v1685 = vld [vmem:[%s4 + $0xe0] sm:$0xff]
    %v1686 = vld [vmem:[%s4 + $0xe8] sm:$0xff]
    %v1687 = vld [vmem:[%s4 + $0xf0] sm:$0xff]
    %v1688 = vld [vmem:[%s4 + $0xf8] sm:$0xff]
    %v1705 = vunpack.c.l.b16 %v1657
    %v1706 = vunpack.c.l.b16 %v1658
    %v1707 = vunpack.c.l.b16 %v1659
    %v1708 = vunpack.c.l.b16 %v1660
    %v1709 = vunpack.c.l.b16 %v1661
    %v1710 = vunpack.c.l.b16 %v1662
    %v1711 = vunpack.c.l.b16 %v1663
    %v1712 = vunpack.c.l.b16 %v1664
    %v1713 = vunpack.c.l.b16 %v1665
    %v1714 = vunpack.c.l.b16 %v1666
    %v1715 = vunpack.c.l.b16 %v1667
    %v1716 = vunpack.c.l.b16 %v1668
    %v1717 = vunpack.c.l.b16 %v1669
    %v1718 = vunpack.c.l.b16 %v1670
    %v1719 = vunpack.c.l.b16 %v1671
    %v1720 = vunpack.c.l.b16 %v1672
    %v1721 = vpack.c.b16 %v1706, %v1705
    %v1722 = vpack.c.b16 %v1708, %v1707
    %v1723 = vpack.c.b16 %v1710, %v1709
    %v1724 = vpack.c.b16 %v1712, %v1711
    %v1725 = vpack.c.b16 %v1714, %v1713
    %v1726 = vpack.c.b16 %v1716, %v1715
    %v1727 = vpack.c.b16 %v1718, %v1717
    %v1728 = vpack.c.b16 %v1720, %v1719
    %v1753 = vunpack.c.l.b16 %v1673
    %v1754 = vunpack.c.h.b16 %v1673
    %v1755 = vunpack.c.l.b16 %v1674
    %v1756 = vunpack.c.h.b16 %v1674
    %v1757 = vunpack.c.l.b16 %v1675
    %v1758 = vunpack.c.h.b16 %v1675
    %v1759 = vunpack.c.l.b16 %v1676
    %v1760 = vunpack.c.h.b16 %v1676
    %v1761 = vunpack.c.l.b16 %v1677
    %v1762 = vunpack.c.h.b16 %v1677
    %v1763 = vunpack.c.l.b16 %v1678
    %v1764 = vunpack.c.h.b16 %v1678
    %v1765 = vunpack.c.l.b16 %v1679
    %v1766 = vunpack.c.h.b16 %v1679
    %v1767 = vunpack.c.l.b16 %v1680
    %v1768 = vunpack.c.h.b16 %v1680
    %v1769 = vunpack.c.l.b16 %v1681
    %v1770 = vunpack.c.h.b16 %v1681
    %v1771 = vunpack.c.l.b16 %v1682
    %v1772 = vunpack.c.h.b16 %v1682
    %v1773 = vunpack.c.l.b16 %v1683
    %v1774 = vunpack.c.h.b16 %v1683
    %v1775 = vunpack.c.l.b16 %v1684
    %v1776 = vunpack.c.h.b16 %v1684
    %v1777 = vunpack.c.l.b16 %v1685
    %v1778 = vunpack.c.h.b16 %v1685
    %v1779 = vunpack.c.l.b16 %v1686
    %v1780 = vunpack.c.h.b16 %v1686
    %v1781 = vunpack.c.l.b16 %v1687
    %v1782 = vunpack.c.h.b16 %v1687
    %v1783 = vunpack.c.l.b16 %v1688
    %v1784 = vunpack.c.h.b16 %v1688
    %v1785 = vpack.c.b16 %v1755, %v1753
    %v1786 = vpack.c.b16 %v1756, %v1754
    %v1787 = vpack.c.b16 %v1759, %v1757
    %v1788 = vpack.c.b16 %v1760, %v1758
    %v1789 = vpack.c.b16 %v1763, %v1761
    %v1790 = vpack.c.b16 %v1764, %v1762
    %v1791 = vpack.c.b16 %v1767, %v1765
    %v1792 = vpack.c.b16 %v1768, %v1766
    %v1793 = vpack.c.b16 %v1771, %v1769
    %v1794 = vpack.c.b16 %v1772, %v1770
    %v1795 = vpack.c.b16 %v1775, %v1773
    %v1796 = vpack.c.b16 %v1776, %v1774
    %v1797 = vpack.c.b16 %v1779, %v1777
    %v1798 = vpack.c.b16 %v1780, %v1778
    %v1799 = vpack.c.b16 %v1783, %v1781
    %v1800 = vpack.c.b16 %v1784, %v1782
    %1817 = vmatpush.bf16.msra.mxu0 %v1799
    %1818 = vmatpush.bf16.msra.mxu0 %v1797
    %1819 = vmatpush.bf16.msra.mxu0 %v1795
    %1820 = vmatpush.bf16.msra.mxu0 %v1793
    %1821 = vmatpush.bf16.msra.mxu0 %v1791
    %1822 = vmatpush.bf16.msra.mxu0 %v1789
    %1823 = vmatpush.bf16.msra.mxu0 %v1787
    %1824 = vmatpush.bf16.msra.mxu0 %v1785
    %1825 = vmatmul.bf16.gmra.mxu0 %v1721
    %v1826 = vpop.f32.mrf.mxu0
    %v1827 = vadd.f32 0.0, %v1826
    %v1828 = vpop.f32.mrf.mxu0
    %v1829 = vadd.f32 0.0, %v1828
    %1830 = vmatmul.bf16.gmra.mxu0 %v1722
    %v1831 = vpop.f32.mrf.mxu0
    %v1832 = vadd.f32 0.0, %v1831
    %v1833 = vpop.f32.mrf.mxu0
    %v1834 = vadd.f32 0.0, %v1833
    %1835 = vmatmul.bf16.gmra.mxu0 %v1723
    %v1836 = vpop.f32.mrf.mxu0
    %v1837 = vadd.f32 0.0, %v1836
    %v1838 = vpop.f32.mrf.mxu0
    %v1839 = vadd.f32 0.0, %v1838
    %1840 = vmatmul.bf16.gmra.mxu0 %v1724
    %v1841 = vpop.f32.mrf.mxu0
    %v1842 = vadd.f32 0.0, %v1841
    %v1843 = vpop.f32.mrf.mxu0
    %v1844 = vadd.f32 0.0, %v1843
    %1845 = vmatmul.bf16.gmra.mxu0 %v1725
    %v1846 = vpop.f32.mrf.mxu0
    %v1847 = vadd.f32 0.0, %v1846
    %v1848 = vpop.f32.mrf.mxu0
    %v1849 = vadd.f32 0.0, %v1848
    %1850 = vmatmul.bf16.gmra.mxu0 %v1726
    %v1851 = vpop.f32.mrf.mxu0
    %v1852 = vadd.f32 0.0, %v1851
    %v1853 = vpop.f32.mrf.mxu0
    %v1854 = vadd.f32 0.0, %v1853
    %1855 = vmatmul.bf16.gmra.mxu0 %v1727
    %v1856 = vpop.f32.mrf.mxu0
    %v1857 = vadd.f32 0.0, %v1856
    %v1858 = vpop.f32.mrf.mxu0
    %v1859 = vadd.f32 0.0, %v1858
    %1860 = vmatmul.bf16.gmra.mxu0 %v1728
    %v1861 = vpop.f32.mrf.mxu0
    %v1862 = vadd.f32 0.0, %v1861
    %v1863 = vpop.f32.mrf.mxu0
    %v1864 = vadd.f32 0.0, %v1863
    %1865 = vdwg.mxu0
    %1866 = vmatpush.bf16.msra.mxu0 %v1800
    %1867 = vmatpush.bf16.msra.mxu0 %v1798
    %1868 = vmatpush.bf16.msra.mxu0 %v1796
    %1869 = vmatpush.bf16.msra.mxu0 %v1794
    %1870 = vmatpush.bf16.msra.mxu0 %v1792
    %1871 = vmatpush.bf16.msra.mxu0 %v1790
    %1872 = vmatpush.bf16.msra.mxu0 %v1788
    %1873 = vmatpush.bf16.msra.mxu0 %v1786
    %1874 = vmatmul.bf16.gmra.mxu0 %v1721
    %v1875 = vpop.f32.mrf.mxu0
    %v1876 = vadd.f32 0.0, %v1875
    %v1877 = vpop.f32.mrf.mxu0
    %v1878 = vadd.f32 0.0, %v1877
    %1879 = vmatmul.bf16.gmra.mxu0 %v1722
    %v1880 = vpop.f32.mrf.mxu0
    %v1881 = vadd.f32 0.0, %v1880
    %v1882 = vpop.f32.mrf.mxu0
    %v1883 = vadd.f32 0.0, %v1882
    %1884 = vmatmul.bf16.gmra.mxu0 %v1723
    %v1885 = vpop.f32.mrf.mxu0
    %v1886 = vadd.f32 0.0, %v1885
    %v1887 = vpop.f32.mrf.mxu0
    %v1888 = vadd.f32 0.0, %v1887
    %1889 = vmatmul.bf16.gmra.mxu0 %v1724
    %v1890 = vpop.f32.mrf.mxu0
    %v1891 = vadd.f32 0.0, %v1890
    %v1892 = vpop.f32.mrf.mxu0
    %v1893 = vadd.f32 0.0, %v1892
    %1894 = vmatmul.bf16.gmra.mxu0 %v1725
    %v1895 = vpop.f32.mrf.mxu0
    %v1896 = vadd.f32 0.0, %v1895
    %v1897 = vpop.f32.mrf.mxu0
    %v1898 = vadd.f32 0.0, %v1897
    %1899 = vmatmul.bf16.gmra.mxu0 %v1726
    %v1900 = vpop.f32.mrf.mxu0
    %v1901 = vadd.f32 0.0, %v1900
    %v1902 = vpop.f32.mrf.mxu0
    %v1903 = vadd.f32 0.0, %v1902
    %1904 = vmatmul.bf16.gmra.mxu0 %v1727
    %v1905 = vpop.f32.mrf.mxu0
    %v1906 = vadd.f32 0.0, %v1905
    %v1907 = vpop.f32.mrf.mxu0
    %v1908 = vadd.f32 0.0, %v1907
    %1909 = vmatmul.bf16.gmra.mxu0 %v1728
    %v1910 = vpop.f32.mrf.mxu0
    %v1911 = vadd.f32 0.0, %v1910
    %v1912 = vpop.f32.mrf.mxu0
    %v1913 = vadd.f32 0.0, %v1912
    %1914 = vdwg.mxu0
    %v1931 = vunpack.c.l.b16 %v1625
    %v1932 = vunpack.c.l.b16 %v1626
    %v1933 = vunpack.c.l.b16 %v1627
    %v1934 = vunpack.c.l.b16 %v1628
    %v1935 = vunpack.c.l.b16 %v1629
    %v1936 = vunpack.c.l.b16 %v1630
    %v1937 = vunpack.c.l.b16 %v1631
    %v1938 = vunpack.c.l.b16 %v1632
    %v1939 = vunpack.c.l.b16 %v1633
    %v1940 = vunpack.c.l.b16 %v1634
    %v1941 = vunpack.c.l.b16 %v1635
    %v1942 = vunpack.c.l.b16 %v1636
    %v1943 = vunpack.c.l.b16 %v1637
    %v1944 = vunpack.c.l.b16 %v1638
    %v1945 = vunpack.c.l.b16 %v1639
    %v1946 = vunpack.c.l.b16 %v1640
    %v1947 = vpack.c.b16 %v1932, %v1931
    %v1948 = vpack.c.b16 %v1934, %v1933
    %v1949 = vpack.c.b16 %v1936, %v1935
    %v1950 = vpack.c.b16 %v1938, %v1937
    %v1951 = vpack.c.b16 %v1940, %v1939
    %v1952 = vpack.c.b16 %v1942, %v1941
    %v1953 = vpack.c.b16 %v1944, %v1943
    %v1954 = vpack.c.b16 %v1946, %v1945
    %v1979 = vunpack.c.l.b16 %v1641
    %v1980 = vunpack.c.h.b16 %v1641
    %v1981 = vunpack.c.l.b16 %v1642
    %v1982 = vunpack.c.h.b16 %v1642
    %v1983 = vunpack.c.l.b16 %v1643
    %v1984 = vunpack.c.h.b16 %v1643
    %v1985 = vunpack.c.l.b16 %v1644
    %v1986 = vunpack.c.h.b16 %v1644
    %v1987 = vunpack.c.l.b16 %v1645
    %v1988 = vunpack.c.h.b16 %v1645
    %v1989 = vunpack.c.l.b16 %v1646
    %v1990 = vunpack.c.h.b16 %v1646
    %v1991 = vunpack.c.l.b16 %v1647
    %v1992 = vunpack.c.h.b16 %v1647
    %v1993 = vunpack.c.l.b16 %v1648
    %v1994 = vunpack.c.h.b16 %v1648
    %v1995 = vunpack.c.l.b16 %v1649
    %v1996 = vunpack.c.h.b16 %v1649
    %v1997 = vunpack.c.l.b16 %v1650
    %v1998 = vunpack.c.h.b16 %v1650
    %v1999 = vunpack.c.l.b16 %v1651
    %v2000 = vunpack.c.h.b16 %v1651
    %v2001 = vunpack.c.l.b16 %v1652
    %v2002 = vunpack.c.h.b16 %v1652
    %v2003 = vunpack.c.l.b16 %v1653
    %v2004 = vunpack.c.h.b16 %v1653
    %v2005 = vunpack.c.l.b16 %v1654
    %v2006 = vunpack.c.h.b16 %v1654
    %v2007 = vunpack.c.l.b16 %v1655
    %v2008 = vunpack.c.h.b16 %v1655
    %v2009 = vunpack.c.l.b16 %v1656
    %v2010 = vunpack.c.h.b16 %v1656
    %v2011 = vpack.c.b16 %v1981, %v1979
    %v2012 = vpack.c.b16 %v1982, %v1980
    %v2013 = vpack.c.b16 %v1985, %v1983
    %v2014 = vpack.c.b16 %v1986, %v1984
    %v2015 = vpack.c.b16 %v1989, %v1987
    %v2016 = vpack.c.b16 %v1990, %v1988
    %v2017 = vpack.c.b16 %v1993, %v1991
    %v2018 = vpack.c.b16 %v1994, %v1992
    %v2019 = vpack.c.b16 %v1997, %v1995
    %v2020 = vpack.c.b16 %v1998, %v1996
    %v2021 = vpack.c.b16 %v2001, %v1999
    %v2022 = vpack.c.b16 %v2002, %v2000
    %v2023 = vpack.c.b16 %v2005, %v2003
    %v2024 = vpack.c.b16 %v2006, %v2004
    %v2025 = vpack.c.b16 %v2009, %v2007
    %v2026 = vpack.c.b16 %v2010, %v2008
    %2043 = vmatpush.bf16.msra.mxu0 %v2025
    %2044 = vmatpush.bf16.msra.mxu0 %v2023
    %2045 = vmatpush.bf16.msra.mxu0 %v2021
    %2046 = vmatpush.bf16.msra.mxu0 %v2019
    %2047 = vmatpush.bf16.msra.mxu0 %v2017
    %2048 = vmatpush.bf16.msra.mxu0 %v2015
    %2049 = vmatpush.bf16.msra.mxu0 %v2013
    %2050 = vmatpush.bf16.msra.mxu0 %v2011
    %2051 = vmatmul.bf16.gmra.mxu0 %v1947
    %v2052 = vpop.f32.mrf.mxu0
    %v2053 = vadd.f32 %v1827, %v2052
    %v2054 = vpop.f32.mrf.mxu0
    %v2055 = vadd.f32 %v1829, %v2054
    %2056 = vmatmul.bf16.gmra.mxu0 %v1948
    %v2057 = vpop.f32.mrf.mxu0
    %v2058 = vadd.f32 %v1832, %v2057
    %v2059 = vpop.f32.mrf.mxu0
    %v2060 = vadd.f32 %v1834, %v2059
    %2061 = vmatmul.bf16.gmra.mxu0 %v1949
    %v2062 = vpop.f32.mrf.mxu0
    %v2063 = vadd.f32 %v1837, %v2062
    %v2064 = vpop.f32.mrf.mxu0
    %v2065 = vadd.f32 %v1839, %v2064
    %2066 = vmatmul.bf16.gmra.mxu0 %v1950
    %v2067 = vpop.f32.mrf.mxu0
    %v2068 = vadd.f32 %v1842, %v2067
    %v2069 = vpop.f32.mrf.mxu0
    %v2070 = vadd.f32 %v1844, %v2069
    %2071 = vmatmul.bf16.gmra.mxu0 %v1951
    %v2072 = vpop.f32.mrf.mxu0
    %v2073 = vadd.f32 %v1847, %v2072
    %v2074 = vpop.f32.mrf.mxu0
    %v2075 = vadd.f32 %v1849, %v2074
    %2076 = vmatmul.bf16.gmra.mxu0 %v1952
    %v2077 = vpop.f32.mrf.mxu0
    %v2078 = vadd.f32 %v1852, %v2077
    %v2079 = vpop.f32.mrf.mxu0
    %v2080 = vadd.f32 %v1854, %v2079
    %2081 = vmatmul.bf16.gmra.mxu0 %v1953
    %v2082 = vpop.f32.mrf.mxu0
    %v2083 = vadd.f32 %v1857, %v2082
    %v2084 = vpop.f32.mrf.mxu0
    %v2085 = vadd.f32 %v1859, %v2084
    %2086 = vmatmul.bf16.gmra.mxu0 %v1954
    %v2087 = vpop.f32.mrf.mxu0
    %v2088 = vadd.f32 %v1862, %v2087
    %v2089 = vpop.f32.mrf.mxu0
    %v2090 = vadd.f32 %v1864, %v2089
    %2091 = vdwg.mxu0
    %2092 = vmatpush.bf16.msra.mxu0 %v2026
    %2093 = vmatpush.bf16.msra.mxu0 %v2024
    %2094 = vmatpush.bf16.msra.mxu0 %v2022
    %2095 = vmatpush.bf16.msra.mxu0 %v2020
    %2096 = vmatpush.bf16.msra.mxu0 %v2018
    %2097 = vmatpush.bf16.msra.mxu0 %v2016
    %2098 = vmatpush.bf16.msra.mxu0 %v2014
    %2099 = vmatpush.bf16.msra.mxu0 %v2012
    %2100 = vmatmul.bf16.gmra.mxu0 %v1947
    %v2101 = vpop.f32.mrf.mxu0
    %v2102 = vadd.f32 %v1876, %v2101
    %v2103 = vpop.f32.mrf.mxu0
    %v2104 = vadd.f32 %v1878, %v2103
    %2105 = vmatmul.bf16.gmra.mxu0 %v1948
    %v2106 = vpop.f32.mrf.mxu0
    %v2107 = vadd.f32 %v1881, %v2106
    %v2108 = vpop.f32.mrf.mxu0
    %v2109 = vadd.f32 %v1883, %v2108
    %2110 = vmatmul.bf16.gmra.mxu0 %v1949
    %v2111 = vpop.f32.mrf.mxu0
    %v2112 = vadd.f32 %v1886, %v2111
    %v2113 = vpop.f32.mrf.mxu0
    %v2114 = vadd.f32 %v1888, %v2113
    %2115 = vmatmul.bf16.gmra.mxu0 %v1950
    %v2116 = vpop.f32.mrf.mxu0
    %v2117 = vadd.f32 %v1891, %v2116
    %v2118 = vpop.f32.mrf.mxu0
    %v2119 = vadd.f32 %v1893, %v2118
    %2120 = vmatmul.bf16.gmra.mxu0 %v1951
    %v2121 = vpop.f32.mrf.mxu0
    %v2122 = vadd.f32 %v1896, %v2121
    %v2123 = vpop.f32.mrf.mxu0
    %v2124 = vadd.f32 %v1898, %v2123
    %2125 = vmatmul.bf16.gmra.mxu0 %v1952
    %v2126 = vpop.f32.mrf.mxu0
    %v2127 = vadd.f32 %v1901, %v2126
    %v2128 = vpop.f32.mrf.mxu0
    %v2129 = vadd.f32 %v1903, %v2128
    %2130 = vmatmul.bf16.gmra.mxu0 %v1953
    %v2131 = vpop.f32.mrf.mxu0
    %v2132 = vadd.f32 %v1906, %v2131
    %v2133 = vpop.f32.mrf.mxu0
    %v2134 = vadd.f32 %v1908, %v2133
    %2135 = vmatmul.bf16.gmra.mxu0 %v1954
    %v2136 = vpop.f32.mrf.mxu0
    %v2137 = vadd.f32 %v1911, %v2136
    %v2138 = vpop.f32.mrf.mxu0
    %v2139 = vadd.f32 %v1913, %v2138
    %2140 = vdwg.mxu0
    %s2141 = scalar_lea.vmem %s6, 2
    %v2142 = vld [vmem:[%s2141] sm:$0x3]
    %v2144 = vperm.slane %v2142, 0
    %v2145 = vperm.slane %v2142, 1
    %v2148 = vadd.f32 %v2053, %v2144
    %v2149 = vadd.f32 %v2102, %v2145
    %v2150 = vadd.f32 %v2055, %v2144
    %v2151 = vadd.f32 %v2104, %v2145
    %v2152 = vadd.f32 %v2058, %v2144
    %v2153 = vadd.f32 %v2107, %v2145
    %v2154 = vadd.f32 %v2060, %v2144
    %v2155 = vadd.f32 %v2109, %v2145
    %v2156 = vadd.f32 %v2063, %v2144
    %v2157 = vadd.f32 %v2112, %v2145
    %v2158 = vadd.f32 %v2065, %v2144
    %v2159 = vadd.f32 %v2114, %v2145
    %v2160 = vadd.f32 %v2068, %v2144
    %v2161 = vadd.f32 %v2117, %v2145
    %v2162 = vadd.f32 %v2070, %v2144
    %v2163 = vadd.f32 %v2119, %v2145
    %v2164 = vadd.f32 %v2073, %v2144
    %v2165 = vadd.f32 %v2122, %v2145
    %v2166 = vadd.f32 %v2075, %v2144
    %v2167 = vadd.f32 %v2124, %v2145
    %v2168 = vadd.f32 %v2078, %v2144
    %v2169 = vadd.f32 %v2127, %v2145
    %v2170 = vadd.f32 %v2080, %v2144
    %v2171 = vadd.f32 %v2129, %v2145
    %v2172 = vadd.f32 %v2083, %v2144
    %v2173 = vadd.f32 %v2132, %v2145
    %v2174 = vadd.f32 %v2085, %v2144
    %v2175 = vadd.f32 %v2134, %v2145
    %v2176 = vadd.f32 %v2088, %v2144
    %v2177 = vadd.f32 %v2137, %v2145
    %v2178 = vadd.f32 %v2090, %v2144
    %v2179 = vadd.f32 %v2139, %v2145
    %v2180 = vpack.c.bf16 %v2149, %v2148
    %v2181 = vpack.c.bf16 %v2151, %v2150
    %v2182 = vpack.c.bf16 %v2153, %v2152
    %v2183 = vpack.c.bf16 %v2155, %v2154
    %v2184 = vpack.c.bf16 %v2157, %v2156
    %v2185 = vpack.c.bf16 %v2159, %v2158
    %v2186 = vpack.c.bf16 %v2161, %v2160
    %v2187 = vpack.c.bf16 %v2163, %v2162
    %v2188 = vpack.c.bf16 %v2165, %v2164
    %v2189 = vpack.c.bf16 %v2167, %v2166
    %v2190 = vpack.c.bf16 %v2169, %v2168
    %v2191 = vpack.c.bf16 %v2171, %v2170
    %v2192 = vpack.c.bf16 %v2173, %v2172
    %v2193 = vpack.c.bf16 %v2175, %v2174
    %v2194 = vpack.c.bf16 %v2177, %v2176
    %v2195 = vpack.c.bf16 %v2179, %v2178
    %2196 = vst [vmem:[#allocation3] sm:$0xff] %v2180
    %2197 = vst [vmem:[#allocation3 + $0x8] sm:$0xff] %v2181
    %2198 = vst [vmem:[#allocation3 + $0x10] sm:$0xff] %v2182
    %2199 = vst [vmem:[#allocation3 + $0x18] sm:$0xff] %v2183
    %2200 = vst [vmem:[#allocation3 + $0x20] sm:$0xff] %v2184
    %2201 = vst [vmem:[#allocation3 + $0x28] sm:$0xff] %v2185
    %2202 = vst [vmem:[#allocation3 + $0x30] sm:$0xff] %v2186
    %2203 = vst [vmem:[#allocation3 + $0x38] sm:$0xff] %v2187
    %2204 = vst [vmem:[#allocation3 + $0x40] sm:$0xff] %v2188
    %2205 = vst [vmem:[#allocation3 + $0x48] sm:$0xff] %v2189
    %2206 = vst [vmem:[#allocation3 + $0x50] sm:$0xff] %v2190
    %2207 = vst [vmem:[#allocation3 + $0x58] sm:$0xff] %v2191
    %2208 = vst [vmem:[#allocation3 + $0x60] sm:$0xff] %v2192
    %2209 = vst [vmem:[#allocation3 + $0x68] sm:$0xff] %v2193
    %2210 = vst [vmem:[#allocation3 + $0x70] sm:$0xff] %v2194
    %2211 = vst [vmem:[#allocation3 + $0x78] sm:$0xff] %v2195
    %s2212 = scalar_lea.vmem [#allocation6], 512
    %v2213 = vld [vmem:[%s2212] sm:$0xff]
    %v2214 = vld [vmem:[%s2212 + $0x8] sm:$0xff]
    %v2215 = vld [vmem:[%s2212 + $0x10] sm:$0xff]
    %v2216 = vld [vmem:[%s2212 + $0x18] sm:$0xff]
    %v2217 = vld [vmem:[%s2212 + $0x20] sm:$0xff]
    %v2218 = vld [vmem:[%s2212 + $0x28] sm:$0xff]
    %v2219 = vld [vmem:[%s2212 + $0x30] sm:$0xff]
    %v2220 = vld [vmem:[%s2212 + $0x38] sm:$0xff]
    %v2221 = vld [vmem:[%s2212 + $0x40] sm:$0xff]
    %v2222 = vld [vmem:[%s2212 + $0x48] sm:$0xff]
    %v2223 = vld [vmem:[%s2212 + $0x50] sm:$0xff]
    %v2224 = vld [vmem:[%s2212 + $0x58] sm:$0xff]
    %v2225 = vld [vmem:[%s2212 + $0x60] sm:$0xff]
    %v2226 = vld [vmem:[%s2212 + $0x68] sm:$0xff]
    %v2227 = vld [vmem:[%s2212 + $0x70] sm:$0xff]
    %v2228 = vld [vmem:[%s2212 + $0x78] sm:$0xff]
    %v2229 = vld [vmem:[%s2212 + $0x80] sm:$0xff]
    %v2230 = vld [vmem:[%s2212 + $0x88] sm:$0xff]
    %v2231 = vld [vmem:[%s2212 + $0x90] sm:$0xff]
    %v2232 = vld [vmem:[%s2212 + $0x98] sm:$0xff]
    %v2233 = vld [vmem:[%s2212 + $0xa0] sm:$0xff]
    %v2234 = vld [vmem:[%s2212 + $0xa8] sm:$0xff]
    %v2235 = vld [vmem:[%s2212 + $0xb0] sm:$0xff]
    %v2236 = vld [vmem:[%s2212 + $0xb8] sm:$0xff]
    %v2237 = vld [vmem:[%s2212 + $0xc0] sm:$0xff]
    %v2238 = vld [vmem:[%s2212 + $0xc8] sm:$0xff]
    %v2239 = vld [vmem:[%s2212 + $0xd0] sm:$0xff]
    %v2240 = vld [vmem:[%s2212 + $0xd8] sm:$0xff]
    %v2241 = vld [vmem:[%s2212 + $0xe0] sm:$0xff]
    %v2242 = vld [vmem:[%s2212 + $0xe8] sm:$0xff]
    %v2243 = vld [vmem:[%s2212 + $0xf0] sm:$0xff]
    %v2244 = vld [vmem:[%s2212 + $0xf8] sm:$0xff]
    %v2245 = vld [vmem:[%s2212 + $0x100] sm:$0xff]
    %v2246 = vld [vmem:[%s2212 + $0x108] sm:$0xff]
    %v2247 = vld [vmem:[%s2212 + $0x110] sm:$0xff]
    %v2248 = vld [vmem:[%s2212 + $0x118] sm:$0xff]
    %v2249 = vld [vmem:[%s2212 + $0x120] sm:$0xff]
    %v2250 = vld [vmem:[%s2212 + $0x128] sm:$0xff]
    %v2251 = vld [vmem:[%s2212 + $0x130] sm:$0xff]
    %v2252 = vld [vmem:[%s2212 + $0x138] sm:$0xff]
    %v2253 = vld [vmem:[%s2212 + $0x140] sm:$0xff]
    %v2254 = vld [vmem:[%s2212 + $0x148] sm:$0xff]
    %v2255 = vld [vmem:[%s2212 + $0x150] sm:$0xff]
    %v2256 = vld [vmem:[%s2212 + $0x158] sm:$0xff]
    %v2257 = vld [vmem:[%s2212 + $0x160] sm:$0xff]
    %v2258 = vld [vmem:[%s2212 + $0x168] sm:$0xff]
    %v2259 = vld [vmem:[%s2212 + $0x170] sm:$0xff]
    %v2260 = vld [vmem:[%s2212 + $0x178] sm:$0xff]
    %v2261 = vld [vmem:[%s2212 + $0x180] sm:$0xff]
    %v2262 = vld [vmem:[%s2212 + $0x188] sm:$0xff]
    %v2263 = vld [vmem:[%s2212 + $0x190] sm:$0xff]
    %v2264 = vld [vmem:[%s2212 + $0x198] sm:$0xff]
    %v2265 = vld [vmem:[%s2212 + $0x1a0] sm:$0xff]
    %v2266 = vld [vmem:[%s2212 + $0x1a8] sm:$0xff]
    %v2267 = vld [vmem:[%s2212 + $0x1b0] sm:$0xff]
    %v2268 = vld [vmem:[%s2212 + $0x1b8] sm:$0xff]
    %v2269 = vld [vmem:[%s2212 + $0x1c0] sm:$0xff]
    %v2270 = vld [vmem:[%s2212 + $0x1c8] sm:$0xff]
    %v2271 = vld [vmem:[%s2212 + $0x1d0] sm:$0xff]
    %v2272 = vld [vmem:[%s2212 + $0x1d8] sm:$0xff]
    %v2273 = vld [vmem:[%s2212 + $0x1e0] sm:$0xff]
    %v2274 = vld [vmem:[%s2212 + $0x1e8] sm:$0xff]
    %v2275 = vld [vmem:[%s2212 + $0x1f0] sm:$0xff]
    %v2276 = vld [vmem:[%s2212 + $0x1f8] sm:$0xff]
    %v2277 = vld [vmem:[%s644] sm:$0xff]
    %v2278 = vld [vmem:[%s644 + $0x8] sm:$0xff]
    %v2279 = vld [vmem:[%s649] sm:$0xff]
    %v2280 = vld [vmem:[%s649 + $0x8] sm:$0xff]
    %v2281 = vsel %vm652, %v2277, %v2279
    %v2282 = vsel %vm652, %v2278, %v2280
    %v2283 = vunpack.c.l.bf16 %v2281
    %v2284 = vunpack.c.h.bf16 %v2281
    %v2285 = vunpack.c.l.bf16 %v2282
    %v2286 = vunpack.c.h.bf16 %v2282
    %2287 = vmatpush.msra.mxu0 %v2243
    %2288 = vmatpush.msra.mxu0 %v2241
    %2289 = vmatpush.msra.mxu0 %v2239
    %2290 = vmatpush.msra.mxu0 %v2237
    %2291 = vmatpush.msra.mxu0 %v2235
    %2292 = vmatpush.msra.mxu0 %v2233
    %2293 = vmatpush.msra.mxu0 %v2231
    %2294 = vmatpush.msra.mxu0 %v2229
    %2295 = vmatpush.msra.mxu0 %v2227
    %2296 = vmatpush.msra.mxu0 %v2225
    %2297 = vmatpush.msra.mxu0 %v2223
    %2298 = vmatpush.msra.mxu0 %v2221
    %2299 = vmatpush.msra.mxu0 %v2219
    %2300 = vmatpush.msra.mxu0 %v2217
    %2301 = vmatpush.msra.mxu0 %v2215
    %2302 = vmatpush.msra.mxu0 %v2213
    %2303 = vmatmul.f32.gmra.mxu0 0.0
    %v2304 = vpop.f32.mrf.mxu0
    %v2305 = vadd.f32 0.0, %v2304
    %2306 = vmatmul.f32.gmra.mxu0 0.0
    %v2307 = vpop.f32.mrf.mxu0
    %v2308 = vadd.f32 0.0, %v2307
    %2309 = vdwg.mxu0
    %2310 = vmatpush.msra.mxu0 %v2275
    %2311 = vmatpush.msra.mxu0 %v2273
    %2312 = vmatpush.msra.mxu0 %v2271
    %2313 = vmatpush.msra.mxu0 %v2269
    %2314 = vmatpush.msra.mxu0 %v2267
    %2315 = vmatpush.msra.mxu0 %v2265
    %2316 = vmatpush.msra.mxu0 %v2263
    %2317 = vmatpush.msra.mxu0 %v2261
    %2318 = vmatpush.msra.mxu0 %v2259
    %2319 = vmatpush.msra.mxu0 %v2257
    %2320 = vmatpush.msra.mxu0 %v2255
    %2321 = vmatpush.msra.mxu0 %v2253
    %2322 = vmatpush.msra.mxu0 %v2251
    %2323 = vmatpush.msra.mxu0 %v2249
    %2324 = vmatpush.msra.mxu0 %v2247
    %2325 = vmatpush.msra.mxu0 %v2245
    %2326 = vmatmul.f32.gmra.mxu0 0.0
    %v2327 = vpop.f32.mrf.mxu0
    %v2328 = vadd.f32 %v2305, %v2327
    %2329 = vmatmul.f32.gmra.mxu0 0.0
    %v2330 = vpop.f32.mrf.mxu0
    %v2331 = vadd.f32 %v2308, %v2330
    %2332 = vdwg.mxu0
    %2333 = vmatpush.msra.mxu0 %v2244
    %2334 = vmatpush.msra.mxu0 %v2242
    %2335 = vmatpush.msra.mxu0 %v2240
    %2336 = vmatpush.msra.mxu0 %v2238
    %2337 = vmatpush.msra.mxu0 %v2236
    %2338 = vmatpush.msra.mxu0 %v2234
    %2339 = vmatpush.msra.mxu0 %v2232
    %2340 = vmatpush.msra.mxu0 %v2230
    %2341 = vmatpush.msra.mxu0 %v2228
    %2342 = vmatpush.msra.mxu0 %v2226
    %2343 = vmatpush.msra.mxu0 %v2224
    %2344 = vmatpush.msra.mxu0 %v2222
    %2345 = vmatpush.msra.mxu0 %v2220
    %2346 = vmatpush.msra.mxu0 %v2218
    %2347 = vmatpush.msra.mxu0 %v2216
    %2348 = vmatpush.msra.mxu0 %v2214
    %2349 = vmatmul.f32.gmra.mxu0 0.0
    %v2350 = vpop.f32.mrf.mxu0
    %v2351 = vadd.f32 0.0, %v2350
    %2352 = vmatmul.f32.gmra.mxu0 0.0
    %v2353 = vpop.f32.mrf.mxu0
    %v2354 = vadd.f32 0.0, %v2353
    %2355 = vdwg.mxu0
    %2356 = vmatpush.msra.mxu0 %v2276
    %2357 = vmatpush.msra.mxu0 %v2274
    %2358 = vmatpush.msra.mxu0 %v2272
    %2359 = vmatpush.msra.mxu0 %v2270
    %2360 = vmatpush.msra.mxu0 %v2268
    %2361 = vmatpush.msra.mxu0 %v2266
    %2362 = vmatpush.msra.mxu0 %v2264
    %2363 = vmatpush.msra.mxu0 %v2262
    %2364 = vmatpush.msra.mxu0 %v2260
    %2365 = vmatpush.msra.mxu0 %v2258
    %2366 = vmatpush.msra.mxu0 %v2256
    %2367 = vmatpush.msra.mxu0 %v2254
    %2368 = vmatpush.msra.mxu0 %v2252
    %2369 = vmatpush.msra.mxu0 %v2250
    %2370 = vmatpush.msra.mxu0 %v2248
    %2371 = vmatpush.msra.mxu0 %v2246
    %2372 = vmatmul.f32.gmra.mxu0 0.0
    %v2373 = vpop.f32.mrf.mxu0
    %v2374 = vadd.f32 %v2351, %v2373
    %2375 = vmatmul.f32.gmra.mxu0 0.0
    %v2376 = vpop.f32.mrf.mxu0
    %v2377 = vadd.f32 %v2354, %v2376
    %2378 = vdwg.mxu0
    %v2379 = vadd.f32 %v2283, %v2328
    %v2380 = vadd.f32 %v2284, %v2374
    %v2381 = vadd.f32 %v2285, %v2331
    %v2382 = vadd.f32 %v2286, %v2377
    %v2383 = vtanh.pop %v2379
    %v2384 = vtanh.pop %v2380
    %v2385 = vtanh.pop %v2381
    %v2386 = vtanh.pop %v2382
    %v2387 = vpack.c.bf16 %v2383, %v2383
    %v2388 = vpack.c.bf16 %v2385, %v2385
    %2389 = vst [vmem:[#allocation4] sm:$0xf] %v2387
    %2390 = vst [vmem:[#allocation4 + $0x4] sm:$0xf] %v2388
    %v2391 = vpack.c.bf16 %v2384, %v2384
    %v2392 = vpack.c.bf16 %v2386, %v2386
    %2393 = vst [vmem:[%s765] sm:$0xf] %v2391
    %2394 = vst [vmem:[%s765 + $0x4] sm:$0xf] %v2392
    %v2395 = vld [vmem:[%s770] sm:$0xff]
    %v2396 = vld [vmem:[%s770 + $0x8] sm:$0xff]
    %v2397 = vld [vmem:[%s775] sm:$0xff]
    %v2398 = vld [vmem:[%s775 + $0x8] sm:$0xff]
    %v2399 = vsel %vm652, %v2395, %v2397
    %v2400 = vsel %vm652, %v2396, %v2398
    %v2401 = vunpack.c.l.bf16 %v2399
    %v2402 = vunpack.c.h.bf16 %v2399
    %v2403 = vunpack.c.l.bf16 %v2400
    %v2404 = vunpack.c.h.bf16 %v2400
    %2405 = vmatpush.msra.mxu0 %v2243
    %2406 = vmatpush.msra.mxu0 %v2241
    %2407 = vmatpush.msra.mxu0 %v2239
    %2408 = vmatpush.msra.mxu0 %v2237
    %2409 = vmatpush.msra.mxu0 %v2235
    %2410 = vmatpush.msra.mxu0 %v2233
    %2411 = vmatpush.msra.mxu0 %v2231
    %2412 = vmatpush.msra.mxu0 %v2229
    %2413 = vmatpush.msra.mxu0 %v2227
    %2414 = vmatpush.msra.mxu0 %v2225
    %2415 = vmatpush.msra.mxu0 %v2223
    %2416 = vmatpush.msra.mxu0 %v2221
    %2417 = vmatpush.msra.mxu0 %v2219
    %2418 = vmatpush.msra.mxu0 %v2217
    %2419 = vmatpush.msra.mxu0 %v2215
    %2420 = vmatpush.msra.mxu0 %v2213
    %2421 = vmatmul.f32.gmra.mxu0 %v2383
    %v2422 = vpop.f32.mrf.mxu0
    %v2423 = vadd.f32 0.0, %v2422
    %2424 = vmatmul.f32.gmra.mxu0 %v2385
    %v2425 = vpop.f32.mrf.mxu0
    %v2426 = vadd.f32 0.0, %v2425
    %2427 = vdwg.mxu0
    %2428 = vmatpush.msra.mxu0 %v2275
    %2429 = vmatpush.msra.mxu0 %v2273
    %2430 = vmatpush.msra.mxu0 %v2271
    %2431 = vmatpush.msra.mxu0 %v2269
    %2432 = vmatpush.msra.mxu0 %v2267
    %2433 = vmatpush.msra.mxu0 %v2265
    %2434 = vmatpush.msra.mxu0 %v2263
    %2435 = vmatpush.msra.mxu0 %v2261
    %2436 = vmatpush.msra.mxu0 %v2259
    %2437 = vmatpush.msra.mxu0 %v2257
    %2438 = vmatpush.msra.mxu0 %v2255
    %2439 = vmatpush.msra.mxu0 %v2253
    %2440 = vmatpush.msra.mxu0 %v2251
    %2441 = vmatpush.msra.mxu0 %v2249
    %2442 = vmatpush.msra.mxu0 %v2247
    %2443 = vmatpush.msra.mxu0 %v2245
    %2444 = vmatmul.f32.gmra.mxu0 %v2384
    %v2445 = vpop.f32.mrf.mxu0
    %v2446 = vadd.f32 %v2423, %v2445
    %2447 = vmatmul.f32.gmra.mxu0 %v2386
    %v2448 = vpop.f32.mrf.mxu0
    %v2449 = vadd.f32 %v2426, %v2448
    %2450 = vdwg.mxu0
    %2451 = vmatpush.msra.mxu0 %v2244
    %2452 = vmatpush.msra.mxu0 %v2242
    %2453 = vmatpush.msra.mxu0 %v2240
    %2454 = vmatpush.msra.mxu0 %v2238
    %2455 = vmatpush.msra.mxu0 %v2236
    %2456 = vmatpush.msra.mxu0 %v2234
    %2457 = vmatpush.msra.mxu0 %v2232
    %2458 = vmatpush.msra.mxu0 %v2230
    %2459 = vmatpush.msra.mxu0 %v2228
    %2460 = vmatpush.msra.mxu0 %v2226
    %2461 = vmatpush.msra.mxu0 %v2224
    %2462 = vmatpush.msra.mxu0 %v2222
    %2463 = vmatpush.msra.mxu0 %v2220
    %2464 = vmatpush.msra.mxu0 %v2218
    %2465 = vmatpush.msra.mxu0 %v2216
    %2466 = vmatpush.msra.mxu0 %v2214
    %2467 = vmatmul.f32.gmra.mxu0 %v2383
    %v2468 = vpop.f32.mrf.mxu0
    %v2469 = vadd.f32 0.0, %v2468
    %2470 = vmatmul.f32.gmra.mxu0 %v2385
    %v2471 = vpop.f32.mrf.mxu0
    %v2472 = vadd.f32 0.0, %v2471
    %2473 = vdwg.mxu0
    %2474 = vmatpush.msra.mxu0 %v2276
    %2475 = vmatpush.msra.mxu0 %v2274
    %2476 = vmatpush.msra.mxu0 %v2272
    %2477 = vmatpush.msra.mxu0 %v2270
    %2478 = vmatpush.msra.mxu0 %v2268
    %2479 = vmatpush.msra.mxu0 %v2266
    %2480 = vmatpush.msra.mxu0 %v2264
    %2481 = vmatpush.msra.mxu0 %v2262
    %2482 = vmatpush.msra.mxu0 %v2260
    %2483 = vmatpush.msra.mxu0 %v2258
    %2484 = vmatpush.msra.mxu0 %v2256
    %2485 = vmatpush.msra.mxu0 %v2254
    %2486 = vmatpush.msra.mxu0 %v2252
    %2487 = vmatpush.msra.mxu0 %v2250
    %2488 = vmatpush.msra.mxu0 %v2248
    %2489 = vmatpush.msra.mxu0 %v2246
    %2490 = vmatmul.f32.gmra.mxu0 %v2384
    %v2491 = vpop.f32.mrf.mxu0
    %v2492 = vadd.f32 %v2469, %v2491
    %2493 = vmatmul.f32.gmra.mxu0 %v2386
    %v2494 = vpop.f32.mrf.mxu0
    %v2495 = vadd.f32 %v2472, %v2494
    %2496 = vdwg.mxu0
    %v2497 = vadd.f32 %v2401, %v2446
    %v2498 = vadd.f32 %v2402, %v2492
    %v2499 = vadd.f32 %v2403, %v2449
    %v2500 = vadd.f32 %v2404, %v2495
    %v2501 = vtanh.pop %v2497
    %v2502 = vtanh.pop %v2498
    %v2503 = vtanh.pop %v2499
    %v2504 = vtanh.pop %v2500
    %v2505 = vpack.c.bf16 %v2501, %v2501
    %v2506 = vpack.c.bf16 %v2503, %v2503
    %2507 = vst [vmem:[%s886] sm:$0xf] %v2505
    %2508 = vst [vmem:[%s886 + $0x4] sm:$0xf] %v2506
    %v2509 = vpack.c.bf16 %v2502, %v2502
    %v2510 = vpack.c.bf16 %v2504, %v2504
    %2511 = vst [vmem:[%s891] sm:$0xf] %v2509
    %2512 = vst [vmem:[%s891 + $0x4] sm:$0xf] %v2510
    %v2513 = vld [vmem:[%s896] sm:$0xff]
    %v2514 = vld [vmem:[%s896 + $0x8] sm:$0xff]
    %v2515 = vld [vmem:[%s901] sm:$0xff]
    %v2516 = vld [vmem:[%s901 + $0x8] sm:$0xff]
    %v2517 = vsel %vm652, %v2513, %v2515
    %v2518 = vsel %vm652, %v2514, %v2516
    %v2519 = vunpack.c.l.bf16 %v2517
    %v2520 = vunpack.c.h.bf16 %v2517
    %v2521 = vunpack.c.l.bf16 %v2518
    %v2522 = vunpack.c.h.bf16 %v2518
    %2523 = vmatpush.msra.mxu0 %v2243
    %2524 = vmatpush.msra.mxu0 %v2241
    %2525 = vmatpush.msra.mxu0 %v2239
    %2526 = vmatpush.msra.mxu0 %v2237
    %2527 = vmatpush.msra.mxu0 %v2235
    %2528 = vmatpush.msra.mxu0 %v2233
    %2529 = vmatpush.msra.mxu0 %v2231
    %2530 = vmatpush.msra.mxu0 %v2229
    %2531 = vmatpush.msra.mxu0 %v2227
    %2532 = vmatpush.msra.mxu0 %v2225
    %2533 = vmatpush.msra.mxu0 %v2223
    %2534 = vmatpush.msra.mxu0 %v2221
    %2535 = vmatpush.msra.mxu0 %v2219
    %2536 = vmatpush.msra.mxu0 %v2217
    %2537 = vmatpush.msra.mxu0 %v2215
    %2538 = vmatpush.msra.mxu0 %v2213
    %2539 = vmatmul.f32.gmra.mxu0 %v2501
    %v2540 = vpop.f32.mrf.mxu0
    %v2541 = vadd.f32 0.0, %v2540
    %2542 = vmatmul.f32.gmra.mxu0 %v2503
    %v2543 = vpop.f32.mrf.mxu0
    %v2544 = vadd.f32 0.0, %v2543
    %2545 = vdwg.mxu0
    %2546 = vmatpush.msra.mxu0 %v2275
    %2547 = vmatpush.msra.mxu0 %v2273
    %2548 = vmatpush.msra.mxu0 %v2271
    %2549 = vmatpush.msra.mxu0 %v2269
    %2550 = vmatpush.msra.mxu0 %v2267
    %2551 = vmatpush.msra.mxu0 %v2265
    %2552 = vmatpush.msra.mxu0 %v2263
    %2553 = vmatpush.msra.mxu0 %v2261
    %2554 = vmatpush.msra.mxu0 %v2259
    %2555 = vmatpush.msra.mxu0 %v2257
    %2556 = vmatpush.msra.mxu0 %v2255
    %2557 = vmatpush.msra.mxu0 %v2253
    %2558 = vmatpush.msra.mxu0 %v2251
    %2559 = vmatpush.msra.mxu0 %v2249
    %2560 = vmatpush.msra.mxu0 %v2247
    %2561 = vmatpush.msra.mxu0 %v2245
    %2562 = vmatmul.f32.gmra.mxu0 %v2502
    %v2563 = vpop.f32.mrf.mxu0
    %v2564 = vadd.f32 %v2541, %v2563
    %2565 = vmatmul.f32.gmra.mxu0 %v2504
    %v2566 = vpop.f32.mrf.mxu0
    %v2567 = vadd.f32 %v2544, %v2566
    %2568 = vdwg.mxu0
    %2569 = vmatpush.msra.mxu0 %v2244
    %2570 = vmatpush.msra.mxu0 %v2242
    %2571 = vmatpush.msra.mxu0 %v2240
    %2572 = vmatpush.msra.mxu0 %v2238
    %2573 = vmatpush.msra.mxu0 %v2236
    %2574 = vmatpush.msra.mxu0 %v2234
    %2575 = vmatpush.msra.mxu0 %v2232
    %2576 = vmatpush.msra.mxu0 %v2230
    %2577 = vmatpush.msra.mxu0 %v2228
    %2578 = vmatpush.msra.mxu0 %v2226
    %2579 = vmatpush.msra.mxu0 %v2224
    %2580 = vmatpush.msra.mxu0 %v2222
    %2581 = vmatpush.msra.mxu0 %v2220
    %2582 = vmatpush.msra.mxu0 %v2218
    %2583 = vmatpush.msra.mxu0 %v2216
    %2584 = vmatpush.msra.mxu0 %v2214
    %2585 = vmatmul.f32.gmra.mxu0 %v2501
    %v2586 = vpop.f32.mrf.mxu0
    %v2587 = vadd.f32 0.0, %v2586
    %2588 = vmatmul.f32.gmra.mxu0 %v2503
    %v2589 = vpop.f32.mrf.mxu0
    %v2590 = vadd.f32 0.0, %v2589
    %2591 = vdwg.mxu0
    %2592 = vmatpush.msra.mxu0 %v2276
    %2593 = vmatpush.msra.mxu0 %v2274
    %2594 = vmatpush.msra.mxu0 %v2272
    %2595 = vmatpush.msra.mxu0 %v2270
    %2596 = vmatpush.msra.mxu0 %v2268
    %2597 = vmatpush.msra.mxu0 %v2266
    %2598 = vmatpush.msra.mxu0 %v2264
    %2599 = vmatpush.msra.mxu0 %v2262
    %2600 = vmatpush.msra.mxu0 %v2260
    %2601 = vmatpush.msra.mxu0 %v2258
    %2602 = vmatpush.msra.mxu0 %v2256
    %2603 = vmatpush.msra.mxu0 %v2254
    %2604 = vmatpush.msra.mxu0 %v2252
    %2605 = vmatpush.msra.mxu0 %v2250
    %2606 = vmatpush.msra.mxu0 %v2248
    %2607 = vmatpush.msra.mxu0 %v2246
    %2608 = vmatmul.f32.gmra.mxu0 %v2502
    %v2609 = vpop.f32.mrf.mxu0
    %v2610 = vadd.f32 %v2587, %v2609
    %2611 = vmatmul.f32.gmra.mxu0 %v2504
    %v2612 = vpop.f32.mrf.mxu0
    %v2613 = vadd.f32 %v2590, %v2612
    %2614 = vdwg.mxu0
    %v2615 = vadd.f32 %v2519, %v2564
    %v2616 = vadd.f32 %v2520, %v2610
    %v2617 = vadd.f32 %v2521, %v2567
    %v2618 = vadd.f32 %v2522, %v2613
    %v2619 = vtanh.pop %v2615
    %v2620 = vtanh.pop %v2616
    %v2621 = vtanh.pop %v2617
    %v2622 = vtanh.pop %v2618
    %v2623 = vpack.c.bf16 %v2619, %v2619
    %v2624 = vpack.c.bf16 %v2621, %v2621
    %2625 = vst [vmem:[%s1012] sm:$0xf] %v2623
    %2626 = vst [vmem:[%s1012 + $0x4] sm:$0xf] %v2624
    %v2627 = vpack.c.bf16 %v2620, %v2620
    %v2628 = vpack.c.bf16 %v2622, %v2622
    %2629 = vst [vmem:[%s1017] sm:$0xf] %v2627
    %2630 = vst [vmem:[%s1017 + $0x4] sm:$0xf] %v2628
    %v2631 = vld [vmem:[%s1022] sm:$0xff]
    %v2632 = vld [vmem:[%s1022 + $0x8] sm:$0xff]
    %v2633 = vld [vmem:[%s1027] sm:$0xff]
    %v2634 = vld [vmem:[%s1027 + $0x8] sm:$0xff]
    %v2635 = vsel %vm652, %v2631, %v2633
    %v2636 = vsel %vm652, %v2632, %v2634
    %v2637 = vunpack.c.l.bf16 %v2635
    %v2638 = vunpack.c.h.bf16 %v2635
    %v2639 = vunpack.c.l.bf16 %v2636
    %v2640 = vunpack.c.h.bf16 %v2636
    %2641 = vmatpush.msra.mxu0 %v2243
    %2642 = vmatpush.msra.mxu0 %v2241
    %2643 = vmatpush.msra.mxu0 %v2239
    %2644 = vmatpush.msra.mxu0 %v2237
    %2645 = vmatpush.msra.mxu0 %v2235
    %2646 = vmatpush.msra.mxu0 %v2233
    %2647 = vmatpush.msra.mxu0 %v2231
    %2648 = vmatpush.msra.mxu0 %v2229
    %2649 = vmatpush.msra.mxu0 %v2227
    %2650 = vmatpush.msra.mxu0 %v2225
    %2651 = vmatpush.msra.mxu0 %v2223
    %2652 = vmatpush.msra.mxu0 %v2221
    %2653 = vmatpush.msra.mxu0 %v2219
    %2654 = vmatpush.msra.mxu0 %v2217
    %2655 = vmatpush.msra.mxu0 %v2215
    %2656 = vmatpush.msra.mxu0 %v2213
    %2657 = vmatmul.f32.gmra.mxu0 %v2619
    %v2658 = vpop.f32.mrf.mxu0
    %v2659 = vadd.f32 0.0, %v2658
    %2660 = vmatmul.f32.gmra.mxu0 %v2621
    %v2661 = vpop.f32.mrf.mxu0
    %v2662 = vadd.f32 0.0, %v2661
    %2663 = vdwg.mxu0
    %2664 = vmatpush.msra.mxu0 %v2275
    %2665 = vmatpush.msra.mxu0 %v2273
    %2666 = vmatpush.msra.mxu0 %v2271
    %2667 = vmatpush.msra.mxu0 %v2269
    %2668 = vmatpush.msra.mxu0 %v2267
    %2669 = vmatpush.msra.mxu0 %v2265
    %2670 = vmatpush.msra.mxu0 %v2263
    %2671 = vmatpush.msra.mxu0 %v2261
    %2672 = vmatpush.msra.mxu0 %v2259
    %2673 = vmatpush.msra.mxu0 %v2257
    %2674 = vmatpush.msra.mxu0 %v2255
    %2675 = vmatpush.msra.mxu0 %v2253
    %2676 = vmatpush.msra.mxu0 %v2251
    %2677 = vmatpush.msra.mxu0 %v2249
    %2678 = vmatpush.msra.mxu0 %v2247
    %2679 = vmatpush.msra.mxu0 %v2245
    %2680 = vmatmul.f32.gmra.mxu0 %v2620
    %v2681 = vpop.f32.mrf.mxu0
    %v2682 = vadd.f32 %v2659, %v2681
    %2683 = vmatmul.f32.gmra.mxu0 %v2622
    %v2684 = vpop.f32.mrf.mxu0
    %v2685 = vadd.f32 %v2662, %v2684
    %2686 = vdwg.mxu0
    %2687 = vmatpush.msra.mxu0 %v2244
    %2688 = vmatpush.msra.mxu0 %v2242
    %2689 = vmatpush.msra.mxu0 %v2240
    %2690 = vmatpush.msra.mxu0 %v2238
    %2691 = vmatpush.msra.mxu0 %v2236
    %2692 = vmatpush.msra.mxu0 %v2234
    %2693 = vmatpush.msra.mxu0 %v2232
    %2694 = vmatpush.msra.mxu0 %v2230
    %2695 = vmatpush.msra.mxu0 %v2228
    %2696 = vmatpush.msra.mxu0 %v2226
    %2697 = vmatpush.msra.mxu0 %v2224
    %2698 = vmatpush.msra.mxu0 %v2222
    %2699 = vmatpush.msra.mxu0 %v2220
    %2700 = vmatpush.msra.mxu0 %v2218
    %2701 = vmatpush.msra.mxu0 %v2216
    %2702 = vmatpush.msra.mxu0 %v2214
    %2703 = vmatmul.f32.gmra.mxu0 %v2619
    %v2704 = vpop.f32.mrf.mxu0
    %v2705 = vadd.f32 0.0, %v2704
    %2706 = vmatmul.f32.gmra.mxu0 %v2621
    %v2707 = vpop.f32.mrf.mxu0
    %v2708 = vadd.f32 0.0, %v2707
    %2709 = vdwg.mxu0
    %2710 = vmatpush.msra.mxu0 %v2276
    %2711 = vmatpush.msra.mxu0 %v2274
    %2712 = vmatpush.msra.mxu0 %v2272
    %2713 = vmatpush.msra.mxu0 %v2270
    %2714 = vmatpush.msra.mxu0 %v2268
    %2715 = vmatpush.msra.mxu0 %v2266
    %2716 = vmatpush.msra.mxu0 %v2264
    %2717 = vmatpush.msra.mxu0 %v2262
    %2718 = vmatpush.msra.mxu0 %v2260
    %2719 = vmatpush.msra.mxu0 %v2258
    %2720 = vmatpush.msra.mxu0 %v2256
    %2721 = vmatpush.msra.mxu0 %v2254
    %2722 = vmatpush.msra.mxu0 %v2252
    %2723 = vmatpush.msra.mxu0 %v2250
    %2724 = vmatpush.msra.mxu0 %v2248
    %2725 = vmatpush.msra.mxu0 %v2246
    %2726 = vmatmul.f32.gmra.mxu0 %v2620
    %v2727 = vpop.f32.mrf.mxu0
    %v2728 = vadd.f32 %v2705, %v2727
    %2729 = vmatmul.f32.gmra.mxu0 %v2622
    %v2730 = vpop.f32.mrf.mxu0
    %v2731 = vadd.f32 %v2708, %v2730
    %2732 = vdwg.mxu0
    %v2733 = vadd.f32 %v2637, %v2682
    %v2734 = vadd.f32 %v2638, %v2728
    %v2735 = vadd.f32 %v2639, %v2685
    %v2736 = vadd.f32 %v2640, %v2731
    %v2737 = vtanh.pop %v2733
    %v2738 = vtanh.pop %v2734
    %v2739 = vtanh.pop %v2735
    %v2740 = vtanh.pop %v2736
    %v2741 = vpack.c.bf16 %v2737, %v2737
    %v2742 = vpack.c.bf16 %v2739, %v2739
    %2743 = vst [vmem:[%s1138] sm:$0xf] %v2741
    %2744 = vst [vmem:[%s1138 + $0x4] sm:$0xf] %v2742
    %v2745 = vpack.c.bf16 %v2738, %v2738
    %v2746 = vpack.c.bf16 %v2740, %v2740
    %2747 = vst [vmem:[%s1143] sm:$0xf] %v2745
    %2748 = vst [vmem:[%s1143 + $0x4] sm:$0xf] %v2746
    %v2749 = vld [vmem:[%s1027] sm:$0xff]
    %v2750 = vld [vmem:[%s1027 + $0x8] sm:$0xff]
    %v2751 = vld [vmem:[%s1022] sm:$0xff]
    %v2752 = vld [vmem:[%s1022 + $0x8] sm:$0xff]
    %v2753 = vsel %vm652, %v2749, %v2751
    %v2754 = vsel %vm652, %v2750, %v2752
    %v2755 = vunpack.c.l.bf16 %v2753
    %v2756 = vunpack.c.h.bf16 %v2753
    %v2757 = vunpack.c.l.bf16 %v2754
    %v2758 = vunpack.c.h.bf16 %v2754
    %2759 = vmatpush.msra.mxu0 %v2243
    %2760 = vmatpush.msra.mxu0 %v2241
    %2761 = vmatpush.msra.mxu0 %v2239
    %2762 = vmatpush.msra.mxu0 %v2237
    %2763 = vmatpush.msra.mxu0 %v2235
    %2764 = vmatpush.msra.mxu0 %v2233
    %2765 = vmatpush.msra.mxu0 %v2231
    %2766 = vmatpush.msra.mxu0 %v2229
    %2767 = vmatpush.msra.mxu0 %v2227
    %2768 = vmatpush.msra.mxu0 %v2225
    %2769 = vmatpush.msra.mxu0 %v2223
    %2770 = vmatpush.msra.mxu0 %v2221
    %2771 = vmatpush.msra.mxu0 %v2219
    %2772 = vmatpush.msra.mxu0 %v2217
    %2773 = vmatpush.msra.mxu0 %v2215
    %2774 = vmatpush.msra.mxu0 %v2213
    %2775 = vmatmul.f32.gmra.mxu0 %v2737
    %v2776 = vpop.f32.mrf.mxu0
    %v2777 = vadd.f32 0.0, %v2776
    %2778 = vmatmul.f32.gmra.mxu0 %v2739
    %v2779 = vpop.f32.mrf.mxu0
    %v2780 = vadd.f32 0.0, %v2779
    %2781 = vdwg.mxu0
    %2782 = vmatpush.msra.mxu0 %v2275
    %2783 = vmatpush.msra.mxu0 %v2273
    %2784 = vmatpush.msra.mxu0 %v2271
    %2785 = vmatpush.msra.mxu0 %v2269
    %2786 = vmatpush.msra.mxu0 %v2267
    %2787 = vmatpush.msra.mxu0 %v2265
    %2788 = vmatpush.msra.mxu0 %v2263
    %2789 = vmatpush.msra.mxu0 %v2261
    %2790 = vmatpush.msra.mxu0 %v2259
    %2791 = vmatpush.msra.mxu0 %v2257
    %2792 = vmatpush.msra.mxu0 %v2255
    %2793 = vmatpush.msra.mxu0 %v2253
    %2794 = vmatpush.msra.mxu0 %v2251
    %2795 = vmatpush.msra.mxu0 %v2249
    %2796 = vmatpush.msra.mxu0 %v2247
    %2797 = vmatpush.msra.mxu0 %v2245
    %2798 = vmatmul.f32.gmra.mxu0 %v2738
    %v2799 = vpop.f32.mrf.mxu0
    %v2800 = vadd.f32 %v2777, %v2799
    %2801 = vmatmul.f32.gmra.mxu0 %v2740
    %v2802 = vpop.f32.mrf.mxu0
    %v2803 = vadd.f32 %v2780, %v2802
    %2804 = vdwg.mxu0
    %2805 = vmatpush.msra.mxu0 %v2244
    %2806 = vmatpush.msra.mxu0 %v2242
    %2807 = vmatpush.msra.mxu0 %v2240
    %2808 = vmatpush.msra.mxu0 %v2238
    %2809 = vmatpush.msra.mxu0 %v2236
    %2810 = vmatpush.msra.mxu0 %v2234
    %2811 = vmatpush.msra.mxu0 %v2232
    %2812 = vmatpush.msra.mxu0 %v2230
    %2813 = vmatpush.msra.mxu0 %v2228
    %2814 = vmatpush.msra.mxu0 %v2226
    %2815 = vmatpush.msra.mxu0 %v2224
    %2816 = vmatpush.msra.mxu0 %v2222
    %2817 = vmatpush.msra.mxu0 %v2220
    %2818 = vmatpush.msra.mxu0 %v2218
    %2819 = vmatpush.msra.mxu0 %v2216
    %2820 = vmatpush.msra.mxu0 %v2214
    %2821 = vmatmul.f32.gmra.mxu0 %v2737
    %v2822 = vpop.f32.mrf.mxu0
    %v2823 = vadd.f32 0.0, %v2822
    %2824 = vmatmul.f32.gmra.mxu0 %v2739
    %v2825 = vpop.f32.mrf.mxu0
    %v2826 = vadd.f32 0.0, %v2825
    %2827 = vdwg.mxu0
    %2828 = vmatpush.msra.mxu0 %v2276
    %2829 = vmatpush.msra.mxu0 %v2274
    %2830 = vmatpush.msra.mxu0 %v2272
    %2831 = vmatpush.msra.mxu0 %v2270
    %2832 = vmatpush.msra.mxu0 %v2268
    %2833 = vmatpush.msra.mxu0 %v2266
    %2834 = vmatpush.msra.mxu0 %v2264
    %2835 = vmatpush.msra.mxu0 %v2262
    %2836 = vmatpush.msra.mxu0 %v2260
    %2837 = vmatpush.msra.mxu0 %v2258
    %2838 = vmatpush.msra.mxu0 %v2256
    %2839 = vmatpush.msra.mxu0 %v2254
    %2840 = vmatpush.msra.mxu0 %v2252
    %2841 = vmatpush.msra.mxu0 %v2250
    %2842 = vmatpush.msra.mxu0 %v2248
    %2843 = vmatpush.msra.mxu0 %v2246
    %2844 = vmatmul.f32.gmra.mxu0 %v2738
    %v2845 = vpop.f32.mrf.mxu0
    %v2846 = vadd.f32 %v2823, %v2845
    %2847 = vmatmul.f32.gmra.mxu0 %v2740
    %v2848 = vpop.f32.mrf.mxu0
    %v2849 = vadd.f32 %v2826, %v2848
    %2850 = vdwg.mxu0
    %v2851 = vadd.f32 %v2755, %v2800
    %v2852 = vadd.f32 %v2756, %v2846
    %v2853 = vadd.f32 %v2757, %v2803
    %v2854 = vadd.f32 %v2758, %v2849
    %v2855 = vtanh.pop %v2851
    %v2856 = vtanh.pop %v2852
    %v2857 = vtanh.pop %v2853
    %v2858 = vtanh.pop %v2854
    %v2859 = vpack.c.bf16 %v2855, %v2855
    %v2860 = vpack.c.bf16 %v2857, %v2857
    %2861 = vst [vmem:[%s1258] sm:$0xf] %v2859
    %2862 = vst [vmem:[%s1258 + $0x4] sm:$0xf] %v2860
    %v2863 = vpack.c.bf16 %v2856, %v2856
    %v2864 = vpack.c.bf16 %v2858, %v2858
    %2865 = vst [vmem:[%s1263] sm:$0xf] %v2863
    %2866 = vst [vmem:[%s1263 + $0x4] sm:$0xf] %v2864
    %v2867 = vld [vmem:[%s901] sm:$0xff]
    %v2868 = vld [vmem:[%s901 + $0x8] sm:$0xff]
    %v2869 = vld [vmem:[%s896] sm:$0xff]
    %v2870 = vld [vmem:[%s896 + $0x8] sm:$0xff]
    %v2871 = vsel %vm652, %v2867, %v2869
    %v2872 = vsel %vm652, %v2868, %v2870
    %v2873 = vunpack.c.l.bf16 %v2871
    %v2874 = vunpack.c.h.bf16 %v2871
    %v2875 = vunpack.c.l.bf16 %v2872
    %v2876 = vunpack.c.h.bf16 %v2872
    %2877 = vmatpush.msra.mxu0 %v2243
    %2878 = vmatpush.msra.mxu0 %v2241
    %2879 = vmatpush.msra.mxu0 %v2239
    %2880 = vmatpush.msra.mxu0 %v2237
    %2881 = vmatpush.msra.mxu0 %v2235
    %2882 = vmatpush.msra.mxu0 %v2233
    %2883 = vmatpush.msra.mxu0 %v2231
    %2884 = vmatpush.msra.mxu0 %v2229
    %2885 = vmatpush.msra.mxu0 %v2227
    %2886 = vmatpush.msra.mxu0 %v2225
    %2887 = vmatpush.msra.mxu0 %v2223
    %2888 = vmatpush.msra.mxu0 %v2221
    %2889 = vmatpush.msra.mxu0 %v2219
    %2890 = vmatpush.msra.mxu0 %v2217
    %2891 = vmatpush.msra.mxu0 %v2215
    %2892 = vmatpush.msra.mxu0 %v2213
    %2893 = vmatmul.f32.gmra.mxu0 %v2855
    %v2894 = vpop.f32.mrf.mxu0
    %v2895 = vadd.f32 0.0, %v2894
    %2896 = vmatmul.f32.gmra.mxu0 %v2857
    %v2897 = vpop.f32.mrf.mxu0
    %v2898 = vadd.f32 0.0, %v2897
    %2899 = vdwg.mxu0
    %2900 = vmatpush.msra.mxu0 %v2275
    %2901 = vmatpush.msra.mxu0 %v2273
    %2902 = vmatpush.msra.mxu0 %v2271
    %2903 = vmatpush.msra.mxu0 %v2269
    %2904 = vmatpush.msra.mxu0 %v2267
    %2905 = vmatpush.msra.mxu0 %v2265
    %2906 = vmatpush.msra.mxu0 %v2263
    %2907 = vmatpush.msra.mxu0 %v2261
    %2908 = vmatpush.msra.mxu0 %v2259
    %2909 = vmatpush.msra.mxu0 %v2257
    %2910 = vmatpush.msra.mxu0 %v2255
    %2911 = vmatpush.msra.mxu0 %v2253
    %2912 = vmatpush.msra.mxu0 %v2251
    %2913 = vmatpush.msra.mxu0 %v2249
    %2914 = vmatpush.msra.mxu0 %v2247
    %2915 = vmatpush.msra.mxu0 %v2245
    %2916 = vmatmul.f32.gmra.mxu0 %v2856
    %v2917 = vpop.f32.mrf.mxu0
    %v2918 = vadd.f32 %v2895, %v2917
    %2919 = vmatmul.f32.gmra.mxu0 %v2858
    %v2920 = vpop.f32.mrf.mxu0
    %v2921 = vadd.f32 %v2898, %v2920
    %2922 = vdwg.mxu0
    %2923 = vmatpush.msra.mxu0 %v2244
    %2924 = vmatpush.msra.mxu0 %v2242
    %2925 = vmatpush.msra.mxu0 %v2240
    %2926 = vmatpush.msra.mxu0 %v2238
    %2927 = vmatpush.msra.mxu0 %v2236
    %2928 = vmatpush.msra.mxu0 %v2234
    %2929 = vmatpush.msra.mxu0 %v2232
    %2930 = vmatpush.msra.mxu0 %v2230
    %2931 = vmatpush.msra.mxu0 %v2228
    %2932 = vmatpush.msra.mxu0 %v2226
    %2933 = vmatpush.msra.mxu0 %v2224
    %2934 = vmatpush.msra.mxu0 %v2222
    %2935 = vmatpush.msra.mxu0 %v2220
    %2936 = vmatpush.msra.mxu0 %v2218
    %2937 = vmatpush.msra.mxu0 %v2216
    %2938 = vmatpush.msra.mxu0 %v2214
    %2939 = vmatmul.f32.gmra.mxu0 %v2855
    %v2940 = vpop.f32.mrf.mxu0
    %v2941 = vadd.f32 0.0, %v2940
    %2942 = vmatmul.f32.gmra.mxu0 %v2857
    %v2943 = vpop.f32.mrf.mxu0
    %v2944 = vadd.f32 0.0, %v2943
    %2945 = vdwg.mxu0
    %2946 = vmatpush.msra.mxu0 %v2276
    %2947 = vmatpush.msra.mxu0 %v2274
    %2948 = vmatpush.msra.mxu0 %v2272
    %2949 = vmatpush.msra.mxu0 %v2270
    %2950 = vmatpush.msra.mxu0 %v2268
    %2951 = vmatpush.msra.mxu0 %v2266
    %2952 = vmatpush.msra.mxu0 %v2264
    %2953 = vmatpush.msra.mxu0 %v2262
    %2954 = vmatpush.msra.mxu0 %v2260
    %2955 = vmatpush.msra.mxu0 %v2258
    %2956 = vmatpush.msra.mxu0 %v2256
    %2957 = vmatpush.msra.mxu0 %v2254
    %2958 = vmatpush.msra.mxu0 %v2252
    %2959 = vmatpush.msra.mxu0 %v2250
    %2960 = vmatpush.msra.mxu0 %v2248
    %2961 = vmatpush.msra.mxu0 %v2246
    %2962 = vmatmul.f32.gmra.mxu0 %v2856
    %v2963 = vpop.f32.mrf.mxu0
    %v2964 = vadd.f32 %v2941, %v2963
    %2965 = vmatmul.f32.gmra.mxu0 %v2858
    %v2966 = vpop.f32.mrf.mxu0
    %v2967 = vadd.f32 %v2944, %v2966
    %2968 = vdwg.mxu0
    %v2969 = vadd.f32 %v2873, %v2918
    %v2970 = vadd.f32 %v2874, %v2964
    %v2971 = vadd.f32 %v2875, %v2921
    %v2972 = vadd.f32 %v2876, %v2967
    %v2973 = vtanh.pop %v2969
    %v2974 = vtanh.pop %v2970
    %v2975 = vtanh.pop %v2971
    %v2976 = vtanh.pop %v2972
    %v2977 = vpack.c.bf16 %v2973, %v2973
    %v2978 = vpack.c.bf16 %v2975, %v2975
    %2979 = vst [vmem:[%s1378] sm:$0xf] %v2977
    %2980 = vst [vmem:[%s1378 + $0x4] sm:$0xf] %v2978
    %v2981 = vpack.c.bf16 %v2974, %v2974
    %v2982 = vpack.c.bf16 %v2976, %v2976
    %2983 = vst [vmem:[%s1383] sm:$0xf] %v2981
    %2984 = vst [vmem:[%s1383 + $0x4] sm:$0xf] %v2982
    %v2985 = vld [vmem:[%s775] sm:$0xff]
    %v2986 = vld [vmem:[%s775 + $0x8] sm:$0xff]
    %v2987 = vld [vmem:[%s770] sm:$0xff]
    %v2988 = vld [vmem:[%s770 + $0x8] sm:$0xff]
    %v2989 = vsel %vm652, %v2985, %v2987
    %v2990 = vsel %vm652, %v2986, %v2988
    %v2991 = vunpack.c.l.bf16 %v2989
    %v2992 = vunpack.c.h.bf16 %v2989
    %v2993 = vunpack.c.l.bf16 %v2990
    %v2994 = vunpack.c.h.bf16 %v2990
    %2995 = vmatpush.msra.mxu0 %v2243
    %2996 = vmatpush.msra.mxu0 %v2241
    %2997 = vmatpush.msra.mxu0 %v2239
    %2998 = vmatpush.msra.mxu0 %v2237
    %2999 = vmatpush.msra.mxu0 %v2235
    %3000 = vmatpush.msra.mxu0 %v2233
    %3001 = vmatpush.msra.mxu0 %v2231
    %3002 = vmatpush.msra.mxu0 %v2229
    %3003 = vmatpush.msra.mxu0 %v2227
    %3004 = vmatpush.msra.mxu0 %v2225
    %3005 = vmatpush.msra.mxu0 %v2223
    %3006 = vmatpush.msra.mxu0 %v2221
    %3007 = vmatpush.msra.mxu0 %v2219
    %3008 = vmatpush.msra.mxu0 %v2217
    %3009 = vmatpush.msra.mxu0 %v2215
    %3010 = vmatpush.msra.mxu0 %v2213
    %3011 = vmatmul.f32.gmra.mxu0 %v2973
    %v3012 = vpop.f32.mrf.mxu0
    %v3013 = vadd.f32 0.0, %v3012
    %3014 = vmatmul.f32.gmra.mxu0 %v2975
    %v3015 = vpop.f32.mrf.mxu0
    %v3016 = vadd.f32 0.0, %v3015
    %3017 = vdwg.mxu0
    %3018 = vmatpush.msra.mxu0 %v2275
    %3019 = vmatpush.msra.mxu0 %v2273
    %3020 = vmatpush.msra.mxu0 %v2271
    %3021 = vmatpush.msra.mxu0 %v2269
    %3022 = vmatpush.msra.mxu0 %v2267
    %3023 = vmatpush.msra.mxu0 %v2265
    %3024 = vmatpush.msra.mxu0 %v2263
    %3025 = vmatpush.msra.mxu0 %v2261
    %3026 = vmatpush.msra.mxu0 %v2259
    %3027 = vmatpush.msra.mxu0 %v2257
    %3028 = vmatpush.msra.mxu0 %v2255
    %3029 = vmatpush.msra.mxu0 %v2253
    %3030 = vmatpush.msra.mxu0 %v2251
    %3031 = vmatpush.msra.mxu0 %v2249
    %3032 = vmatpush.msra.mxu0 %v2247
    %3033 = vmatpush.msra.mxu0 %v2245
    %3034 = vmatmul.f32.gmra.mxu0 %v2974
    %v3035 = vpop.f32.mrf.mxu0
    %v3036 = vadd.f32 %v3013, %v3035
    %3037 = vmatmul.f32.gmra.mxu0 %v2976
    %v3038 = vpop.f32.mrf.mxu0
    %v3039 = vadd.f32 %v3016, %v3038
    %3040 = vdwg.mxu0
    %3041 = vmatpush.msra.mxu0 %v2244
    %3042 = vmatpush.msra.mxu0 %v2242
    %3043 = vmatpush.msra.mxu0 %v2240
    %3044 = vmatpush.msra.mxu0 %v2238
    %3045 = vmatpush.msra.mxu0 %v2236
    %3046 = vmatpush.msra.mxu0 %v2234
    %3047 = vmatpush.msra.mxu0 %v2232
    %3048 = vmatpush.msra.mxu0 %v2230
    %3049 = vmatpush.msra.mxu0 %v2228
    %3050 = vmatpush.msra.mxu0 %v2226
    %3051 = vmatpush.msra.mxu0 %v2224
    %3052 = vmatpush.msra.mxu0 %v2222
    %3053 = vmatpush.msra.mxu0 %v2220
    %3054 = vmatpush.msra.mxu0 %v2218
    %3055 = vmatpush.msra.mxu0 %v2216
    %3056 = vmatpush.msra.mxu0 %v2214
    %3057 = vmatmul.f32.gmra.mxu0 %v2973
    %v3058 = vpop.f32.mrf.mxu0
    %v3059 = vadd.f32 0.0, %v3058
    %3060 = vmatmul.f32.gmra.mxu0 %v2975
    %v3061 = vpop.f32.mrf.mxu0
    %v3062 = vadd.f32 0.0, %v3061
    %3063 = vdwg.mxu0
    %3064 = vmatpush.msra.mxu0 %v2276
    %3065 = vmatpush.msra.mxu0 %v2274
    %3066 = vmatpush.msra.mxu0 %v2272
    %3067 = vmatpush.msra.mxu0 %v2270
    %3068 = vmatpush.msra.mxu0 %v2268
    %3069 = vmatpush.msra.mxu0 %v2266
    %3070 = vmatpush.msra.mxu0 %v2264
    %3071 = vmatpush.msra.mxu0 %v2262
    %3072 = vmatpush.msra.mxu0 %v2260
    %3073 = vmatpush.msra.mxu0 %v2258
    %3074 = vmatpush.msra.mxu0 %v2256
    %3075 = vmatpush.msra.mxu0 %v2254
    %3076 = vmatpush.msra.mxu0 %v2252
    %3077 = vmatpush.msra.mxu0 %v2250
    %3078 = vmatpush.msra.mxu0 %v2248
    %3079 = vmatpush.msra.mxu0 %v2246
    %3080 = vmatmul.f32.gmra.mxu0 %v2974
    %v3081 = vpop.f32.mrf.mxu0
    %v3082 = vadd.f32 %v3059, %v3081
    %3083 = vmatmul.f32.gmra.mxu0 %v2976
    %v3084 = vpop.f32.mrf.mxu0
    %v3085 = vadd.f32 %v3062, %v3084
    %3086 = vdwg.mxu0
    %v3087 = vadd.f32 %v2991, %v3036
    %v3088 = vadd.f32 %v2992, %v3082
    %v3089 = vadd.f32 %v2993, %v3039
    %v3090 = vadd.f32 %v2994, %v3085
    %v3091 = vtanh.pop %v3087
    %v3092 = vtanh.pop %v3088
    %v3093 = vtanh.pop %v3089
    %v3094 = vtanh.pop %v3090
    %v3095 = vpack.c.bf16 %v3091, %v3091
    %v3096 = vpack.c.bf16 %v3093, %v3093
    %3097 = vst [vmem:[%s1498] sm:$0xf] %v3095
    %3098 = vst [vmem:[%s1498 + $0x4] sm:$0xf] %v3096
    %v3099 = vpack.c.bf16 %v3092, %v3092
    %v3100 = vpack.c.bf16 %v3094, %v3094
    %3101 = vst [vmem:[%s1503] sm:$0xf] %v3099
    %3102 = vst [vmem:[%s1503 + $0x4] sm:$0xf] %v3100
    %v3103 = vld [vmem:[%s649] sm:$0xff]
    %v3104 = vld [vmem:[%s649 + $0x8] sm:$0xff]
    %v3105 = vld [vmem:[%s644] sm:$0xff]
    %v3106 = vld [vmem:[%s644 + $0x8] sm:$0xff]
    %v3107 = vsel %vm652, %v3103, %v3105
    %v3108 = vsel %vm652, %v3104, %v3106
    %v3109 = vunpack.c.l.bf16 %v3107
    %v3110 = vunpack.c.h.bf16 %v3107
    %v3111 = vunpack.c.l.bf16 %v3108
    %v3112 = vunpack.c.h.bf16 %v3108
    %3113 = vmatpush.msra.mxu0 %v2243
    %3114 = vmatpush.msra.mxu0 %v2241
    %3115 = vmatpush.msra.mxu0 %v2239
    %3116 = vmatpush.msra.mxu0 %v2237
    %3117 = vmatpush.msra.mxu0 %v2235
    %3118 = vmatpush.msra.mxu0 %v2233
    %3119 = vmatpush.msra.mxu0 %v2231
    %3120 = vmatpush.msra.mxu0 %v2229
    %3121 = vmatpush.msra.mxu0 %v2227
    %3122 = vmatpush.msra.mxu0 %v2225
    %3123 = vmatpush.msra.mxu0 %v2223
    %3124 = vmatpush.msra.mxu0 %v2221
    %3125 = vmatpush.msra.mxu0 %v2219
    %3126 = vmatpush.msra.mxu0 %v2217
    %3127 = vmatpush.msra.mxu0 %v2215
    %3128 = vmatpush.msra.mxu0 %v2213
    %3129 = vmatmul.f32.gmra.mxu0 %v3091
    %v3130 = vpop.f32.mrf.mxu0
    %v3131 = vadd.f32 0.0, %v3130
    %3132 = vmatmul.f32.gmra.mxu0 %v3093
    %v3133 = vpop.f32.mrf.mxu0
    %v3134 = vadd.f32 0.0, %v3133
    %3135 = vdwg.mxu0
    %3136 = vmatpush.msra.mxu0 %v2275
    %3137 = vmatpush.msra.mxu0 %v2273
    %3138 = vmatpush.msra.mxu0 %v2271
    %3139 = vmatpush.msra.mxu0 %v2269
    %3140 = vmatpush.msra.mxu0 %v2267
    %3141 = vmatpush.msra.mxu0 %v2265
    %3142 = vmatpush.msra.mxu0 %v2263
    %3143 = vmatpush.msra.mxu0 %v2261
    %3144 = vmatpush.msra.mxu0 %v2259
    %3145 = vmatpush.msra.mxu0 %v2257
    %3146 = vmatpush.msra.mxu0 %v2255
    %3147 = vmatpush.msra.mxu0 %v2253
    %3148 = vmatpush.msra.mxu0 %v2251
    %3149 = vmatpush.msra.mxu0 %v2249
    %3150 = vmatpush.msra.mxu0 %v2247
    %3151 = vmatpush.msra.mxu0 %v2245
    %3152 = vmatmul.f32.gmra.mxu0 %v3092
    %v3153 = vpop.f32.mrf.mxu0
    %v3154 = vadd.f32 %v3131, %v3153
    %3155 = vmatmul.f32.gmra.mxu0 %v3094
    %v3156 = vpop.f32.mrf.mxu0
    %v3157 = vadd.f32 %v3134, %v3156
    %3158 = vdwg.mxu0
    %3159 = vmatpush.msra.mxu0 %v2244
    %3160 = vmatpush.msra.mxu0 %v2242
    %3161 = vmatpush.msra.mxu0 %v2240
    %3162 = vmatpush.msra.mxu0 %v2238
    %3163 = vmatpush.msra.mxu0 %v2236
    %3164 = vmatpush.msra.mxu0 %v2234
    %3165 = vmatpush.msra.mxu0 %v2232
    %3166 = vmatpush.msra.mxu0 %v2230
    %3167 = vmatpush.msra.mxu0 %v2228
    %3168 = vmatpush.msra.mxu0 %v2226
    %3169 = vmatpush.msra.mxu0 %v2224
    %3170 = vmatpush.msra.mxu0 %v2222
    %3171 = vmatpush.msra.mxu0 %v2220
    %3172 = vmatpush.msra.mxu0 %v2218
    %3173 = vmatpush.msra.mxu0 %v2216
    %3174 = vmatpush.msra.mxu0 %v2214
    %3175 = vmatmul.f32.gmra.mxu0 %v3091
    %v3176 = vpop.f32.mrf.mxu0
    %v3177 = vadd.f32 0.0, %v3176
    %3178 = vmatmul.f32.gmra.mxu0 %v3093
    %v3179 = vpop.f32.mrf.mxu0
    %v3180 = vadd.f32 0.0, %v3179
    %3181 = vdwg.mxu0
    %3182 = vmatpush.msra.mxu0 %v2276
    %3183 = vmatpush.msra.mxu0 %v2274
    %3184 = vmatpush.msra.mxu0 %v2272
    %3185 = vmatpush.msra.mxu0 %v2270
    %3186 = vmatpush.msra.mxu0 %v2268
    %3187 = vmatpush.msra.mxu0 %v2266
    %3188 = vmatpush.msra.mxu0 %v2264
    %3189 = vmatpush.msra.mxu0 %v2262
    %3190 = vmatpush.msra.mxu0 %v2260
    %3191 = vmatpush.msra.mxu0 %v2258
    %3192 = vmatpush.msra.mxu0 %v2256
    %3193 = vmatpush.msra.mxu0 %v2254
    %3194 = vmatpush.msra.mxu0 %v2252
    %3195 = vmatpush.msra.mxu0 %v2250
    %3196 = vmatpush.msra.mxu0 %v2248
    %3197 = vmatpush.msra.mxu0 %v2246
    %3198 = vmatmul.f32.gmra.mxu0 %v3092
    %v3199 = vpop.f32.mrf.mxu0
    %v3200 = vadd.f32 %v3177, %v3199
    %3201 = vmatmul.f32.gmra.mxu0 %v3094
    %v3202 = vpop.f32.mrf.mxu0
    %v3203 = vadd.f32 %v3180, %v3202
    %3204 = vdwg.mxu0
    %v3205 = vadd.f32 %v3109, %v3154
    %v3206 = vadd.f32 %v3110, %v3200
    %v3207 = vadd.f32 %v3111, %v3157
    %v3208 = vadd.f32 %v3112, %v3203
    %v3209 = vtanh.pop %v3205
    %v3210 = vtanh.pop %v3206
    %v3211 = vtanh.pop %v3207
    %v3212 = vtanh.pop %v3208
    %v3213 = vpack.c.bf16 %v3209, %v3209
    %v3214 = vpack.c.bf16 %v3211, %v3211
    %3215 = vst [vmem:[%s1618] sm:$0xf] %v3213
    %3216 = vst [vmem:[%s1618 + $0x4] sm:$0xf] %v3214
    %v3217 = vpack.c.bf16 %v3210, %v3210
    %v3218 = vpack.c.bf16 %v3212, %v3212
    %3219 = vst [vmem:[#allocation5] sm:$0xf] %v3217
    %3220 = vst [vmem:[#allocation5 + $0x4] sm:$0xf] %v3218
    %v3221 = vld [vmem:[#allocation4] sm:$0xf]
    %v3222 = vld [vmem:[#allocation4 + $0x4] sm:$0xf]
    %v3223 = vunpack.c.l.bf16 %v3221
    %v3224 = vunpack.c.l.bf16 %v3222
    %v3225 = vld [vmem:[%s7] sm:$0xff]
    %v3226 = vld [vmem:[%s7 + $0x8] sm:$0xff]
    %v3227 = vld [vmem:[%s7 + $0x10] sm:$0xff]
    %v3228 = vld [vmem:[%s7 + $0x18] sm:$0xff]
    %v3229 = vld [vmem:[%s7 + $0x20] sm:$0xff]
    %v3230 = vld [vmem:[%s7 + $0x28] sm:$0xff]
    %v3231 = vld [vmem:[%s7 + $0x30] sm:$0xff]
    %v3232 = vld [vmem:[%s7 + $0x38] sm:$0xff]
    %v3233 = vld [vmem:[%s7 + $0x40] sm:$0xff]
    %v3234 = vld [vmem:[%s7 + $0x48] sm:$0xff]
    %v3235 = vld [vmem:[%s7 + $0x50] sm:$0xff]
    %v3236 = vld [vmem:[%s7 + $0x58] sm:$0xff]
    %v3237 = vld [vmem:[%s7 + $0x60] sm:$0xff]
    %v3238 = vld [vmem:[%s7 + $0x68] sm:$0xff]
    %v3239 = vld [vmem:[%s7 + $0x70] sm:$0xff]
    %v3240 = vld [vmem:[%s7 + $0x78] sm:$0xff]
    %v3241 = vld [vmem:[#allocation5] sm:$0xf]
    %v3242 = vld [vmem:[#allocation5 + $0x4] sm:$0xf]
    %v3243 = vunpack.c.l.bf16 %v3241
    %v3244 = vunpack.c.l.bf16 %v3242
    %v3245 = vld [vmem:[%s7 + $0x80] sm:$0xff]
    %v3246 = vld [vmem:[%s7 + $0x88] sm:$0xff]
    %v3247 = vld [vmem:[%s7 + $0x90] sm:$0xff]
    %v3248 = vld [vmem:[%s7 + $0x98] sm:$0xff]
    %v3249 = vld [vmem:[%s7 + $0xa0] sm:$0xff]
    %v3250 = vld [vmem:[%s7 + $0xa8] sm:$0xff]
    %v3251 = vld [vmem:[%s7 + $0xb0] sm:$0xff]
    %v3252 = vld [vmem:[%s7 + $0xb8] sm:$0xff]
    %v3253 = vld [vmem:[%s7 + $0xc0] sm:$0xff]
    %v3254 = vld [vmem:[%s7 + $0xc8] sm:$0xff]
    %v3255 = vld [vmem:[%s7 + $0xd0] sm:$0xff]
    %v3256 = vld [vmem:[%s7 + $0xd8] sm:$0xff]
    %v3257 = vld [vmem:[%s7 + $0xe0] sm:$0xff]
    %v3258 = vld [vmem:[%s7 + $0xe8] sm:$0xff]
    %v3259 = vld [vmem:[%s7 + $0xf0] sm:$0xff]
    %v3260 = vld [vmem:[%s7 + $0xf8] sm:$0xff]
    %3261 = vmatpush.msra.mxu0 %v3260
    %3262 = vmatpush.msra.mxu0 %v3259
    %3263 = vmatpush.msra.mxu0 %v3258
    %3264 = vmatpush.msra.mxu0 %v3257
    %3265 = vmatpush.msra.mxu0 %v3256
    %3266 = vmatpush.msra.mxu0 %v3255
    %3267 = vmatpush.msra.mxu0 %v3254
    %3268 = vmatpush.msra.mxu0 %v3253
    %3269 = vmatpush.msra.mxu0 %v3252
    %3270 = vmatpush.msra.mxu0 %v3251
    %3271 = vmatpush.msra.mxu0 %v3250
    %3272 = vmatpush.msra.mxu0 %v3249
    %3273 = vmatpush.msra.mxu0 %v3248
    %3274 = vmatpush.msra.mxu0 %v3247
    %3275 = vmatpush.msra.mxu0 %v3246
    %3276 = vmatpush.msra.mxu0 %v3245
    %3277 = vmatmul.f32.gmra.mxu0 %v3243
    %v3278 = vpop.f32.mrf.mxu0
    %v3279 = vadd.f32 0.0, %v3278
    %3280 = vmatmul.f32.gmra.mxu0 %v3244
    %v3281 = vpop.f32.mrf.mxu0
    %v3282 = vadd.f32 0.0, %v3281
    %3283 = vdwg.mxu0
    %3284 = vmatpush.msra.mxu0 %v3240
    %3285 = vmatpush.msra.mxu0 %v3239
    %3286 = vmatpush.msra.mxu0 %v3238
    %3287 = vmatpush.msra.mxu0 %v3237
    %3288 = vmatpush.msra.mxu0 %v3236
    %3289 = vmatpush.msra.mxu0 %v3235
    %3290 = vmatpush.msra.mxu0 %v3234
    %3291 = vmatpush.msra.mxu0 %v3233
    %3292 = vmatpush.msra.mxu0 %v3232
    %3293 = vmatpush.msra.mxu0 %v3231
    %3294 = vmatpush.msra.mxu0 %v3230
    %3295 = vmatpush.msra.mxu0 %v3229
    %3296 = vmatpush.msra.mxu0 %v3228
    %3297 = vmatpush.msra.mxu0 %v3227
    %3298 = vmatpush.msra.mxu0 %v3226
    %3299 = vmatpush.msra.mxu0 %v3225
    %3300 = vmatmul.f32.gmra.mxu0 %v3223
    %v3301 = vpop.f32.mrf.mxu0
    %v3302 = vadd.f32 %v3279, %v3301
    %3303 = vmatmul.f32.gmra.mxu0 %v3224
    %v3304 = vpop.f32.mrf.mxu0
    %v3305 = vadd.f32 %v3282, %v3304
    %3306 = vdwg.mxu0
    %v3307 = vld [vmem:[#allocation4 + $0x38] sm:$0xf]
    %v3308 = vld [vmem:[#allocation4 + $0x3c] sm:$0xf]
    %v3309 = vunpack.c.l.bf16 %v3307
    %v3310 = vunpack.c.l.bf16 %v3308
    %v3311 = vld [vmem:[%s7 + $0x100] sm:$0xff]
    %v3312 = vld [vmem:[%s7 + $0x108] sm:$0xff]
    %v3313 = vld [vmem:[%s7 + $0x110] sm:$0xff]
    %v3314 = vld [vmem:[%s7 + $0x118] sm:$0xff]
    %v3315 = vld [vmem:[%s7 + $0x120] sm:$0xff]
    %v3316 = vld [vmem:[%s7 + $0x128] sm:$0xff]
    %v3317 = vld [vmem:[%s7 + $0x130] sm:$0xff]
    %v3318 = vld [vmem:[%s7 + $0x138] sm:$0xff]
    %v3319 = vld [vmem:[%s7 + $0x140] sm:$0xff]
    %v3320 = vld [vmem:[%s7 + $0x148] sm:$0xff]
    %v3321 = vld [vmem:[%s7 + $0x150] sm:$0xff]
    %v3322 = vld [vmem:[%s7 + $0x158] sm:$0xff]
    %v3323 = vld [vmem:[%s7 + $0x160] sm:$0xff]
    %v3324 = vld [vmem:[%s7 + $0x168] sm:$0xff]
    %v3325 = vld [vmem:[%s7 + $0x170] sm:$0xff]
    %v3326 = vld [vmem:[%s7 + $0x178] sm:$0xff]
    %3327 = vmatpush.msra.mxu0 %v3326
    %3328 = vmatpush.msra.mxu0 %v3325
    %3329 = vmatpush.msra.mxu0 %v3324
    %3330 = vmatpush.msra.mxu0 %v3323
    %3331 = vmatpush.msra.mxu0 %v3322
    %3332 = vmatpush.msra.mxu0 %v3321
    %3333 = vmatpush.msra.mxu0 %v3320
    %3334 = vmatpush.msra.mxu0 %v3319
    %3335 = vmatpush.msra.mxu0 %v3318
    %3336 = vmatpush.msra.mxu0 %v3317
    %3337 = vmatpush.msra.mxu0 %v3316
    %3338 = vmatpush.msra.mxu0 %v3315
    %3339 = vmatpush.msra.mxu0 %v3314
    %3340 = vmatpush.msra.mxu0 %v3313
    %3341 = vmatpush.msra.mxu0 %v3312
    %3342 = vmatpush.msra.mxu0 %v3311
    %3343 = vmatmul.f32.gmra.mxu0 %v3309
    %v3344 = vpop.f32.mrf.mxu0
    %v3345 = vadd.f32 0.0, %v3344
    %3346 = vmatmul.f32.gmra.mxu0 %v3310
    %v3347 = vpop.f32.mrf.mxu0
    %v3348 = vadd.f32 0.0, %v3347
    %3349 = vdwg.mxu0
    %v3350 = vadd.f32 %v3302, %v3345
    %v3351 = vadd.f32 %v3305, %v3348
    %v3352 = vld [vmem:[#allocation5 + $0x38] sm:$0xf]
    %v3353 = vld [vmem:[#allocation5 + $0x3c] sm:$0xf]
    %v3354 = vunpack.c.l.bf16 %v3352
    %v3355 = vunpack.c.l.bf16 %v3353
    %v3356 = vld [vmem:[%s7 + $0x180] sm:$0xff]
    %v3357 = vld [vmem:[%s7 + $0x188] sm:$0xff]
    %v3358 = vld [vmem:[%s7 + $0x190] sm:$0xff]
    %v3359 = vld [vmem:[%s7 + $0x198] sm:$0xff]
    %v3360 = vld [vmem:[%s7 + $0x1a0] sm:$0xff]
    %v3361 = vld [vmem:[%s7 + $0x1a8] sm:$0xff]
    %v3362 = vld [vmem:[%s7 + $0x1b0] sm:$0xff]
    %v3363 = vld [vmem:[%s7 + $0x1b8] sm:$0xff]
    %v3364 = vld [vmem:[%s7 + $0x1c0] sm:$0xff]
    %v3365 = vld [vmem:[%s7 + $0x1c8] sm:$0xff]
    %v3366 = vld [vmem:[%s7 + $0x1d0] sm:$0xff]
    %v3367 = vld [vmem:[%s7 + $0x1d8] sm:$0xff]
    %v3368 = vld [vmem:[%s7 + $0x1e0] sm:$0xff]
    %v3369 = vld [vmem:[%s7 + $0x1e8] sm:$0xff]
    %v3370 = vld [vmem:[%s7 + $0x1f0] sm:$0xff]
    %v3371 = vld [vmem:[%s7 + $0x1f8] sm:$0xff]
    %3372 = vmatpush.msra.mxu0 %v3371
    %3373 = vmatpush.msra.mxu0 %v3370
    %3374 = vmatpush.msra.mxu0 %v3369
    %3375 = vmatpush.msra.mxu0 %v3368
    %3376 = vmatpush.msra.mxu0 %v3367
    %3377 = vmatpush.msra.mxu0 %v3366
    %3378 = vmatpush.msra.mxu0 %v3365
    %3379 = vmatpush.msra.mxu0 %v3364
    %3380 = vmatpush.msra.mxu0 %v3363
    %3381 = vmatpush.msra.mxu0 %v3362
    %3382 = vmatpush.msra.mxu0 %v3361
    %3383 = vmatpush.msra.mxu0 %v3360
    %3384 = vmatpush.msra.mxu0 %v3359
    %3385 = vmatpush.msra.mxu0 %v3358
    %3386 = vmatpush.msra.mxu0 %v3357
    %3387 = vmatpush.msra.mxu0 %v3356
    %3388 = vmatmul.f32.gmra.mxu0 %v3354
    %v3389 = vpop.f32.mrf.mxu0
    %v3390 = vadd.f32 0.0, %v3389
    %3391 = vmatmul.f32.gmra.mxu0 %v3355
    %v3392 = vpop.f32.mrf.mxu0
    %v3393 = vadd.f32 0.0, %v3392
    %3394 = vdwg.mxu0
    %v3395 = vadd.f32 %v3350, %v3390
    %v3396 = vadd.f32 %v3351, %v3393
    %v3397 = vld [vmem:[%s8] sm:$0x1]
    %v3399 = vperm.slane %v3397, 0
    %v3401 = vadd.f32 %v3395, %v3399
    %v3402 = vadd.f32 %v3396, %v3399
    %vm3403 = vcmask 15360
    %3404 = vst.msk [vmem:[%s9] sm:$0xff] %vm3403, %v3401
    %3405 = vst.msk [vmem:[%s9 + $0x8] sm:$0xff] %vm3403, %v3402
    // Predicated region
    $region42: #{tpu_custom_call.1} parent=1 // pred_check
      _
    $region43: #{tpu_custom_call.1} parent=1 // pred_check_branch
      %3407 = sbr.rel (0) target = $region45
    $region44: #{tpu_custom_call.1} parent=1 // pred_region
      _
    $region45: #{tpu_custom_call.1} parent=1 // pred_fallthru
      _
    // Predicated region
    $region46: #{tpu_custom_call.1} parent=1 // pred_check
      _
    $region47: #{tpu_custom_call.1} parent=1 // pred_check_branch
      %3409 = sbr.rel (0) target = $region49
    $region48: #{tpu_custom_call.1} parent=1 // pred_region
      _
    $region49: #{tpu_custom_call.1} parent=1 // pred_fallthru
      _
    %3410 = vsyncpa [#allocation7], 1

</llo_original>
